<compile_context>
chip_gen: v5e
topology: v5e:2x2
jax: 0.10.0
libtpu: 0.0.40
codegen_flags: <defaults>
</compile_context>

<pallas_src>
import math
import numpy as np
import jax
import jax.numpy as jnp
from jax.experimental import pallas as pl
from jax.experimental.pallas import tpu as pltpu

# ----------------------------- configuration ---------------------------------
B = 2            # batch
W = 2            # window_size (timesteps)
OBS_DIM = 8      # lowdim observation size
E = 32           # token_embedding_size
NH = 2           # attention heads
HD = E // NH     # head dim
MLP = 64         # transformer MLP hidden
NL = 2           # transformer layers
N_OBS_TOK = 6    # obs tokens per timestep
N_RO_A = 1       # "action" readout tokens per timestep
N_RO_V = 1       # "value"  readout tokens per timestep
S_STEP = N_OBS_TOK + N_RO_A + N_RO_V   # tokens per timestep = 8
T = W * S_STEP                          # per-batch sequence length = 16
BT = B * T                              # total token rows in the fused layout = 32
BW = B * W                              # batch*window rows = 4
A_DIM = 3        # action dim
H_PRED = 1       # pred_horizon
HEAD_HID = 32    # head MLP hidden
SCALE = 1.0 / math.sqrt(HD)
LANES = 128      # lane width of the packed parameter slab / io blocks


# ----------------------------- mask / params ---------------------------------
def build_attn_mask():
    """Octo-style block-causal mask (per batch element): every token attends to obs
    tokens of timesteps <= its own; readout tokens additionally attend to themselves;
    no token attends to other readout tokens."""
    m = np.full((T, T), -1e9, dtype=np.float32)
    for i in range(T):
        t_i = i // S_STEP
        for k in range(T):
            t_k, j_k = divmod(k, S_STEP)
            is_obs_k = j_k < N_OBS_TOK
            if (is_obs_k and t_k <= t_i) or (k == i):
                m[i, k] = 0.0
    return m


def init_params(key):
    def dense(key, fan_in, fan_out):
        return jax.random.normal(key, (fan_in, fan_out), jnp.float32) * 0.02

    keys = iter(jax.random.split(key, 64))
    p = {}
    # lowdim observation tokenizer: obs -> N_OBS_TOK tokens of size E
    p["tok_w"] = dense(next(keys), OBS_DIM, N_OBS_TOK * E)
    p["tok_b"] = jnp.zeros((N_OBS_TOK * E,), jnp.float32)
    # learned readout token embeddings + positional embeddings
    p["readout_emb"] = jax.random.normal(next(keys), (1, 1, N_RO_A + N_RO_V, E)) * 0.02
    p["pos_emb"] = jax.random.normal(next(keys), (1, W, S_STEP, E)) * 0.02
    # transformer blocks (pre-LN)
    p["layers"] = []
    for _ in range(NL):
        lyr = dict(
            ln1_g=jnp.ones((E,)), ln1_b=jnp.zeros((E,)),
            wq=dense(next(keys), E, E), bq=jnp.zeros((E,)),
            wk=dense(next(keys), E, E), bk=jnp.zeros((E,)),
            wv=dense(next(keys), E, E), bv=jnp.zeros((E,)),
            wo=dense(next(keys), E, E), bo=jnp.zeros((E,)),
            ln2_g=jnp.ones((E,)), ln2_b=jnp.zeros((E,)),
            w1=dense(next(keys), E, MLP), b1=jnp.zeros((MLP,)),
            w2=dense(next(keys), MLP, E), b2=jnp.zeros((E,)),
        )
        p["layers"].append(lyr)
    p["lnf_g"] = jnp.ones((E,))
    p["lnf_b"] = jnp.zeros((E,))
    # action head: readout_action embedding -> tanh action, rescaled to [min,max]
    p["aw1"] = dense(next(keys), E, HEAD_HID)
    p["ab1"] = jnp.zeros((HEAD_HID,))
    p["aw2"] = dense(next(keys), HEAD_HID, H_PRED * A_DIM)
    p["ab2"] = jnp.zeros((H_PRED * A_DIM,))
    # value head: concat(readout_value embedding, action) -> scalar
    p["vw1"] = dense(next(keys), E + A_DIM, HEAD_HID)
    p["vb1"] = jnp.zeros((HEAD_HID,))
    p["vw2"] = dense(next(keys), HEAD_HID, 1)
    p["vb2"] = jnp.zeros((1,))
    # action bounds (Box action space with low=-1, high=+1)
    p["min_action"] = -jnp.ones((A_DIM,), jnp.float32)
    p["max_action"] = jnp.ones((A_DIM,), jnp.float32)
    return p


# ----------------------------- parameter slab packing ------------------------
class _SlabPacker:
    """Packs many small 1-D/2-D f32 tensors into one [R, 128] lane-dense slab.

    Each tensor occupies a contiguous row block starting at lane 0 (zero padded
    to 128 lanes), aligned to 8-sublane boundaries.  Offsets are static Python
    ints consumed by the kernel closure."""

    def __init__(self, lanes=LANES):
        self.lanes = lanes
        self.blocks = []
        self.offsets = {}   # name -> (row_start, nrows, ncols)
        self.row = 0

    def add(self, name, arr):
        a = np.asarray(arr, dtype=np.float32)
        if a.ndim == 1:
            a = a[None, :]
        assert a.ndim == 2 and a.shape[1] <= self.lanes, (name, a.shape)
        r, c = a.shape
        pad_r = (-r) % 8
        block = np.zeros((r + pad_r, self.lanes), np.float32)
        block[:r, :c] = a
        self.offsets[name] = (self.row, r, c)
        self.blocks.append(block)
        self.row += r + pad_r

    def finish(self):
        slab = np.concatenate(self.blocks, axis=0)
        return jnp.asarray(slab), self.offsets


def pack_params(p):
    """Precompute everything constant: attention mask, base token embedding
    (pos-emb + readout-emb + tokenizer bias), tokenizer scatter helpers, readout
    selection matrices, per-head split attention weights, head MLPs."""
    pk = _SlabPacker()

    # block-diagonal additive mask over the fused [B*T, B*T] score matrix
    m = build_attn_mask()
    full = np.full((BT, BT), -1e9, dtype=np.float32)
    for b in range(B):
        full[b * T:(b + 1) * T, b * T:(b + 1) * T] = m
    pk.add("mask", full)

    # tokenizer weight, flattened per-(slot, obs_dim): wflat[(j,d), e]
    tok_w = np.asarray(p["tok_w"])
    tok_w3 = tok_w.reshape(OBS_DIM, N_OBS_TOK, E).transpose(1, 0, 2)   # [J, D, E]
    tok_b2 = np.asarray(p["tok_b"]).reshape(N_OBS_TOK, E)
    pk.add("tok_wflat", tok_w3.reshape(N_OBS_TOK * OBS_DIM, E))

    # base row embedding per residual row: pos emb + (tokenizer bias | readout emb)
    pos = np.asarray(p["pos_emb"])[0]          # [W, S_STEP, E]
    ro = np.asarray(p["readout_emb"])[0, 0]    # [N_RO_A + N_RO_V, E]
    rows = []
    for w in range(W):
        for j in range(S_STEP):
            r = pos[w, j].copy()
            r += tok_b2[j] if j < N_OBS_TOK else ro[j - N_OBS_TOK]
            rows.append(r)
    pk.add("base", np.tile(np.stack(rows, axis=0), (B, 1)))   # [BT, E]

    # tokenizer scatter helpers: x_obs = ((rep@state)@tile_eye * expmask) @ wflat
    rep = np.zeros((BT, BW), np.float32)
    expmask = np.zeros((BT, N_OBS_TOK * OBS_DIM), np.float32)
    for r in range(BT):
        j = r % S_STEP
        if j < N_OBS_TOK:
            rep[r, r // S_STEP] = 1.0
            expmask[r, j * OBS_DIM:(j + 1) * OBS_DIM] = 1.0
    pk.add("rep", rep)
    pk.add("expmask", expmask)
    pk.add("tile_eye", np.tile(np.eye(OBS_DIM, dtype=np.float32), (1, N_OBS_TOK)))

    # readout-token selection matrices (one-hot gathers done on the MXU)
    selA = np.zeros((BW, BT), np.float32)
    selV2 = np.zeros((2 * BW, BT), np.float32)
    for i in range(BW):
        selA[i, i * S_STEP + N_OBS_TOK] = 1.0
        selV2[i, i * S_STEP + N_OBS_TOK + N_RO_A] = 1.0
        selV2[BW + i, i * S_STEP + N_OBS_TOK + N_RO_A] = 1.0
    pk.add("selA", selA)
    pk.add("selV2", selV2)

    # transformer layers: per-head Q/K/V/O weights & biases (no lane slicing in-kernel)
    for l, lyr in enumerate(p["layers"]):
        pk.add(f"ln1_g_{l}", np.asarray(lyr["ln1_g"]))
        pk.add(f"ln1_b_{l}", np.asarray(lyr["ln1_b"]))
        wq, wk, wv = (np.asarray(lyr[k]) for k in ("wq", "wk", "wv"))
        bq, bk, bv = (np.asarray(lyr[k]) for k in ("bq", "bk", "bv"))
        wo = np.asarray(lyr["wo"])
        for h in range(NH):
            sl = slice(h * HD, (h + 1) * HD)
            pk.add(f"wq_{l}_{h}", wq[:, sl]); pk.add(f"bq_{l}_{h}", bq[sl])
            pk.add(f"wk_{l}_{h}", wk[:, sl]); pk.add(f"bk_{l}_{h}", bk[sl])
            pk.add(f"wv_{l}_{h}", wv[:, sl]); pk.add(f"bv_{l}_{h}", bv[sl])
            pk.add(f"wo_{l}_{h}", wo[sl, :])
        pk.add(f"bo_{l}", np.asarray(lyr["bo"]))
        pk.add(f"ln2_g_{l}", np.asarray(lyr["ln2_g"]))
        pk.add(f"ln2_b_{l}", np.asarray(lyr["ln2_b"]))
        pk.add(f"w1_{l}", np.asarray(lyr["w1"])); pk.add(f"b1_{l}", np.asarray(lyr["b1"]))
        pk.add(f"w2_{l}", np.asarray(lyr["w2"])); pk.add(f"b2_{l}", np.asarray(lyr["b2"]))

    pk.add("lnf_g", np.asarray(p["lnf_g"]))
    pk.add("lnf_b", np.asarray(p["lnf_b"]))

    # action head
    pk.add("aw1", np.asarray(p["aw1"])); pk.add("ab1", np.asarray(p["ab1"]))
    pk.add("aw2", np.asarray(p["aw2"])); pk.add("ab2", np.asarray(p["ab2"]))
    # value head: split first weight so the kernel avoids a lane concat of [emb|act]
    vw1 = np.asarray(p["vw1"])
    pk.add("vw1_e", vw1[:E, :]); pk.add("vw1_a", vw1[E:, :])
    pk.add("vb1", np.asarray(p["vb1"]))
    pk.add("vw2", np.asarray(p["vw2"])); pk.add("vb2", np.asarray(p["vb2"]))

    # action rescale folded to mid + tanh * half_range
    lo = np.asarray(p["min_action"]); hi = np.asarray(p["max_action"])
    pk.add("act_mid", 0.5 * (lo + hi))
    pk.add("act_half", 0.5 * (hi - lo))

    return pk.finish()


# ----------------------------- fused Pallas kernel ----------------------------
def _layernorm(x, g, b):
    mu = jnp.mean(x, axis=-1, keepdims=True)
    var = jnp.mean((x - mu) ** 2, axis=-1, keepdims=True)
    return (x - mu) * jax.lax.rsqrt(var + 1e-5) * g + b


def _make_kernel(offs):
    def kernel(inp_ref, slab_ref, out_ref):
        f32 = jnp.float32

        def L(name):
            r0, nr, nc = offs[name]
            return slab_ref[r0:r0 + nr, 0:nc]

        def mm(a, b):
            return jnp.dot(a, b, preferred_element_type=f32)

        state = inp_ref[0:BW, 0:OBS_DIM]              # [B*W, OBS_DIM]
        action = inp_ref[BW:2 * BW, 0:A_DIM]          # [B*W, A_DIM]

        # ---- tokenizer + readout + positional embedding (all MXU, no scatter) ----
        srep = mm(L("rep"), state)                            # [BT, OBS_DIM]
        sexp = mm(srep, L("tile_eye")) * L("expmask")         # [BT, J*OBS_DIM]
        x = L("base") + mm(sexp, L("tok_wflat"))              # [BT, E]  (SSA residual)

        mask = L("mask")                                      # [BT, BT]

        # ---- pre-LN transformer, fully unrolled, residual stays in registers -----
        for l in range(NL):
            h = _layernorm(x, L(f"ln1_g_{l}"), L(f"ln1_b_{l}"))
            attn = L(f"bo_{l}")                               # [1, E], broadcasts
            for hh in range(NH):
                q = mm(h, L(f"wq_{l}_{hh}")) + L(f"bq_{l}_{hh}")   # [BT, HD]
                k = mm(h, L(f"wk_{l}_{hh}")) + L(f"bk_{l}_{hh}")
                v = mm(h, L(f"wv_{l}_{hh}")) + L(f"bv_{l}_{hh}")
                s = jax.lax.dot_general(q, k, (((1,), (1,)), ((), ())),
                                        preferred_element_type=f32) * SCALE + mask
                s = s - jnp.max(s, axis=-1, keepdims=True)
                pexp = jnp.exp(s)
                pexp = pexp * pl.reciprocal(jnp.sum(pexp, axis=-1, keepdims=True),
                                            approx=True)
                # per-head output projection accumulation: no lane-axis head concat
                attn = attn + mm(mm(pexp, v), L(f"wo_{l}_{hh}"))
            x = x + attn                                      # residual
            h2 = _layernorm(x, L(f"ln2_g_{l}"), L(f"ln2_b_{l}"))
            h2 = jax.nn.gelu(mm(h2, L(f"w1_{l}")) + L(f"b1_{l}"))
            h2 = mm(h2, L(f"w2_{l}")) + L(f"b2_{l}")
            x = x + h2                                        # residual

        xf = _layernorm(x, L("lnf_g"), L("lnf_b"))            # [BT, E]

        # ---- readout extraction via one-hot selection matmuls (no row gathers) ---
        emb_a = mm(L("selA"), xf)                             # [B*W, E]
        emb_v = mm(L("selV2"), xf)                            # [2*B*W, E] (value readout x2)

        # ---- action head: MLP -> tanh -> rescale ---------------------------------
        ha = jnp.maximum(mm(emb_a, L("aw1")) + L("ab1"), 0.0)
        a_raw = jnp.tanh(mm(ha, L("aw2")) + L("ab2"))         # [B*W, A_DIM]
        act_pred = L("act_mid") + a_raw * L("act_half")

        # ---- value head, batched: rows [0:B*W]=q_sample(action), [B*W:]=q_policy --
        act2 = jnp.concatenate([action, act_pred], axis=0)    # [2*B*W, A_DIM]
        hv = jnp.maximum(mm(emb_v, L("vw1_e")) + mm(act2, L("vw1_a")) + L("vb1"), 0.0)
        q_val = mm(hv, L("vw2")) + L("vb2")                   # [2*B*W, 1]

        # ---- single merged output block: action in lanes [0:A_DIM] of rows [0:BW],
        #      q values (sample then policy) in lane A_DIM of rows [0:2*BW] ---------
        out_ref[...] = jnp.zeros((2 * BW, LANES), f32)
        out_ref[0:BW, 0:A_DIM] = act_pred
        out_ref[0:2 * BW, A_DIM:A_DIM + 1] = q_val

    return kernel


def fused_forward(inp, slab, offs):
    kernel = _make_kernel(offs)
    return pl.pallas_call(
        kernel,
        out_shape=jax.ShapeDtypeStruct((2 * BW, LANES), jnp.float32),
        grid=(1,),
        in_specs=[pl.BlockSpec(inp.shape, lambda i: (0, 0)),
                  pl.BlockSpec(slab.shape, lambda i: (0, 0))],
        out_specs=pl.BlockSpec((2 * BW, LANES), lambda i: (0, 0)),
        compiler_params=pltpu.CompilerParams(dimension_semantics=("arbitrary",)),
    )(inp, slab)


# ----------------------------- model forward (wrapper) ------------------------
def transformer_actor_critic_forward(slab, offs, obs, action):
    state = obs["state"].reshape(BW, OBS_DIM).astype(jnp.float32)
    act = action.reshape(BW, A_DIM).astype(jnp.float32)
    # pack the two runtime inputs into one lane-dense [8, 128] block (single DMA)
    inp = jnp.zeros((2 * BW, LANES), jnp.float32)
    inp = inp.at[0:BW, 0:OBS_DIM].set(state)
    inp = inp.at[BW:2 * BW, 0:A_DIM].set(act)

    out = fused_forward(inp, slab, offs)

    act_full = out[0:BW, 0:A_DIM].reshape(B, W, A_DIM)   # == action_pred[:, :, 0, :]
    q_sample = out[0:BW, A_DIM].reshape(B, W)
    q_policy = out[BW:2 * BW, A_DIM].reshape(B, W)
    return {
        "action": act_full[:, -1, :],                    # [B, A_DIM]
        "q_sample": q_sample[:, -1],                     # [B]
        "q_policy": q_policy[:, -1],                     # [B]
    }


# ----------------------------- main -------------------------------------------
if __name__ == "__main__":
    key = jax.random.PRNGKey(0)
    kp, ko, ka = jax.random.split(key, 3)

    params = init_params(kp)
    slab, offs = pack_params(params)

    obs = {"state": jax.random.normal(ko, (B, W, OBS_DIM), jnp.float32)}
    action = jax.random.uniform(ka, (B, W, A_DIM), jnp.float32, minval=-1.0, maxval=1.0)

    fwd = jax.jit(lambda s, o, a: transformer_actor_critic_forward(s, offs, o, a))
    out = fwd(slab, obs, action)
    jax.block_until_ready(out)

    assert out["action"].shape == (B, A_DIM)
    assert out["q_sample"].shape == (B,)
    assert out["q_policy"].shape == (B,)
    assert all(bool(jnp.all(jnp.isfinite(v))) for v in out.values())
    print("KERNEL_OK")
</pallas_src>

<mosaic_0001>
module attributes {stable_mosaic.version = 11 : i64} {
  func.func @kernel(%arg0: i32, %arg1: memref<8x128xf32, #tpu.memory_space<vmem>>, %arg2: memref<1248x128xf32, #tpu.memory_space<vmem>>, %arg3: memref<8x128xf32, #tpu.memory_space<vmem>>) attributes {dimension_semantics = [#tpu.dimension_semantics<arbitrary>], iteration_bounds = array<i64: 1>, scalar_prefetch = 0 : i64, scratch_operands = 0 : i64, tpu.core_type = #tpu.core_type<tc>, window_params = [{pipeline_mode = #tpu.pipeline_mode<synchronous>, transform_indices = @transform_0, window_bounds = array<i64: 8, 128>}, {pipeline_mode = #tpu.pipeline_mode<synchronous>, transform_indices = @transform_1, window_bounds = array<i64: 1248, 128>}, {pipeline_mode = #tpu.pipeline_mode<synchronous>, transform_indices = @transform_2, window_bounds = array<i64: 8, 128>}]} {
    %c0 = arith.constant 0 : index
    %c0_0 = arith.constant 0 : index
    %0 = vector.load %arg1[%c0, %c0_0] : memref<8x128xf32, #tpu.memory_space<vmem>>, vector<4x8xf32>
    %c4 = arith.constant 4 : index
    %c0_1 = arith.constant 0 : index
    %1 = vector.load %arg1[%c4, %c0_1] : memref<8x128xf32, #tpu.memory_space<vmem>>, vector<4x3xf32>
    %c112 = arith.constant 112 : index
    %c0_2 = arith.constant 0 : index
    %2 = vector.load %arg2[%c112, %c0_2] : memref<1248x128xf32, #tpu.memory_space<vmem>>, vector<32x4xf32>
    %cst = arith.constant dense<0.000000e+00> : vector<32x8xf32>
    %3 = tpu.matmul %2, %0, %cst {dimension_numbers = #tpu.dot_dimension_numbers<[1], [0], [0], [1], [0, 0, 1, 1], [], []>} : vector<32x4xf32>, vector<4x8xf32>, vector<32x8xf32> -> vector<32x8xf32>
    %c176 = arith.constant 176 : index
    %c0_3 = arith.constant 0 : index
    %4 = vector.load %arg2[%c176, %c0_3] : memref<1248x128xf32, #tpu.memory_space<vmem>>, vector<8x48xf32>
    %cst_4 = arith.constant dense<0.000000e+00> : vector<32x48xf32>
    %5 = tpu.matmul %3, %4, %cst_4 {dimension_numbers = #tpu.dot_dimension_numbers<[1], [0], [0], [1], [0, 0, 1, 1], [], []>} : vector<32x8xf32>, vector<8x48xf32>, vector<32x48xf32> -> vector<32x48xf32>
    %c144 = arith.constant 144 : index
    %c0_5 = arith.constant 0 : index
    %6 = vector.load %arg2[%c144, %c0_5] : memref<1248x128xf32, #tpu.memory_space<vmem>>, vector<32x48xf32>
    %7 = arith.mulf %5, %6 : vector<32x48xf32>
    %c80 = arith.constant 80 : index
    %c0_6 = arith.constant 0 : index
    %8 = vector.load %arg2[%c80, %c0_6] : memref<1248x128xf32, #tpu.memory_space<vmem>>, vector<32x32xf32>
    %c32 = arith.constant 32 : index
    %c0_7 = arith.constant 0 : index
    %9 = vector.load %arg2[%c32, %c0_7] : memref<1248x128xf32, #tpu.memory_space<vmem>>, vector<48x32xf32>
    %cst_8 = arith.constant dense<0.000000e+00> : vector<32x32xf32>
    %10 = tpu.matmul %7, %9, %cst_8 {dimension_numbers = #tpu.dot_dimension_numbers<[1], [0], [0], [1], [0, 0, 1, 1], [], []>} : vector<32x48xf32>, vector<48x32xf32>, vector<32x32xf32> -> vector<32x32xf32>
    %11 = arith.addf %8, %10 : vector<32x32xf32>
    %c0_9 = arith.constant 0 : index
    %c0_10 = arith.constant 0 : index
    %12 = vector.load %arg2[%c0_9, %c0_10] : memref<1248x128xf32, #tpu.memory_space<vmem>>, vector<32x32xf32>
    %c200 = arith.constant 200 : index
    %c0_11 = arith.constant 0 : index
    %13 = vector.load %arg2[%c200, %c0_11] : memref<1248x128xf32, #tpu.memory_space<vmem>>, vector<1x32xf32>
    %c208 = arith.constant 208 : index
    %c0_12 = arith.constant 0 : index
    %14 = vector.load %arg2[%c208, %c0_12] : memref<1248x128xf32, #tpu.memory_space<vmem>>, vector<1x32xf32>
    %cst_13 = arith.constant dense<0.000000e+00> : vector<32xf32>
    %15 = vector.multi_reduction <add>, %11, %cst_13 [1] : vector<32x32xf32> to vector<32xf32>
    %16 = vector.shape_cast %15 : vector<32xf32> to vector<32x1xf32>
    %cst_14 = arith.constant 3.200000e+01 : f32
    %17 = vector.broadcast %cst_14 : f32 to vector<32x1xf32>
    %18 = arith.divf %16, %17 : vector<32x1xf32>
    %19 = vector.broadcast %18 : vector<32x1xf32> to vector<32x32xf32>
    %20 = arith.subf %11, %19 : vector<32x32xf32>
    %21 = arith.mulf %20, %20 : vector<32x32xf32>
    %cst_15 = arith.constant dense<0.000000e+00> : vector<32xf32>
    %22 = vector.multi_reduction <add>, %21, %cst_15 [1] : vector<32x32xf32> to vector<32xf32>
    %23 = vector.shape_cast %22 : vector<32xf32> to vector<32x1xf32>
    %cst_16 = arith.constant 3.200000e+01 : f32
    %24 = vector.broadcast %cst_16 : f32 to vector<32x1xf32>
    %25 = arith.divf %23, %24 : vector<32x1xf32>
    %26 = vector.broadcast %18 : vector<32x1xf32> to vector<32x32xf32>
    %27 = arith.subf %11, %26 : vector<32x32xf32>
    %cst_17 = arith.constant 9.99999974E-6 : f32
    %28 = vector.broadcast %cst_17 : f32 to vector<32x1xf32>
    %29 = arith.addf %25, %28 : vector<32x1xf32>
    %30 = math.rsqrt %29 : vector<32x1xf32>
    %31 = vector.broadcast %30 : vector<32x1xf32> to vector<32x32xf32>
    %32 = arith.mulf %27, %31 : vector<32x32xf32>
    %33 = vector.broadcast %13 : vector<1x32xf32> to vector<32x32xf32>
    %34 = arith.mulf %32, %33 : vector<32x32xf32>
    %35 = vector.broadcast %14 : vector<1x32xf32> to vector<32x32xf32>
    %36 = arith.addf %34, %35 : vector<32x32xf32>
    %c488 = arith.constant 488 : index
    %c0_18 = arith.constant 0 : index
    %37 = vector.load %arg2[%c488, %c0_18] : memref<1248x128xf32, #tpu.memory_space<vmem>>, vector<1x32xf32>
    %c216 = arith.constant 216 : index
    %c0_19 = arith.constant 0 : index
    %38 = vector.load %arg2[%c216, %c0_19] : memref<1248x128xf32, #tpu.memory_space<vmem>>, vector<32x16xf32>
    %cst_20 = arith.constant dense<0.000000e+00> : vector<32x16xf32>
    %39 = tpu.matmul %36, %38, %cst_20 {dimension_numbers = #tpu.dot_dimension_numbers<[1], [0], [0], [1], [0, 0, 1, 1], [], []>} : vector<32x32xf32>, vector<32x16xf32>, vector<32x16xf32> -> vector<32x16xf32>
    %c248 = arith.constant 248 : index
    %c0_21 = arith.constant 0 : index
    %40 = vector.load %arg2[%c248, %c0_21] : memref<1248x128xf32, #tpu.memory_space<vmem>>, vector<1x16xf32>
    %41 = vector.broadcast %40 : vector<1x16xf32> to vector<32x16xf32>
    %42 = arith.addf %39, %41 : vector<32x16xf32>
    %c256 = arith.constant 256 : index
    %c0_22 = arith.constant 0 : index
    %43 = vector.load %arg2[%c256, %c0_22] : memref<1248x128xf32, #tpu.memory_space<vmem>>, vector<32x16xf32>
    %cst_23 = arith.constant dense<0.000000e+00> : vector<32x16xf32>
    %44 = tpu.matmul %36, %43, %cst_23 {dimension_numbers = #tpu.dot_dimension_numbers<[1], [0], [0], [1], [0, 0, 1, 1], [], []>} : vector<32x32xf32>, vector<32x16xf32>, vector<32x16xf32> -> vector<32x16xf32>
    %c288 = arith.constant 288 : index
    %c0_24 = arith.constant 0 : index
    %45 = vector.load %arg2[%c288, %c0_24] : memref<1248x128xf32, #tpu.memory_space<vmem>>, vector<1x16xf32>
    %46 = vector.broadcast %45 : vector<1x16xf32> to vector<32x16xf32>
    %47 = arith.addf %44, %46 : vector<32x16xf32>
    %c296 = arith.constant 296 : index
    %c0_25 = arith.constant 0 : index
    %48 = vector.load %arg2[%c296, %c0_25] : memref<1248x128xf32, #tpu.memory_space<vmem>>, vector<32x16xf32>
    %cst_26 = arith.constant dense<0.000000e+00> : vector<32x16xf32>
    %49 = tpu.matmul %36, %48, %cst_26 {dimension_numbers = #tpu.dot_dimension_numbers<[1], [0], [0], [1], [0, 0, 1, 1], [], []>} : vector<32x32xf32>, vector<32x16xf32>, vector<32x16xf32> -> vector<32x16xf32>
    %c328 = arith.constant 328 : index
    %c0_27 = arith.constant 0 : index
    %50 = vector.load %arg2[%c328, %c0_27] : memref<1248x128xf32, #tpu.memory_space<vmem>>, vector<1x16xf32>
    %51 = vector.broadcast %50 : vector<1x16xf32> to vector<32x16xf32>
    %52 = arith.addf %49, %51 : vector<32x16xf32>
    %cst_28 = arith.constant dense<0.000000e+00> : vector<32x32xf32>
    %53 = tpu.matmul %42, %47, %cst_28 {dimension_numbers = #tpu.dot_dimension_numbers<[1], [1], [0], [0], [0, 0, 1, 0], [], []>} : vector<32x16xf32>, vector<32x16xf32>, vector<32x32xf32> -> vector<32x32xf32>
    %cst_29 = arith.constant 2.500000e-01 : f32
    %54 = vector.broadcast %cst_29 : f32 to vector<32x32xf32>
    %55 = arith.mulf %53, %54 : vector<32x32xf32>
    %56 = arith.addf %55, %12 : vector<32x32xf32>
    %cst_30 = arith.constant dense<0xFF800000> : vector<32xf32>
    %57 = vector.multi_reduction <maximumf>, %56, %cst_30 [1] : vector<32x32xf32> to vector<32xf32>
    %58 = vector.shape_cast %57 : vector<32xf32> to vector<32x1xf32>
    %59 = vector.broadcast %58 : vector<32x1xf32> to vector<32x32xf32>
    %60 = arith.subf %56, %59 : vector<32x32xf32>
    %61 = math.exp %60 : vector<32x32xf32>
    %cst_31 = arith.constant dense<0.000000e+00> : vector<32xf32>
    %62 = vector.multi_reduction <add>, %61, %cst_31 [1] : vector<32x32xf32> to vector<32xf32>
    %63 = vector.shape_cast %62 : vector<32xf32> to vector<32x1xf32>
    %64 = tpu.reciprocal %63 {approx = true} : vector<32x1xf32> -> vector<32x1xf32>
    %65 = vector.broadcast %64 : vector<32x1xf32> to vector<32x32xf32>
    %66 = arith.mulf %61, %65 : vector<32x32xf32>
    %cst_32 = arith.constant dense<0.000000e+00> : vector<32x16xf32>
    %67 = tpu.matmul %66, %52, %cst_32 {dimension_numbers = #tpu.dot_dimension_numbers<[1], [0], [0], [1], [0, 0, 1, 1], [], []>} : vector<32x32xf32>, vector<32x16xf32>, vector<32x16xf32> -> vector<32x16xf32>
    %c336 = arith.constant 336 : index
    %c0_33 = arith.constant 0 : index
    %68 = vector.load %arg2[%c336, %c0_33] : memref<1248x128xf32, #tpu.memory_space<vmem>>, vector<16x32xf32>
    %cst_34 = arith.constant dense<0.000000e+00> : vector<32x32xf32>
    %69 = tpu.matmul %67, %68, %cst_34 {dimension_numbers = #tpu.dot_dimension_numbers<[1], [0], [0], [1], [0, 0, 1, 1], [], []>} : vector<32x16xf32>, vector<16x32xf32>, vector<32x32xf32> -> vector<32x32xf32>
    %70 = vector.broadcast %37 : vector<1x32xf32> to vector<32x32xf32>
    %71 = arith.addf %70, %69 : vector<32x32xf32>
    %c352 = arith.constant 352 : index
    %c0_35 = arith.constant 0 : index
    %72 = vector.load %arg2[%c352, %c0_35] : memref<1248x128xf32, #tpu.memory_space<vmem>>, vector<32x16xf32>
    %cst_36 = arith.constant dense<0.000000e+00> : vector<32x16xf32>
    %73 = tpu.matmul %36, %72, %cst_36 {dimension_numbers = #tpu.dot_dimension_numbers<[1], [0], [0], [1], [0, 0, 1, 1], [], []>} : vector<32x32xf32>, vector<32x16xf32>, vector<32x16xf32> -> vector<32x16xf32>
    %c384 = arith.constant 384 : index
    %c0_37 = arith.constant 0 : index
    %74 = vector.load %arg2[%c384, %c0_37] : memref<1248x128xf32, #tpu.memory_space<vmem>>, vector<1x16xf32>
    %75 = vector.broadcast %74 : vector<1x16xf32> to vector<32x16xf32>
    %76 = arith.addf %73, %75 : vector<32x16xf32>
    %c392 = arith.constant 392 : index
    %c0_38 = arith.constant 0 : index
    %77 = vector.load %arg2[%c392, %c0_38] : memref<1248x128xf32, #tpu.memory_space<vmem>>, vector<32x16xf32>
    %cst_39 = arith.constant dense<0.000000e+00> : vector<32x16xf32>
    %78 = tpu.matmul %36, %77, %cst_39 {dimension_numbers = #tpu.dot_dimension_numbers<[1], [0], [0], [1], [0, 0, 1, 1], [], []>} : vector<32x32xf32>, vector<32x16xf32>, vector<32x16xf32> -> vector<32x16xf32>
    %c424 = arith.constant 424 : index
    %c0_40 = arith.constant 0 : index
    %79 = vector.load %arg2[%c424, %c0_40] : memref<1248x128xf32, #tpu.memory_space<vmem>>, vector<1x16xf32>
    %80 = vector.broadcast %79 : vector<1x16xf32> to vector<32x16xf32>
    %81 = arith.addf %78, %80 : vector<32x16xf32>
    %c432 = arith.constant 432 : index
    %c0_41 = arith.constant 0 : index
    %82 = vector.load %arg2[%c432, %c0_41] : memref<1248x128xf32, #tpu.memory_space<vmem>>, vector<32x16xf32>
    %cst_42 = arith.constant dense<0.000000e+00> : vector<32x16xf32>
    %83 = tpu.matmul %36, %82, %cst_42 {dimension_numbers = #tpu.dot_dimension_numbers<[1], [0], [0], [1], [0, 0, 1, 1], [], []>} : vector<32x32xf32>, vector<32x16xf32>, vector<32x16xf32> -> vector<32x16xf32>
    %c464 = arith.constant 464 : index
    %c0_43 = arith.constant 0 : index
    %84 = vector.load %arg2[%c464, %c0_43] : memref<1248x128xf32, #tpu.memory_space<vmem>>, vector<1x16xf32>
    %85 = vector.broadcast %84 : vector<1x16xf32> to vector<32x16xf32>
    %86 = arith.addf %83, %85 : vector<32x16xf32>
    %cst_44 = arith.constant dense<0.000000e+00> : vector<32x32xf32>
    %87 = tpu.matmul %76, %81, %cst_44 {dimension_numbers = #tpu.dot_dimension_numbers<[1], [1], [0], [0], [0, 0, 1, 0], [], []>} : vector<32x16xf32>, vector<32x16xf32>, vector<32x32xf32> -> vector<32x32xf32>
    %cst_45 = arith.constant 2.500000e-01 : f32
    %88 = vector.broadcast %cst_45 : f32 to vector<32x32xf32>
    %89 = arith.mulf %87, %88 : vector<32x32xf32>
    %90 = arith.addf %89, %12 : vector<32x32xf32>
    %cst_46 = arith.constant dense<0xFF800000> : vector<32xf32>
    %91 = vector.multi_reduction <maximumf>, %90, %cst_46 [1] : vector<32x32xf32> to vector<32xf32>
    %92 = vector.shape_cast %91 : vector<32xf32> to vector<32x1xf32>
    %93 = vector.broadcast %92 : vector<32x1xf32> to vector<32x32xf32>
    %94 = arith.subf %90, %93 : vector<32x32xf32>
    %95 = math.exp %94 : vector<32x32xf32>
    %cst_47 = arith.constant dense<0.000000e+00> : vector<32xf32>
    %96 = vector.multi_reduction <add>, %95, %cst_47 [1] : vector<32x32xf32> to vector<32xf32>
    %97 = vector.shape_cast %96 : vector<32xf32> to vector<32x1xf32>
    %98 = tpu.reciprocal %97 {approx = true} : vector<32x1xf32> -> vector<32x1xf32>
    %99 = vector.broadcast %98 : vector<32x1xf32> to vector<32x32xf32>
    %100 = arith.mulf %95, %99 : vector<32x32xf32>
    %cst_48 = arith.constant dense<0.000000e+00> : vector<32x16xf32>
    %101 = tpu.matmul %100, %86, %cst_48 {dimension_numbers = #tpu.dot_dimension_numbers<[1], [0], [0], [1], [0, 0, 1, 1], [], []>} : vector<32x32xf32>, vector<32x16xf32>, vector<32x16xf32> -> vector<32x16xf32>
    %c472 = arith.constant 472 : index
    %c0_49 = arith.constant 0 : index
    %102 = vector.load %arg2[%c472, %c0_49] : memref<1248x128xf32, #tpu.memory_space<vmem>>, vector<16x32xf32>
    %cst_50 = arith.constant dense<0.000000e+00> : vector<32x32xf32>
    %103 = tpu.matmul %101, %102, %cst_50 {dimension_numbers = #tpu.dot_dimension_numbers<[1], [0], [0], [1], [0, 0, 1, 1], [], []>} : vector<32x16xf32>, vector<16x32xf32>, vector<32x32xf32> -> vector<32x32xf32>
    %104 = arith.addf %71, %103 : vector<32x32xf32>
    %105 = arith.addf %11, %104 : vector<32x32xf32>
    %c496 = arith.constant 496 : index
    %c0_51 = arith.constant 0 : index
    %106 = vector.load %arg2[%c496, %c0_51] : memref<1248x128xf32, #tpu.memory_space<vmem>>, vector<1x32xf32>
    %c504 = arith.constant 504 : index
    %c0_52 = arith.constant 0 : index
    %107 = vector.load %arg2[%c504, %c0_52] : memref<1248x128xf32, #tpu.memory_space<vmem>>, vector<1x32xf32>
    %cst_53 = arith.constant dense<0.000000e+00> : vector<32xf32>
    %108 = vector.multi_reduction <add>, %105, %cst_53 [1] : vector<32x32xf32> to vector<32xf32>
    %109 = vector.shape_cast %108 : vector<32xf32> to vector<32x1xf32>
    %cst_54 = arith.constant 3.200000e+01 : f32
    %110 = vector.broadcast %cst_54 : f32 to vector<32x1xf32>
    %111 = arith.divf %109, %110 : vector<32x1xf32>
    %112 = vector.broadcast %111 : vector<32x1xf32> to vector<32x32xf32>
    %113 = arith.subf %105, %112 : vector<32x32xf32>
    %114 = arith.mulf %113, %113 : vector<32x32xf32>
    %cst_55 = arith.constant dense<0.000000e+00> : vector<32xf32>
    %115 = vector.multi_reduction <add>, %114, %cst_55 [1] : vector<32x32xf32> to vector<32xf32>
    %116 = vector.shape_cast %115 : vector<32xf32> to vector<32x1xf32>
    %cst_56 = arith.constant 3.200000e+01 : f32
    %117 = vector.broadcast %cst_56 : f32 to vector<32x1xf32>
    %118 = arith.divf %116, %117 : vector<32x1xf32>
    %119 = vector.broadcast %111 : vector<32x1xf32> to vector<32x32xf32>
    %120 = arith.subf %105, %119 : vector<32x32xf32>
    %cst_57 = arith.constant 9.99999974E-6 : f32
    %121 = vector.broadcast %cst_57 : f32 to vector<32x1xf32>
    %122 = arith.addf %118, %121 : vector<32x1xf32>
    %123 = math.rsqrt %122 : vector<32x1xf32>
    %124 = vector.broadcast %123 : vector<32x1xf32> to vector<32x32xf32>
    %125 = arith.mulf %120, %124 : vector<32x32xf32>
    %126 = vector.broadcast %106 : vector<1x32xf32> to vector<32x32xf32>
    %127 = arith.mulf %125, %126 : vector<32x32xf32>
    %128 = vector.broadcast %107 : vector<1x32xf32> to vector<32x32xf32>
    %129 = arith.addf %127, %128 : vector<32x32xf32>
    %c512 = arith.constant 512 : index
    %c0_58 = arith.constant 0 : index
    %130 = vector.load %arg2[%c512, %c0_58] : memref<1248x128xf32, #tpu.memory_space<vmem>>, vector<32x64xf32>
    %cst_59 = arith.constant dense<0.000000e+00> : vector<32x64xf32>
    %131 = tpu.matmul %129, %130, %cst_59 {dimension_numbers = #tpu.dot_dimension_numbers<[1], [0], [0], [1], [0, 0, 1, 1], [], []>} : vector<32x32xf32>, vector<32x64xf32>, vector<32x64xf32> -> vector<32x64xf32>
    %c544 = arith.constant 544 : index
    %c0_60 = arith.constant 0 : index
    %132 = vector.load %arg2[%c544, %c0_60] : memref<1248x128xf32, #tpu.memory_space<vmem>>, vector<1x64xf32>
    %133 = vector.broadcast %132 : vector<1x64xf32> to vector<32x64xf32>
    %134 = arith.addf %131, %133 : vector<32x64xf32>
    %135 = arith.mulf %134, %134 : vector<32x64xf32>
    %136 = arith.mulf %134, %135 : vector<32x64xf32>
    %cst_61 = arith.constant 4.471500e-02 : f32
    %137 = vector.broadcast %cst_61 : f32 to vector<32x64xf32>
    %138 = arith.mulf %137, %136 : vector<32x64xf32>
    %139 = arith.addf %134, %138 : vector<32x64xf32>
    %cst_62 = arith.constant 0.797884583 : f32
    %140 = vector.broadcast %cst_62 : f32 to vector<32x64xf32>
    %141 = arith.mulf %140, %139 : vector<32x64xf32>
    %142 = math.tanh %141 : vector<32x64xf32>
    %cst_63 = arith.constant 1.000000e+00 : f32
    %143 = vector.broadcast %cst_63 : f32 to vector<32x64xf32>
    %144 = arith.addf %143, %142 : vector<32x64xf32>
    %cst_64 = arith.constant 5.000000e-01 : f32
    %145 = vector.broadcast %cst_64 : f32 to vector<32x64xf32>
    %146 = arith.mulf %145, %144 : vector<32x64xf32>
    %147 = arith.mulf %134, %146 : vector<32x64xf32>
    %c552 = arith.constant 552 : index
    %c0_65 = arith.constant 0 : index
    %148 = vector.load %arg2[%c552, %c0_65] : memref<1248x128xf32, #tpu.memory_space<vmem>>, vector<64x32xf32>
    %cst_66 = arith.constant dense<0.000000e+00> : vector<32x32xf32>
    %149 = tpu.matmul %147, %148, %cst_66 {dimension_numbers = #tpu.dot_dimension_numbers<[1], [0], [0], [1], [0, 0, 1, 1], [], []>} : vector<32x64xf32>, vector<64x32xf32>, vector<32x32xf32> -> vector<32x32xf32>
    %c616 = arith.constant 616 : index
    %c0_67 = arith.constant 0 : index
    %150 = vector.load %arg2[%c616, %c0_67] : memref<1248x128xf32, #tpu.memory_space<vmem>>, vector<1x32xf32>
    %151 = vector.broadcast %150 : vector<1x32xf32> to vector<32x32xf32>
    %152 = arith.addf %149, %151 : vector<32x32xf32>
    %153 = arith.addf %105, %152 : vector<32x32xf32>
    %c624 = arith.constant 624 : index
    %c0_68 = arith.constant 0 : index
    %154 = vector.load %arg2[%c624, %c0_68] : memref<1248x128xf32, #tpu.memory_space<vmem>>, vector<1x32xf32>
    %c632 = arith.constant 632 : index
    %c0_69 = arith.constant 0 : index
    %155 = vector.load %arg2[%c632, %c0_69] : memref<1248x128xf32, #tpu.memory_space<vmem>>, vector<1x32xf32>
    %cst_70 = arith.constant dense<0.000000e+00> : vector<32xf32>
    %156 = vector.multi_reduction <add>, %153, %cst_70 [1] : vector<32x32xf32> to vector<32xf32>
    %157 = vector.shape_cast %156 : vector<32xf32> to vector<32x1xf32>
    %cst_71 = arith.constant 3.200000e+01 : f32
    %158 = vector.broadcast %cst_71 : f32 to vector<32x1xf32>
    %159 = arith.divf %157, %158 : vector<32x1xf32>
    %160 = vector.broadcast %159 : vector<32x1xf32> to vector<32x32xf32>
    %161 = arith.subf %153, %160 : vector<32x32xf32>
    %162 = arith.mulf %161, %161 : vector<32x32xf32>
    %cst_72 = arith.constant dense<0.000000e+00> : vector<32xf32>
    %163 = vector.multi_reduction <add>, %162, %cst_72 [1] : vector<32x32xf32> to vector<32xf32>
    %164 = vector.shape_cast %163 : vector<32xf32> to vector<32x1xf32>
    %cst_73 = arith.constant 3.200000e+01 : f32
    %165 = vector.broadcast %cst_73 : f32 to vector<32x1xf32>
    %166 = arith.divf %164, %165 : vector<32x1xf32>
    %167 = vector.broadcast %159 : vector<32x1xf32> to vector<32x32xf32>
    %168 = arith.subf %153, %167 : vector<32x32xf32>
    %cst_74 = arith.constant 9.99999974E-6 : f32
    %169 = vector.broadcast %cst_74 : f32 to vector<32x1xf32>
    %170 = arith.addf %166, %169 : vector<32x1xf32>
    %171 = math.rsqrt %170 : vector<32x1xf32>
    %172 = vector.broadcast %171 : vector<32x1xf32> to vector<32x32xf32>
    %173 = arith.mulf %168, %172 : vector<32x32xf32>
    %174 = vector.broadcast %154 : vector<1x32xf32> to vector<32x32xf32>
    %175 = arith.mulf %173, %174 : vector<32x32xf32>
    %176 = vector.broadcast %155 : vector<1x32xf32> to vector<32x32xf32>
    %177 = arith.addf %175, %176 : vector<32x32xf32>
    %c912 = arith.constant 912 : index
    %c0_75 = arith.constant 0 : index
    %178 = vector.load %arg2[%c912, %c0_75] : memref<1248x128xf32, #tpu.memory_space<vmem>>, vector<1x32xf32>
    %c640 = arith.constant 640 : index
    %c0_76 = arith.constant 0 : index
    %179 = vector.load %arg2[%c640, %c0_76] : memref<1248x128xf32, #tpu.memory_space<vmem>>, vector<32x16xf32>
    %cst_77 = arith.constant dense<0.000000e+00> : vector<32x16xf32>
    %180 = tpu.matmul %177, %179, %cst_77 {dimension_numbers = #tpu.dot_dimension_numbers<[1], [0], [0], [1], [0, 0, 1, 1], [], []>} : vector<32x32xf32>, vector<32x16xf32>, vector<32x16xf32> -> vector<32x16xf32>
    %c672 = arith.constant 672 : index
    %c0_78 = arith.constant 0 : index
    %181 = vector.load %arg2[%c672, %c0_78] : memref<1248x128xf32, #tpu.memory_space<vmem>>, vector<1x16xf32>
    %182 = vector.broadcast %181 : vector<1x16xf32> to vector<32x16xf32>
    %183 = arith.addf %180, %182 : vector<32x16xf32>
    %c680 = arith.constant 680 : index
    %c0_79 = arith.constant 0 : index
    %184 = vector.load %arg2[%c680, %c0_79] : memref<1248x128xf32, #tpu.memory_space<vmem>>, vector<32x16xf32>
    %cst_80 = arith.constant dense<0.000000e+00> : vector<32x16xf32>
    %185 = tpu.matmul %177, %184, %cst_80 {dimension_numbers = #tpu.dot_dimension_numbers<[1], [0], [0], [1], [0, 0, 1, 1], [], []>} : vector<32x32xf32>, vector<32x16xf32>, vector<32x16xf32> -> vector<32x16xf32>
    %c712 = arith.constant 712 : index
    %c0_81 = arith.constant 0 : index
    %186 = vector.load %arg2[%c712, %c0_81] : memref<1248x128xf32, #tpu.memory_space<vmem>>, vector<1x16xf32>
    %187 = vector.broadcast %186 : vector<1x16xf32> to vector<32x16xf32>
    %188 = arith.addf %185, %187 : vector<32x16xf32>
    %c720 = arith.constant 720 : index
    %c0_82 = arith.constant 0 : index
    %189 = vector.load %arg2[%c720, %c0_82] : memref<1248x128xf32, #tpu.memory_space<vmem>>, vector<32x16xf32>
    %cst_83 = arith.constant dense<0.000000e+00> : vector<32x16xf32>
    %190 = tpu.matmul %177, %189, %cst_83 {dimension_numbers = #tpu.dot_dimension_numbers<[1], [0], [0], [1], [0, 0, 1, 1], [], []>} : vector<32x32xf32>, vector<32x16xf32>, vector<32x16xf32> -> vector<32x16xf32>
    %c752 = arith.constant 752 : index
    %c0_84 = arith.constant 0 : index
    %191 = vector.load %arg2[%c752, %c0_84] : memref<1248x128xf32, #tpu.memory_space<vmem>>, vector<1x16xf32>
    %192 = vector.broadcast %191 : vector<1x16xf32> to vector<32x16xf32>
    %193 = arith.addf %190, %192 : vector<32x16xf32>
    %cst_85 = arith.constant dense<0.000000e+00> : vector<32x32xf32>
    %194 = tpu.matmul %183, %188, %cst_85 {dimension_numbers = #tpu.dot_dimension_numbers<[1], [1], [0], [0], [0, 0, 1, 0], [], []>} : vector<32x16xf32>, vector<32x16xf32>, vector<32x32xf32> -> vector<32x32xf32>
    %cst_86 = arith.constant 2.500000e-01 : f32
    %195 = vector.broadcast %cst_86 : f32 to vector<32x32xf32>
    %196 = arith.mulf %194, %195 : vector<32x32xf32>
    %197 = arith.addf %196, %12 : vector<32x32xf32>
    %cst_87 = arith.constant dense<0xFF800000> : vector<32xf32>
    %198 = vector.multi_reduction <maximumf>, %197, %cst_87 [1] : vector<32x32xf32> to vector<32xf32>
    %199 = vector.shape_cast %198 : vector<32xf32> to vector<32x1xf32>
    %200 = vector.broadcast %199 : vector<32x1xf32> to vector<32x32xf32>
    %201 = arith.subf %197, %200 : vector<32x32xf32>
    %202 = math.exp %201 : vector<32x32xf32>
    %cst_88 = arith.constant dense<0.000000e+00> : vector<32xf32>
    %203 = vector.multi_reduction <add>, %202, %cst_88 [1] : vector<32x32xf32> to vector<32xf32>
    %204 = vector.shape_cast %203 : vector<32xf32> to vector<32x1xf32>
    %205 = tpu.reciprocal %204 {approx = true} : vector<32x1xf32> -> vector<32x1xf32>
    %206 = vector.broadcast %205 : vector<32x1xf32> to vector<32x32xf32>
    %207 = arith.mulf %202, %206 : vector<32x32xf32>
    %cst_89 = arith.constant dense<0.000000e+00> : vector<32x16xf32>
    %208 = tpu.matmul %207, %193, %cst_89 {dimension_numbers = #tpu.dot_dimension_numbers<[1], [0], [0], [1], [0, 0, 1, 1], [], []>} : vector<32x32xf32>, vector<32x16xf32>, vector<32x16xf32> -> vector<32x16xf32>
    %c760 = arith.constant 760 : index
    %c0_90 = arith.constant 0 : index
    %209 = vector.load %arg2[%c760, %c0_90] : memref<1248x128xf32, #tpu.memory_space<vmem>>, vector<16x32xf32>
    %cst_91 = arith.constant dense<0.000000e+00> : vector<32x32xf32>
    %210 = tpu.matmul %208, %209, %cst_91 {dimension_numbers = #tpu.dot_dimension_numbers<[1], [0], [0], [1], [0, 0, 1, 1], [], []>} : vector<32x16xf32>, vector<16x32xf32>, vector<32x32xf32> -> vector<32x32xf32>
    %211 = vector.broadcast %178 : vector<1x32xf32> to vector<32x32xf32>
    %212 = arith.addf %211, %210 : vector<32x32xf32>
    %c776 = arith.constant 776 : index
    %c0_92 = arith.constant 0 : index
    %213 = vector.load %arg2[%c776, %c0_92] : memref<1248x128xf32, #tpu.memory_space<vmem>>, vector<32x16xf32>
    %cst_93 = arith.constant dense<0.000000e+00> : vector<32x16xf32>
    %214 = tpu.matmul %177, %213, %cst_93 {dimension_numbers = #tpu.dot_dimension_numbers<[1], [0], [0], [1], [0, 0, 1, 1], [], []>} : vector<32x32xf32>, vector<32x16xf32>, vector<32x16xf32> -> vector<32x16xf32>
    %c808 = arith.constant 808 : index
    %c0_94 = arith.constant 0 : index
    %215 = vector.load %arg2[%c808, %c0_94] : memref<1248x128xf32, #tpu.memory_space<vmem>>, vector<1x16xf32>
    %216 = vector.broadcast %215 : vector<1x16xf32> to vector<32x16xf32>
    %217 = arith.addf %214, %216 : vector<32x16xf32>
    %c816 = arith.constant 816 : index
    %c0_95 = arith.constant 0 : index
    %218 = vector.load %arg2[%c816, %c0_95] : memref<1248x128xf32, #tpu.memory_space<vmem>>, vector<32x16xf32>
    %cst_96 = arith.constant dense<0.000000e+00> : vector<32x16xf32>
    %219 = tpu.matmul %177, %218, %cst_96 {dimension_numbers = #tpu.dot_dimension_numbers<[1], [0], [0], [1], [0, 0, 1, 1], [], []>} : vector<32x32xf32>, vector<32x16xf32>, vector<32x16xf32> -> vector<32x16xf32>
    %c848 = arith.constant 848 : index
    %c0_97 = arith.constant 0 : index
    %220 = vector.load %arg2[%c848, %c0_97] : memref<1248x128xf32, #tpu.memory_space<vmem>>, vector<1x16xf32>
    %221 = vector.broadcast %220 : vector<1x16xf32> to vector<32x16xf32>
    %222 = arith.addf %219, %221 : vector<32x16xf32>
    %c856 = arith.constant 856 : index
    %c0_98 = arith.constant 0 : index
    %223 = vector.load %arg2[%c856, %c0_98] : memref<1248x128xf32, #tpu.memory_space<vmem>>, vector<32x16xf32>
    %cst_99 = arith.constant dense<0.000000e+00> : vector<32x16xf32>
    %224 = tpu.matmul %177, %223, %cst_99 {dimension_numbers = #tpu.dot_dimension_numbers<[1], [0], [0], [1], [0, 0, 1, 1], [], []>} : vector<32x32xf32>, vector<32x16xf32>, vector<32x16xf32> -> vector<32x16xf32>
    %c888 = arith.constant 888 : index
    %c0_100 = arith.constant 0 : index
    %225 = vector.load %arg2[%c888, %c0_100] : memref<1248x128xf32, #tpu.memory_space<vmem>>, vector<1x16xf32>
    %226 = vector.broadcast %225 : vector<1x16xf32> to vector<32x16xf32>
    %227 = arith.addf %224, %226 : vector<32x16xf32>
    %cst_101 = arith.constant dense<0.000000e+00> : vector<32x32xf32>
    %228 = tpu.matmul %217, %222, %cst_101 {dimension_numbers = #tpu.dot_dimension_numbers<[1], [1], [0], [0], [0, 0, 1, 0], [], []>} : vector<32x16xf32>, vector<32x16xf32>, vector<32x32xf32> -> vector<32x32xf32>
    %cst_102 = arith.constant 2.500000e-01 : f32
    %229 = vector.broadcast %cst_102 : f32 to vector<32x32xf32>
    %230 = arith.mulf %228, %229 : vector<32x32xf32>
    %231 = arith.addf %230, %12 : vector<32x32xf32>
    %cst_103 = arith.constant dense<0xFF800000> : vector<32xf32>
    %232 = vector.multi_reduction <maximumf>, %231, %cst_103 [1] : vector<32x32xf32> to vector<32xf32>
    %233 = vector.shape_cast %232 : vector<32xf32> to vector<32x1xf32>
    %234 = vector.broadcast %233 : vector<32x1xf32> to vector<32x32xf32>
    %235 = arith.subf %231, %234 : vector<32x32xf32>
    %236 = math.exp %235 : vector<32x32xf32>
    %cst_104 = arith.constant dense<0.000000e+00> : vector<32xf32>
    %237 = vector.multi_reduction <add>, %236, %cst_104 [1] : vector<32x32xf32> to vector<32xf32>
    %238 = vector.shape_cast %237 : vector<32xf32> to vector<32x1xf32>
    %239 = tpu.reciprocal %238 {approx = true} : vector<32x1xf32> -> vector<32x1xf32>
    %240 = vector.broadcast %239 : vector<32x1xf32> to vector<32x32xf32>
    %241 = arith.mulf %236, %240 : vector<32x32xf32>
    %cst_105 = arith.constant dense<0.000000e+00> : vector<32x16xf32>
    %242 = tpu.matmul %241, %227, %cst_105 {dimension_numbers = #tpu.dot_dimension_numbers<[1], [0], [0], [1], [0, 0, 1, 1], [], []>} : vector<32x32xf32>, vector<32x16xf32>, vector<32x16xf32> -> vector<32x16xf32>
    %c896 = arith.constant 896 : index
    %c0_106 = arith.constant 0 : index
    %243 = vector.load %arg2[%c896, %c0_106] : memref<1248x128xf32, #tpu.memory_space<vmem>>, vector<16x32xf32>
    %cst_107 = arith.constant dense<0.000000e+00> : vector<32x32xf32>
    %244 = tpu.matmul %242, %243, %cst_107 {dimension_numbers = #tpu.dot_dimension_numbers<[1], [0], [0], [1], [0, 0, 1, 1], [], []>} : vector<32x16xf32>, vector<16x32xf32>, vector<32x32xf32> -> vector<32x32xf32>
    %245 = arith.addf %212, %244 : vector<32x32xf32>
    %246 = arith.addf %153, %245 : vector<32x32xf32>
    %c920 = arith.constant 920 : index
    %c0_108 = arith.constant 0 : index
    %247 = vector.load %arg2[%c920, %c0_108] : memref<1248x128xf32, #tpu.memory_space<vmem>>, vector<1x32xf32>
    %c928 = arith.constant 928 : index
    %c0_109 = arith.constant 0 : index
    %248 = vector.load %arg2[%c928, %c0_109] : memref<1248x128xf32, #tpu.memory_space<vmem>>, vector<1x32xf32>
    %cst_110 = arith.constant dense<0.000000e+00> : vector<32xf32>
    %249 = vector.multi_reduction <add>, %246, %cst_110 [1] : vector<32x32xf32> to vector<32xf32>
    %250 = vector.shape_cast %249 : vector<32xf32> to vector<32x1xf32>
    %cst_111 = arith.constant 3.200000e+01 : f32
    %251 = vector.broadcast %cst_111 : f32 to vector<32x1xf32>
    %252 = arith.divf %250, %251 : vector<32x1xf32>
    %253 = vector.broadcast %252 : vector<32x1xf32> to vector<32x32xf32>
    %254 = arith.subf %246, %253 : vector<32x32xf32>
    %255 = arith.mulf %254, %254 : vector<32x32xf32>
    %cst_112 = arith.constant dense<0.000000e+00> : vector<32xf32>
    %256 = vector.multi_reduction <add>, %255, %cst_112 [1] : vector<32x32xf32> to vector<32xf32>
    %257 = vector.shape_cast %256 : vector<32xf32> to vector<32x1xf32>
    %cst_113 = arith.constant 3.200000e+01 : f32
    %258 = vector.broadcast %cst_113 : f32 to vector<32x1xf32>
    %259 = arith.divf %257, %258 : vector<32x1xf32>
    %260 = vector.broadcast %252 : vector<32x1xf32> to vector<32x32xf32>
    %261 = arith.subf %246, %260 : vector<32x32xf32>
    %cst_114 = arith.constant 9.99999974E-6 : f32
    %262 = vector.broadcast %cst_114 : f32 to vector<32x1xf32>
    %263 = arith.addf %259, %262 : vector<32x1xf32>
    %264 = math.rsqrt %263 : vector<32x1xf32>
    %265 = vector.broadcast %264 : vector<32x1xf32> to vector<32x32xf32>
    %266 = arith.mulf %261, %265 : vector<32x32xf32>
    %267 = vector.broadcast %247 : vector<1x32xf32> to vector<32x32xf32>
    %268 = arith.mulf %266, %267 : vector<32x32xf32>
    %269 = vector.broadcast %248 : vector<1x32xf32> to vector<32x32xf32>
    %270 = arith.addf %268, %269 : vector<32x32xf32>
    %c936 = arith.constant 936 : index
    %c0_115 = arith.constant 0 : index
    %271 = vector.load %arg2[%c936, %c0_115] : memref<1248x128xf32, #tpu.memory_space<vmem>>, vector<32x64xf32>
    %cst_116 = arith.constant dense<0.000000e+00> : vector<32x64xf32>
    %272 = tpu.matmul %270, %271, %cst_116 {dimension_numbers = #tpu.dot_dimension_numbers<[1], [0], [0], [1], [0, 0, 1, 1], [], []>} : vector<32x32xf32>, vector<32x64xf32>, vector<32x64xf32> -> vector<32x64xf32>
    %c968 = arith.constant 968 : index
    %c0_117 = arith.constant 0 : index
    %273 = vector.load %arg2[%c968, %c0_117] : memref<1248x128xf32, #tpu.memory_space<vmem>>, vector<1x64xf32>
    %274 = vector.broadcast %273 : vector<1x64xf32> to vector<32x64xf32>
    %275 = arith.addf %272, %274 : vector<32x64xf32>
    %276 = arith.mulf %275, %275 : vector<32x64xf32>
    %277 = arith.mulf %275, %276 : vector<32x64xf32>
    %cst_118 = arith.constant 4.471500e-02 : f32
    %278 = vector.broadcast %cst_118 : f32 to vector<32x64xf32>
    %279 = arith.mulf %278, %277 : vector<32x64xf32>
    %280 = arith.addf %275, %279 : vector<32x64xf32>
    %cst_119 = arith.constant 0.797884583 : f32
    %281 = vector.broadcast %cst_119 : f32 to vector<32x64xf32>
    %282 = arith.mulf %281, %280 : vector<32x64xf32>
    %283 = math.tanh %282 : vector<32x64xf32>
    %cst_120 = arith.constant 1.000000e+00 : f32
    %284 = vector.broadcast %cst_120 : f32 to vector<32x64xf32>
    %285 = arith.addf %284, %283 : vector<32x64xf32>
    %cst_121 = arith.constant 5.000000e-01 : f32
    %286 = vector.broadcast %cst_121 : f32 to vector<32x64xf32>
    %287 = arith.mulf %286, %285 : vector<32x64xf32>
    %288 = arith.mulf %275, %287 : vector<32x64xf32>
    %c976 = arith.constant 976 : index
    %c0_122 = arith.constant 0 : index
    %289 = vector.load %arg2[%c976, %c0_122] : memref<1248x128xf32, #tpu.memory_space<vmem>>, vector<64x32xf32>
    %cst_123 = arith.constant dense<0.000000e+00> : vector<32x32xf32>
    %290 = tpu.matmul %288, %289, %cst_123 {dimension_numbers = #tpu.dot_dimension_numbers<[1], [0], [0], [1], [0, 0, 1, 1], [], []>} : vector<32x64xf32>, vector<64x32xf32>, vector<32x32xf32> -> vector<32x32xf32>
    %c1040 = arith.constant 1040 : index
    %c0_124 = arith.constant 0 : index
    %291 = vector.load %arg2[%c1040, %c0_124] : memref<1248x128xf32, #tpu.memory_space<vmem>>, vector<1x32xf32>
    %292 = vector.broadcast %291 : vector<1x32xf32> to vector<32x32xf32>
    %293 = arith.addf %290, %292 : vector<32x32xf32>
    %294 = arith.addf %246, %293 : vector<32x32xf32>
    %c1048 = arith.constant 1048 : index
    %c0_125 = arith.constant 0 : index
    %295 = vector.load %arg2[%c1048, %c0_125] : memref<1248x128xf32, #tpu.memory_space<vmem>>, vector<1x32xf32>
    %c1056 = arith.constant 1056 : index
    %c0_126 = arith.constant 0 : index
    %296 = vector.load %arg2[%c1056, %c0_126] : memref<1248x128xf32, #tpu.memory_space<vmem>>, vector<1x32xf32>
    %cst_127 = arith.constant dense<0.000000e+00> : vector<32xf32>
    %297 = vector.multi_reduction <add>, %294, %cst_127 [1] : vector<32x32xf32> to vector<32xf32>
    %298 = vector.shape_cast %297 : vector<32xf32> to vector<32x1xf32>
    %cst_128 = arith.constant 3.200000e+01 : f32
    %299 = vector.broadcast %cst_128 : f32 to vector<32x1xf32>
    %300 = arith.divf %298, %299 : vector<32x1xf32>
    %301 = vector.broadcast %300 : vector<32x1xf32> to vector<32x32xf32>
    %302 = arith.subf %294, %301 : vector<32x32xf32>
    %303 = arith.mulf %302, %302 : vector<32x32xf32>
    %cst_129 = arith.constant dense<0.000000e+00> : vector<32xf32>
    %304 = vector.multi_reduction <add>, %303, %cst_129 [1] : vector<32x32xf32> to vector<32xf32>
    %305 = vector.shape_cast %304 : vector<32xf32> to vector<32x1xf32>
    %cst_130 = arith.constant 3.200000e+01 : f32
    %306 = vector.broadcast %cst_130 : f32 to vector<32x1xf32>
    %307 = arith.divf %305, %306 : vector<32x1xf32>
    %308 = vector.broadcast %300 : vector<32x1xf32> to vector<32x32xf32>
    %309 = arith.subf %294, %308 : vector<32x32xf32>
    %cst_131 = arith.constant 9.99999974E-6 : f32
    %310 = vector.broadcast %cst_131 : f32 to vector<32x1xf32>
    %311 = arith.addf %307, %310 : vector<32x1xf32>
    %312 = math.rsqrt %311 : vector<32x1xf32>
    %313 = vector.broadcast %312 : vector<32x1xf32> to vector<32x32xf32>
    %314 = arith.mulf %309, %313 : vector<32x32xf32>
    %315 = vector.broadcast %295 : vector<1x32xf32> to vector<32x32xf32>
    %316 = arith.mulf %314, %315 : vector<32x32xf32>
    %317 = vector.broadcast %296 : vector<1x32xf32> to vector<32x32xf32>
    %318 = arith.addf %316, %317 : vector<32x32xf32>
    %c184 = arith.constant 184 : index
    %c0_132 = arith.constant 0 : index
    %319 = vector.load %arg2[%c184, %c0_132] : memref<1248x128xf32, #tpu.memory_space<vmem>>, vector<4x32xf32>
    %cst_133 = arith.constant dense<0.000000e+00> : vector<4x32xf32>
    %320 = tpu.matmul %319, %318, %cst_133 {dimension_numbers = #tpu.dot_dimension_numbers<[1], [0], [0], [1], [0, 0, 1, 1], [], []>} : vector<4x32xf32>, vector<32x32xf32>, vector<4x32xf32> -> vector<4x32xf32>
    %c192 = arith.constant 192 : index
    %c0_134 = arith.constant 0 : index
    %321 = vector.load %arg2[%c192, %c0_134] : memref<1248x128xf32, #tpu.memory_space<vmem>>, vector<8x32xf32>
    %cst_135 = arith.constant dense<0.000000e+00> : vector<8x32xf32>
    %322 = tpu.matmul %321, %318, %cst_135 {dimension_numbers = #tpu.dot_dimension_numbers<[1], [0], [0], [1], [0, 0, 1, 1], [], []>} : vector<8x32xf32>, vector<32x32xf32>, vector<8x32xf32> -> vector<8x32xf32>
    %c1064 = arith.constant 1064 : index
    %c0_136 = arith.constant 0 : index
    %323 = vector.load %arg2[%c1064, %c0_136] : memref<1248x128xf32, #tpu.memory_space<vmem>>, vector<32x32xf32>
    %cst_137 = arith.constant dense<0.000000e+00> : vector<4x32xf32>
    %324 = tpu.matmul %320, %323, %cst_137 {dimension_numbers = #tpu.dot_dimension_numbers<[1], [0], [0], [1], [0, 0, 1, 1], [], []>} : vector<4x32xf32>, vector<32x32xf32>, vector<4x32xf32> -> vector<4x32xf32>
    %c1096 = arith.constant 1096 : index
    %c0_138 = arith.constant 0 : index
    %325 = vector.load %arg2[%c1096, %c0_138] : memref<1248x128xf32, #tpu.memory_space<vmem>>, vector<1x32xf32>
    %326 = vector.broadcast %325 : vector<1x32xf32> to vector<4x32xf32>
    %327 = arith.addf %324, %326 : vector<4x32xf32>
    %cst_139 = arith.constant 0.000000e+00 : f32
    %328 = vector.broadcast %cst_139 : f32 to vector<4x32xf32>
    %329 = arith.maximumf %327, %328 : vector<4x32xf32>
    %c1104 = arith.constant 1104 : index
    %c0_140 = arith.constant 0 : index
    %330 = vector.load %arg2[%c1104, %c0_140] : memref<1248x128xf32, #tpu.memory_space<vmem>>, vector<32x3xf32>
    %cst_141 = arith.constant dense<0.000000e+00> : vector<4x3xf32>
    %331 = tpu.matmul %329, %330, %cst_141 {dimension_numbers = #tpu.dot_dimension_numbers<[1], [0], [0], [1], [0, 0, 1, 1], [], []>} : vector<4x32xf32>, vector<32x3xf32>, vector<4x3xf32> -> vector<4x3xf32>
    %c1136 = arith.constant 1136 : index
    %c0_142 = arith.constant 0 : index
    %332 = vector.load %arg2[%c1136, %c0_142] : memref<1248x128xf32, #tpu.memory_space<vmem>>, vector<1x3xf32>
    %333 = vector.broadcast %332 : vector<1x3xf32> to vector<4x3xf32>
    %334 = arith.addf %331, %333 : vector<4x3xf32>
    %335 = math.tanh %334 : vector<4x3xf32>
    %c1232 = arith.constant 1232 : index
    %c0_143 = arith.constant 0 : index
    %336 = vector.load %arg2[%c1232, %c0_143] : memref<1248x128xf32, #tpu.memory_space<vmem>>, vector<1x3xf32>
    %c1240 = arith.constant 1240 : index
    %c0_144 = arith.constant 0 : index
    %337 = vector.load %arg2[%c1240, %c0_144] : memref<1248x128xf32, #tpu.memory_space<vmem>>, vector<1x3xf32>
    %338 = vector.broadcast %337 : vector<1x3xf32> to vector<4x3xf32>
    %339 = arith.mulf %335, %338 : vector<4x3xf32>
    %340 = vector.broadcast %336 : vector<1x3xf32> to vector<4x3xf32>
    %341 = arith.addf %340, %339 : vector<4x3xf32>
    %342 = tpu.concatenate %1, %341 in 0 : vector<4x3xf32>, vector<4x3xf32> -> vector<8x3xf32>
    %c1144 = arith.constant 1144 : index
    %c0_145 = arith.constant 0 : index
    %343 = vector.load %arg2[%c1144, %c0_145] : memref<1248x128xf32, #tpu.memory_space<vmem>>, vector<32x32xf32>
    %cst_146 = arith.constant dense<0.000000e+00> : vector<8x32xf32>
    %344 = tpu.matmul %322, %343, %cst_146 {dimension_numbers = #tpu.dot_dimension_numbers<[1], [0], [0], [1], [0, 0, 1, 1], [], []>} : vector<8x32xf32>, vector<32x32xf32>, vector<8x32xf32> -> vector<8x32xf32>
    %c1176 = arith.constant 1176 : index
    %c0_147 = arith.constant 0 : index
    %345 = vector.load %arg2[%c1176, %c0_147] : memref<1248x128xf32, #tpu.memory_space<vmem>>, vector<3x32xf32>
    %cst_148 = arith.constant dense<0.000000e+00> : vector<8x32xf32>
    %346 = tpu.matmul %342, %345, %cst_148 {dimension_numbers = #tpu.dot_dimension_numbers<[1], [0], [0], [1], [0, 0, 1, 1], [], []>} : vector<8x3xf32>, vector<3x32xf32>, vector<8x32xf32> -> vector<8x32xf32>
    %347 = arith.addf %344, %346 : vector<8x32xf32>
    %c1184 = arith.constant 1184 : index
    %c0_149 = arith.constant 0 : index
    %348 = vector.load %arg2[%c1184, %c0_149] : memref<1248x128xf32, #tpu.memory_space<vmem>>, vector<1x32xf32>
    %349 = vector.broadcast %348 : vector<1x32xf32> to vector<8x32xf32>
    %350 = arith.addf %347, %349 : vector<8x32xf32>
    %cst_150 = arith.constant 0.000000e+00 : f32
    %351 = vector.broadcast %cst_150 : f32 to vector<8x32xf32>
    %352 = arith.maximumf %350, %351 : vector<8x32xf32>
    %c1192 = arith.constant 1192 : index
    %c0_151 = arith.constant 0 : index
    %353 = vector.load %arg2[%c1192, %c0_151] : memref<1248x128xf32, #tpu.memory_space<vmem>>, vector<32x1xf32>
    %cst_152 = arith.constant dense<0.000000e+00> : vector<8x1xf32>
    %354 = tpu.matmul %352, %353, %cst_152 {dimension_numbers = #tpu.dot_dimension_numbers<[1], [0], [0], [1], [0, 0, 1, 1], [], []>} : vector<8x32xf32>, vector<32x1xf32>, vector<8x1xf32> -> vector<8x1xf32>
    %c1224 = arith.constant 1224 : index
    %c0_153 = arith.constant 0 : index
    %355 = vector.load %arg2[%c1224, %c0_153] : memref<1248x128xf32, #tpu.memory_space<vmem>>, vector<1x1xf32>
    %356 = vector.broadcast %355 : vector<1x1xf32> to vector<8x1xf32>
    %357 = arith.addf %354, %356 : vector<8x1xf32>
    %cst_154 = arith.constant 0.000000e+00 : f32
    %358 = vector.broadcast %cst_154 : f32 to vector<8x128xf32>
    %c0_155 = arith.constant 0 : index
    %c0_156 = arith.constant 0 : index
    %359 = vector.load %arg3[%c0_155, %c0_156] : memref<8x128xf32, #tpu.memory_space<vmem>>, vector<8x128xf32>
    tpu.vector_store %arg3[%c0_155, %c0_156], %358 {strides = array<i32>} : memref<8x128xf32, #tpu.memory_space<vmem>>, vector<8x128xf32>,
    %c0_157 = arith.constant 0 : index
    %c0_158 = arith.constant 0 : index
    %360 = vector.load %arg3[%c0_157, %c0_158] : memref<8x128xf32, #tpu.memory_space<vmem>>, vector<4x3xf32>
    tpu.vector_store %arg3[%c0_157, %c0_158], %341 {strides = array<i32>} : memref<8x128xf32, #tpu.memory_space<vmem>>, vector<4x3xf32>,
    %c0_159 = arith.constant 0 : index
    %c3 = arith.constant 3 : index
    %361 = vector.load %arg3[%c0_159, %c3] : memref<8x128xf32, #tpu.memory_space<vmem>>, vector<8x1xf32>
    tpu.vector_store %arg3[%c0_159, %c3], %357 {strides = array<i32>} : memref<8x128xf32, #tpu.memory_space<vmem>>, vector<8x1xf32>,
    return
  }
  func.func @transform_0(%arg0: i32) -> (i32, i32) {
    %c0_i32 = arith.constant 0 : i32
    %c0_i32_0 = arith.constant 0 : i32
    %c0_i32_1 = arith.constant 0 : i32
    return %c0_i32, %c0_i32_0 : i32, i32
  }
  func.func @transform_1(%arg0: i32) -> (i32, i32) {
    %c0_i32 = arith.constant 0 : i32
    %c0_i32_0 = arith.constant 0 : i32
    %c0_i32_1 = arith.constant 0 : i32
    return %c0_i32, %c0_i32_0 : i32, i32
  }
  func.func @transform_2(%arg0: i32) -> (i32, i32) {
    %c0_i32 = arith.constant 0 : i32
    %c0_i32_0 = arith.constant 0 : i32
    %c0_i32_1 = arith.constant 0 : i32
    return %c0_i32, %c0_i32_0 : i32, i32
  }
}

</mosaic_0001>

<llo_original>
// kernel: squeeze.5
$region0: #{squeeze.5}
  %s0 = inlined_call_operand.vmem [shape: f32[4], index: 0, kind: input, shape index: {}]
  %s1 = inlined_call_operand.vmem [shape: f32[2,2], index: 1, kind: output, shape index: {}]
  $region1: #{squeeze.5} parent=0
    #allocation0 [shape = 'u8[4096]{0}', space=vmem, size = 0x1000, scoped, tag = 'scoped mem for output reshape']
    #allocation1 [shape = 'u8[4096]{0}', space=vmem, size = 0x1000, scoped, tag = 'scoped mem for input reshape']
    %s3 = ssub.s32 2, 1
    %v4 = vld [vmem:[%s0] sm:%s3]
    %5 = vst [vmem:[#allocation1] sm:%s3] %v4
    %v6 = vld [vmem:[#allocation1] sm:$0x1]
    %vm7 = vcmask 15360
    %8 = vst.msk [vmem:[#allocation0] sm:$0x1] %vm7, %v6
    %v9 = vld [vmem:[#allocation1] sm:$0x1]
    %10 = vrot.lane.b32.xlu0 %v9, 126
    %v11 = vpop.permute.xlu0 %10
    %vm12 = vcmask 15360
    %s13 = scalar_lea.vmem [#allocation0], 1
    %14 = vst.msk [vmem:[%s13] sm:$0x1] %vm12, %v11
    %s16 = ssub.s32 4, 1
    %v17 = vld [vmem:[#allocation0] sm:%s16]
    %s19 = ssub.s32 4, 1
    %20 = vst [vmem:[%s1] sm:%s19] %v17

// kernel: _lambda_.1
$region0: #{_lambda_.1}
  #allocation0 [shape = 'u32[]', space=smem, size = 0x4, offset = 0x4, fixed_abs, tag = 'smem constant byte address 0x4 - core index']
  #allocation1 [shape = 'u32[72,128]{1,0:T(1,128)}', space=vmem, size = 0x9000, scoped, tag = 'internal scratch']
  %s0 = inlined_call_operand.vmem [shape: f32[8,128], index: 0, kind: input, shape index: {}]
  %s1 = inlined_call_operand.hbm [shape: f32[1248,128], index: 1, kind: input, shape index: {}]
  %s2 = inlined_call_operand.vmem [shape: f32[8,128], index: 2, kind: output, shape index: {}]
  %s3 = sld [smem:[#allocation0]]
  $region22: #{_lambda_.1} parent=0
    _
  %s5 = ssub.s32 1, %s3
  %s6 = scalar_select 0, %s5, %s3
  $region1: #{_lambda_.1} parent=0
    #allocation2 [shape = 'u8[638976]{0}', space=vmem, size = 0x9c000, scoped, tag = 'input window, operand 1, single buffered']
    #allocation3 [shape = 's32[1]{0}', space=sflag, size = 0x4, scoped, tag = 'scoped memory for _lambda_.1']
    %7 = vsyncpa [#allocation3], 0
    // Predicated region
    $region2: #{_lambda_.1} parent=1 // pred_check
      _
    $region3: #{_lambda_.1} parent=1 // pred_check_branch
      %9 = sbr.rel (0) target = $region5
    $region4: #{_lambda_.1} parent=1 // pred_region
      _
    $region5: #{_lambda_.1} parent=1 // pred_fallthru
      _
    // Predicated region
    $region6: #{_lambda_.1} parent=1 // pred_check
      _
    $region7: #{_lambda_.1} parent=1 // pred_check_branch
      %11 = sbr.rel (0) target = $region9
    $region8: #{_lambda_.1} parent=1 // pred_region
      %13 = vsyncadd [#allocation3], 0
      %s14 = sshll.u32 %s1, 4
      %s15 = int_to_ptr.hbm [resolvable:$true] %s14
      %s16 = sshll.u32 [#allocation2], 4
      %s17 = int_to_ptr.vmem [resolvable:$true] %s16
      %22 = dma.hbm_to_vmem [thread:$0]  %s15, 19968, %s17, [#allocation3], 128, 128, 8
    $region9: #{_lambda_.1} parent=1 // pred_fallthru
      _
    // Predicated region
    $region10: #{_lambda_.1} parent=1 // pred_check
      _
    $region11: #{_lambda_.1} parent=1 // pred_check_branch
      %24 = sbr.rel (0) target = $region13
    $region12: #{_lambda_.1} parent=1 // pred_region
      %26 = dma.done [#allocation3], 19968
    $region13: #{_lambda_.1} parent=1 // pred_fallthru
      _
    %v27 = vld [vmem:[%s0] sm:$0xf]
    %v28 = vld [vmem:[%s0 + $0x4] sm:$0xf]
    %v29 = vld [vmem:[#allocation2 + $0x70] sm:$0xff]
    %v30 = vld [vmem:[#allocation2 + $0x78] sm:$0xff]
    %v31 = vld [vmem:[#allocation2 + $0x80] sm:$0xff]
    %v32 = vld [vmem:[#allocation2 + $0x88] sm:$0xff]
    %vm33 = vcmask 31744
    %v35 = vsel %vm33, %v29, 0
    %v38 = vsel %vm33, %v30, 0
    %v41 = vsel %vm33, %v31, 0
    %v44 = vsel %vm33, %v32, 0
    %vm46 = vcmask 1043456
    %v48 = vsel %vm46, %v27, 0
    %50 = vmatpush.msra.mxu0 0.0
    %51 = vmatpush.msra.mxu0 0.0
    %52 = vmatpush.msra.mxu0 0.0
    %53 = vmatpush.msra.mxu0 0.0
    %54 = vmatpush.msra.mxu0 0.0
    %55 = vmatpush.msra.mxu0 0.0
    %56 = vmatpush.msra.mxu0 0.0
    %57 = vmatpush.msra.mxu0 0.0
    %58 = vmatpush.msra.mxu0 0.0
    %59 = vmatpush.msra.mxu0 0.0
    %60 = vmatpush.msra.mxu0 0.0
    %61 = vmatpush.msra.mxu0 0.0
    %62 = vmatpush.msra.mxu0 0.0
    %63 = vmatpush.msra.mxu0 0.0
    %64 = vmatpush.msra.mxu0 0.0
    %65 = vmatpush.msra.mxu0 %v48
    %66 = vmatmul.f32.gmra.mxu0 %v35
    %v67 = vpop.f32.mrf.mxu0
    %v68 = vadd.f32 0.0, %v67
    %69 = vmatmul.f32.gmra.mxu0 %v38
    %v70 = vpop.f32.mrf.mxu0
    %v71 = vadd.f32 0.0, %v70
    %72 = vmatmul.f32.gmra.mxu0 %v41
    %v73 = vpop.f32.mrf.mxu0
    %v74 = vadd.f32 0.0, %v73
    %75 = vmatmul.f32.gmra.mxu0 %v44
    %v76 = vpop.f32.mrf.mxu0
    %v77 = vadd.f32 0.0, %v76
    %78 = vdwg.mxu0
    %v79 = vld [vmem:[#allocation2 + $0xb0] sm:$0xff]
    %vm80 = vcmask 64512
    %v82 = vsel %vm80, %v68, 0
    %v85 = vsel %vm80, %v71, 0
    %v88 = vsel %vm80, %v74, 0
    %v91 = vsel %vm80, %v77, 0
    %93 = vmatpush.msra.mxu0 0.0
    %94 = vmatpush.msra.mxu0 0.0
    %95 = vmatpush.msra.mxu0 0.0
    %96 = vmatpush.msra.mxu0 0.0
    %97 = vmatpush.msra.mxu0 0.0
    %98 = vmatpush.msra.mxu0 0.0
    %99 = vmatpush.msra.mxu0 0.0
    %100 = vmatpush.msra.mxu0 0.0
    %101 = vmatpush.msra.mxu0 0.0
    %102 = vmatpush.msra.mxu0 0.0
    %103 = vmatpush.msra.mxu0 0.0
    %104 = vmatpush.msra.mxu0 0.0
    %105 = vmatpush.msra.mxu0 0.0
    %106 = vmatpush.msra.mxu0 0.0
    %107 = vmatpush.msra.mxu0 0.0
    %108 = vmatpush.msra.mxu0 %v79
    %109 = vmatmul.f32.gmra.mxu0 %v82
    %v110 = vpop.f32.mrf.mxu0
    %v111 = vadd.f32 0.0, %v110
    %112 = vmatmul.f32.gmra.mxu0 %v85
    %v113 = vpop.f32.mrf.mxu0
    %v114 = vadd.f32 0.0, %v113
    %115 = vmatmul.f32.gmra.mxu0 %v88
    %v116 = vpop.f32.mrf.mxu0
    %v117 = vadd.f32 0.0, %v116
    %118 = vmatmul.f32.gmra.mxu0 %v91
    %v119 = vpop.f32.mrf.mxu0
    %v120 = vadd.f32 0.0, %v119
    %121 = vdwg.mxu0
    %v122 = vld [vmem:[#allocation2 + $0x90] sm:$0xff]
    %v123 = vld [vmem:[#allocation2 + $0x98] sm:$0xff]
    %v124 = vld [vmem:[#allocation2 + $0xa0] sm:$0xff]
    %v125 = vld [vmem:[#allocation2 + $0xa8] sm:$0xff]
    %v126 = vmul.f32 %v111, %v122
    %v127 = vmul.f32 %v114, %v123
    %v128 = vmul.f32 %v117, %v124
    %v129 = vmul.f32 %v120, %v125
    %v130 = vld [vmem:[#allocation2 + $0x50] sm:$0xff]
    %v131 = vld [vmem:[#allocation2 + $0x58] sm:$0xff]
    %v132 = vld [vmem:[#allocation2 + $0x60] sm:$0xff]
    %v133 = vld [vmem:[#allocation2 + $0x68] sm:$0xff]
    %v134 = vld [vmem:[#allocation2 + $0x20] sm:$0xff]
    %v135 = vld [vmem:[#allocation2 + $0x28] sm:$0xff]
    %v136 = vld [vmem:[#allocation2 + $0x30] sm:$0xff]
    %v137 = vld [vmem:[#allocation2 + $0x38] sm:$0xff]
    %v138 = vld [vmem:[#allocation2 + $0x40] sm:$0xff]
    %v139 = vld [vmem:[#allocation2 + $0x48] sm:$0xff]
    %vm140 = vcmask 392192
    %v142 = vsel %vm140, %v126, 0
    %v145 = vsel %vm140, %v127, 0
    %v148 = vsel %vm140, %v128, 0
    %v151 = vsel %vm140, %v129, 0
    %153 = vmatpush.msra.mxu0 0.0
    %154 = vmatpush.msra.mxu0 0.0
    %155 = vmatpush.msra.mxu0 0.0
    %156 = vmatpush.msra.mxu0 0.0
    %157 = vmatpush.msra.mxu0 0.0
    %158 = vmatpush.msra.mxu0 0.0
    %159 = vmatpush.msra.mxu0 0.0
    %160 = vmatpush.msra.mxu0 0.0
    %161 = vmatpush.msra.mxu0 0.0
    %162 = vmatpush.msra.mxu0 0.0
    %163 = vmatpush.msra.mxu0 %v139
    %164 = vmatpush.msra.mxu0 %v138
    %165 = vmatpush.msra.mxu0 %v137
    %166 = vmatpush.msra.mxu0 %v136
    %167 = vmatpush.msra.mxu0 %v135
    %168 = vmatpush.msra.mxu0 %v134
    %169 = vmatmul.f32.gmra.mxu0 %v142
    %v170 = vpop.f32.mrf.mxu0
    %v171 = vadd.f32 0.0, %v170
    %172 = vmatmul.f32.gmra.mxu0 %v145
    %v173 = vpop.f32.mrf.mxu0
    %v174 = vadd.f32 0.0, %v173
    %175 = vmatmul.f32.gmra.mxu0 %v148
    %v176 = vpop.f32.mrf.mxu0
    %v177 = vadd.f32 0.0, %v176
    %178 = vmatmul.f32.gmra.mxu0 %v151
    %v179 = vpop.f32.mrf.mxu0
    %v180 = vadd.f32 0.0, %v179
    %181 = vdwg.mxu0
    %v182 = vadd.f32 %v130, %v171
    %v183 = vadd.f32 %v131, %v174
    %v184 = vadd.f32 %v132, %v177
    %v185 = vadd.f32 %v133, %v180
    %v186 = vld [vmem:[#allocation2] sm:$0xff]
    %v187 = vld [vmem:[#allocation2 + $0x8] sm:$0xff]
    %v188 = vld [vmem:[#allocation2 + $0x10] sm:$0xff]
    %v189 = vld [vmem:[#allocation2 + $0x18] sm:$0xff]
    %v190 = vld [vmem:[#allocation2 + $0xc8] sm:$0x1]
    %v191 = vld [vmem:[#allocation2 + $0xd0] sm:$0x1]
    %vm192 = vcmask 261120
    %v193 = vsel %vm192, %v182, 0.0
    %194 = vadd.xlane.f32.xlu0 %v193
    %v195 = vpop.xlane.xlu0 %194
    %v196 = vsel %vm192, %v183, 0.0
    %197 = vadd.xlane.f32.xlu0 %v196
    %v198 = vpop.xlane.xlu0 %197
    %v199 = vsel %vm192, %v184, 0.0
    %200 = vadd.xlane.f32.xlu0 %v199
    %v201 = vpop.xlane.xlu0 %200
    %v202 = vsel %vm192, %v185, 0.0
    %203 = vadd.xlane.f32.xlu0 %v202
    %v204 = vpop.xlane.xlu0 %203
    %v205 = vrcp.pop 32.0
    %v206 = vmul.f32 32.0, %v205
    %v207 = vsub.f32 1.0, %v206
    %v208 = vmul.f32 %v205, %v207
    %v209 = vadd.f32 %v205, %v208
    %vm210 = vweird.f32 %v205
    %v211 = vsel %vm210, %v205, %v209
    %v212 = vmul.f32 %v195, %v211
    %v213 = vmul.f32 %v198, %v211
    %v214 = vmul.f32 %v201, %v211
    %v215 = vmul.f32 %v204, %v211
    %v216 = vsub.f32 %v182, %v212
    %v217 = vsub.f32 %v183, %v213
    %v218 = vsub.f32 %v184, %v214
    %v219 = vsub.f32 %v185, %v215
    %v220 = vmul.f32 %v216, %v216
    %v221 = vmul.f32 %v217, %v217
    %v222 = vmul.f32 %v218, %v218
    %v223 = vmul.f32 %v219, %v219
    %v224 = vsel %vm192, %v220, 0.0
    %225 = vadd.xlane.f32.xlu0 %v224
    %v226 = vpop.xlane.xlu0 %225
    %v227 = vsel %vm192, %v221, 0.0
    %228 = vadd.xlane.f32.xlu0 %v227
    %v229 = vpop.xlane.xlu0 %228
    %v230 = vsel %vm192, %v222, 0.0
    %231 = vadd.xlane.f32.xlu0 %v230
    %v232 = vpop.xlane.xlu0 %231
    %v233 = vsel %vm192, %v223, 0.0
    %234 = vadd.xlane.f32.xlu0 %v233
    %v235 = vpop.xlane.xlu0 %234
    %v236 = vmul.f32 %v226, %v211
    %v237 = vmul.f32 %v229, %v211
    %v238 = vmul.f32 %v232, %v211
    %v239 = vmul.f32 %v235, %v211
    %v240 = vadd.f32 %v236, 1e-05
    %v241 = vadd.f32 %v237, 1e-05
    %v242 = vadd.f32 %v238, 1e-05
    %v243 = vadd.f32 %v239, 1e-05
    %v244 = vrsqrt.pop %v240
    %v245 = vmul.f32 %v244, %v240
    %v246 = vmul.f32 %v245, %v244
    %v247 = vmul.f32 0.5, %v246
    %v248 = vsub.f32 1.5, %v247
    %v249 = vmul.f32 %v244, %v248
    %vm250 = vweird.f32 %v240
    %vm251 = vweird.f32 %v244
    %vm252 = vmor %vm250, %vm251
    %v253 = vsel %vm252, %v244, %v249
    %v254 = vrsqrt.pop %v241
    %v255 = vmul.f32 %v254, %v241
    %v256 = vmul.f32 %v255, %v254
    %v257 = vmul.f32 0.5, %v256
    %v258 = vsub.f32 1.5, %v257
    %v259 = vmul.f32 %v254, %v258
    %vm260 = vweird.f32 %v241
    %vm261 = vweird.f32 %v254
    %vm262 = vmor %vm260, %vm261
    %v263 = vsel %vm262, %v254, %v259
    %v264 = vrsqrt.pop %v242
    %v265 = vmul.f32 %v264, %v242
    %v266 = vmul.f32 %v265, %v264
    %v267 = vmul.f32 0.5, %v266
    %v268 = vsub.f32 1.5, %v267
    %v269 = vmul.f32 %v264, %v268
    %vm270 = vweird.f32 %v242
    %vm271 = vweird.f32 %v264
    %vm272 = vmor %vm270, %vm271
    %v273 = vsel %vm272, %v264, %v269
    %v274 = vrsqrt.pop %v243
    %v275 = vmul.f32 %v274, %v243
    %v276 = vmul.f32 %v275, %v274
    %v277 = vmul.f32 0.5, %v276
    %v278 = vsub.f32 1.5, %v277
    %v279 = vmul.f32 %v274, %v278
    %vm280 = vweird.f32 %v243
    %vm281 = vweird.f32 %v274
    %vm282 = vmor %vm280, %vm281
    %v283 = vsel %vm282, %v274, %v279
    %v284 = vmul.f32 %v216, %v253
    %v285 = vmul.f32 %v217, %v263
    %v286 = vmul.f32 %v218, %v273
    %v287 = vmul.f32 %v219, %v283
    %v288 = vperm.slane %v190, 0
    %v289 = vmul.f32 %v284, %v288
    %v290 = vmul.f32 %v285, %v288
    %v291 = vmul.f32 %v286, %v288
    %v292 = vmul.f32 %v287, %v288
    %v293 = vperm.slane %v191, 0
    %v294 = vadd.f32 %v289, %v293
    %v295 = vadd.f32 %v290, %v293
    %v296 = vadd.f32 %v291, %v293
    %v297 = vadd.f32 %v292, %v293
    %v298 = vld [vmem:[#allocation2 + $0x1e8] sm:$0x1]
    %v299 = vld [vmem:[#allocation2 + $0xd8] sm:$0xff]
    %v300 = vld [vmem:[#allocation2 + $0xe0] sm:$0xff]
    %v301 = vld [vmem:[#allocation2 + $0xe8] sm:$0xff]
    %v302 = vld [vmem:[#allocation2 + $0xf0] sm:$0xff]
    %v303 = vld [vmem:[#allocation2 + $0xf8] sm:$0x1]
    %v304 = vperm.slane %v303, 0
    %v306 = vsel %vm192, %v294, 0
    %v309 = vsel %vm192, %v295, 0
    %v312 = vsel %vm192, %v296, 0
    %v315 = vsel %vm192, %v297, 0
    %317 = vmatpush.msra.mxu0 0.0
    %318 = vmatpush.msra.mxu0 0.0
    %319 = vmatpush.msra.mxu0 0.0
    %320 = vmatpush.msra.mxu0 0.0
    %321 = vmatpush.msra.mxu0 0.0
    %322 = vmatpush.msra.mxu0 0.0
    %323 = vmatpush.msra.mxu0 0.0
    %324 = vmatpush.msra.mxu0 0.0
    %325 = vmatpush.msra.mxu0 0.0
    %326 = vmatpush.msra.mxu0 0.0
    %327 = vmatpush.msra.mxu0 0.0
    %328 = vmatpush.msra.mxu0 0.0
    %329 = vmatpush.msra.mxu0 %v302
    %330 = vmatpush.msra.mxu0 %v301
    %331 = vmatpush.msra.mxu0 %v300
    %332 = vmatpush.msra.mxu0 %v299
    %333 = vmatmul.f32.gmra.mxu0 %v306
    %v334 = vpop.f32.mrf.mxu0
    %v335 = vadd.f32 %v304, %v334
    %336 = vmatmul.f32.gmra.mxu0 %v309
    %v337 = vpop.f32.mrf.mxu0
    %v338 = vadd.f32 %v304, %v337
    %339 = vmatmul.f32.gmra.mxu0 %v312
    %v340 = vpop.f32.mrf.mxu0
    %v341 = vadd.f32 %v304, %v340
    %342 = vmatmul.f32.gmra.mxu0 %v315
    %v343 = vpop.f32.mrf.mxu0
    %v344 = vadd.f32 %v304, %v343
    %345 = vdwg.mxu0
    %v346 = vld [vmem:[#allocation2 + $0x100] sm:$0xff]
    %v347 = vld [vmem:[#allocation2 + $0x108] sm:$0xff]
    %v348 = vld [vmem:[#allocation2 + $0x110] sm:$0xff]
    %v349 = vld [vmem:[#allocation2 + $0x118] sm:$0xff]
    %v350 = vld [vmem:[#allocation2 + $0x120] sm:$0x1]
    %v351 = vperm.slane %v350, 0
    %352 = vmatpush.msra.mxu0 0.0
    %353 = vmatpush.msra.mxu0 0.0
    %354 = vmatpush.msra.mxu0 0.0
    %355 = vmatpush.msra.mxu0 0.0
    %356 = vmatpush.msra.mxu0 0.0
    %357 = vmatpush.msra.mxu0 0.0
    %358 = vmatpush.msra.mxu0 0.0
    %359 = vmatpush.msra.mxu0 0.0
    %360 = vmatpush.msra.mxu0 0.0
    %361 = vmatpush.msra.mxu0 0.0
    %362 = vmatpush.msra.mxu0 0.0
    %363 = vmatpush.msra.mxu0 0.0
    %364 = vmatpush.msra.mxu0 %v349
    %365 = vmatpush.msra.mxu0 %v348
    %366 = vmatpush.msra.mxu0 %v347
    %367 = vmatpush.msra.mxu0 %v346
    %368 = vmatmul.f32.gmra.mxu0 %v306
    %v369 = vpop.f32.mrf.mxu0
    %v370 = vadd.f32 %v351, %v369
    %371 = vmatmul.f32.gmra.mxu0 %v309
    %v372 = vpop.f32.mrf.mxu0
    %v373 = vadd.f32 %v351, %v372
    %374 = vmatmul.f32.gmra.mxu0 %v312
    %v375 = vpop.f32.mrf.mxu0
    %v376 = vadd.f32 %v351, %v375
    %377 = vmatmul.f32.gmra.mxu0 %v315
    %v378 = vpop.f32.mrf.mxu0
    %v379 = vadd.f32 %v351, %v378
    %380 = vdwg.mxu0
    %v381 = vld [vmem:[#allocation2 + $0x128] sm:$0xff]
    %v382 = vld [vmem:[#allocation2 + $0x130] sm:$0xff]
    %v383 = vld [vmem:[#allocation2 + $0x138] sm:$0xff]
    %v384 = vld [vmem:[#allocation2 + $0x140] sm:$0xff]
    %v385 = vld [vmem:[#allocation2 + $0x148] sm:$0x1]
    %v386 = vperm.slane %v385, 0
    %387 = vmatpush.msra.mxu0 0.0
    %388 = vmatpush.msra.mxu0 0.0
    %389 = vmatpush.msra.mxu0 0.0
    %390 = vmatpush.msra.mxu0 0.0
    %391 = vmatpush.msra.mxu0 0.0
    %392 = vmatpush.msra.mxu0 0.0
    %393 = vmatpush.msra.mxu0 0.0
    %394 = vmatpush.msra.mxu0 0.0
    %395 = vmatpush.msra.mxu0 0.0
    %396 = vmatpush.msra.mxu0 0.0
    %397 = vmatpush.msra.mxu0 0.0
    %398 = vmatpush.msra.mxu0 0.0
    %399 = vmatpush.msra.mxu0 %v384
    %400 = vmatpush.msra.mxu0 %v383
    %401 = vmatpush.msra.mxu0 %v382
    %402 = vmatpush.msra.mxu0 %v381
    %403 = vmatmul.f32.gmra.mxu0 %v306
    %v404 = vpop.f32.mrf.mxu0
    %v405 = vadd.f32 %v386, %v404
    %406 = vmatmul.f32.gmra.mxu0 %v309
    %v407 = vpop.f32.mrf.mxu0
    %v408 = vadd.f32 %v386, %v407
    %409 = vmatmul.f32.gmra.mxu0 %v312
    %v410 = vpop.f32.mrf.mxu0
    %v411 = vadd.f32 %v386, %v410
    %412 = vmatmul.f32.gmra.mxu0 %v315
    %v413 = vpop.f32.mrf.mxu0
    %v414 = vadd.f32 %v386, %v413
    %415 = vdwg.mxu0
    %vm416 = vcmask 130048
    %v418 = vsel %vm416, %v335, 0
    %v421 = vsel %vm416, %v338, 0
    %v424 = vsel %vm416, %v341, 0
    %v427 = vsel %vm416, %v344, 0
    %v430 = vsel %vm416, %v370, 0
    %v433 = vsel %vm416, %v373, 0
    %v436 = vsel %vm416, %v376, 0
    %v439 = vsel %vm416, %v379, 0
    %441 = vmatpush.xpose.msra.mxu0 0.0
    %442 = vmatpush.xpose.msra.mxu0 0.0
    %443 = vmatpush.xpose.msra.mxu0 0.0
    %444 = vmatpush.xpose.msra.mxu0 0.0
    %445 = vmatpush.xpose.msra.mxu0 0.0
    %446 = vmatpush.xpose.msra.mxu0 0.0
    %447 = vmatpush.xpose.msra.mxu0 0.0
    %448 = vmatpush.xpose.msra.mxu0 0.0
    %449 = vmatpush.xpose.msra.mxu0 0.0
    %450 = vmatpush.xpose.msra.mxu0 0.0
    %451 = vmatpush.xpose.msra.mxu0 0.0
    %452 = vmatpush.xpose.msra.mxu0 0.0
    %453 = vmatpush.xpose.msra.mxu0 %v439
    %454 = vmatpush.xpose.msra.mxu0 %v436
    %455 = vmatpush.xpose.msra.mxu0 %v433
    %456 = vmatpush.xpose.msra.mxu0 %v430
    %457 = vmatmul.f32.gmra.mxu0 %v418
    %v458 = vpop.f32.mrf.mxu0
    %v459 = vadd.f32 0.0, %v458
    %460 = vmatmul.f32.gmra.mxu0 %v421
    %v461 = vpop.f32.mrf.mxu0
    %v462 = vadd.f32 0.0, %v461
    %463 = vmatmul.f32.gmra.mxu0 %v424
    %v464 = vpop.f32.mrf.mxu0
    %v465 = vadd.f32 0.0, %v464
    %466 = vmatmul.f32.gmra.mxu0 %v427
    %v467 = vpop.f32.mrf.mxu0
    %v468 = vadd.f32 0.0, %v467
    %469 = vdwg.mxu0
    %v470 = vmul.f32 %v459, 0.25
    %v471 = vmul.f32 %v462, 0.25
    %v472 = vmul.f32 %v465, 0.25
    %v473 = vmul.f32 %v468, 0.25
    %v474 = vadd.f32 %v470, %v186
    %v475 = vadd.f32 %v471, %v187
    %v476 = vadd.f32 %v472, %v188
    %v477 = vadd.f32 %v473, %v189
    %v478 = vsel %vm192, %v474, -inf
    %479 = vmax.xlane.f32.xlu0 %v478
    %v480 = vpop.xlane.xlu0 %479
    %v481 = vsel %vm192, %v475, -inf
    %482 = vmax.xlane.f32.xlu0 %v481
    %v483 = vpop.xlane.xlu0 %482
    %v484 = vsel %vm192, %v476, -inf
    %485 = vmax.xlane.f32.xlu0 %v484
    %v486 = vpop.xlane.xlu0 %485
    %v487 = vsel %vm192, %v477, -inf
    %488 = vmax.xlane.f32.xlu0 %v487
    %v489 = vpop.xlane.xlu0 %488
    %v490 = vsub.f32 %v474, %v480
    %v491 = vsub.f32 %v475, %v483
    %v492 = vsub.f32 %v476, %v486
    %v493 = vsub.f32 %v477, %v489
    %v494 = vmul.f32 %v490, 1.442695
    %v495 = vpow.pop %v494
    %v496 = vmul.f32 %v491, 1.442695
    %v497 = vpow.pop %v496
    %v498 = vmul.f32 %v492, 1.442695
    %v499 = vpow.pop %v498
    %v500 = vmul.f32 %v493, 1.442695
    %v501 = vpow.pop %v500
    %v502 = vsel %vm192, %v495, 0.0
    %503 = vadd.xlane.f32.xlu0 %v502
    %v504 = vpop.xlane.xlu0 %503
    %v505 = vsel %vm192, %v497, 0.0
    %506 = vadd.xlane.f32.xlu0 %v505
    %v507 = vpop.xlane.xlu0 %506
    %v508 = vsel %vm192, %v499, 0.0
    %509 = vadd.xlane.f32.xlu0 %v508
    %v510 = vpop.xlane.xlu0 %509
    %v511 = vsel %vm192, %v501, 0.0
    %512 = vadd.xlane.f32.xlu0 %v511
    %v513 = vpop.xlane.xlu0 %512
    %v514 = vrcp.pop %v504
    %v515 = vrcp.pop %v507
    %v516 = vrcp.pop %v510
    %v517 = vrcp.pop %v513
    %v518 = vmul.f32 %v495, %v514
    %v519 = vmul.f32 %v497, %v515
    %v520 = vmul.f32 %v499, %v516
    %v521 = vmul.f32 %v501, %v517
    %v523 = vsel %vm192, %v518, 0
    %v526 = vsel %vm192, %v519, 0
    %v529 = vsel %vm192, %v520, 0
    %v532 = vsel %vm192, %v521, 0
    %534 = vmatpush.msra.mxu0 0.0
    %535 = vmatpush.msra.mxu0 0.0
    %536 = vmatpush.msra.mxu0 0.0
    %537 = vmatpush.msra.mxu0 0.0
    %538 = vmatpush.msra.mxu0 0.0
    %539 = vmatpush.msra.mxu0 0.0
    %540 = vmatpush.msra.mxu0 0.0
    %541 = vmatpush.msra.mxu0 0.0
    %542 = vmatpush.msra.mxu0 0.0
    %543 = vmatpush.msra.mxu0 0.0
    %544 = vmatpush.msra.mxu0 0.0
    %545 = vmatpush.msra.mxu0 0.0
    %546 = vmatpush.msra.mxu0 %v414
    %547 = vmatpush.msra.mxu0 %v411
    %548 = vmatpush.msra.mxu0 %v408
    %549 = vmatpush.msra.mxu0 %v405
    %550 = vmatmul.f32.gmra.mxu0 %v523
    %v551 = vpop.f32.mrf.mxu0
    %v552 = vadd.f32 0.0, %v551
    %553 = vmatmul.f32.gmra.mxu0 %v526
    %v554 = vpop.f32.mrf.mxu0
    %v555 = vadd.f32 0.0, %v554
    %556 = vmatmul.f32.gmra.mxu0 %v529
    %v557 = vpop.f32.mrf.mxu0
    %v558 = vadd.f32 0.0, %v557
    %559 = vmatmul.f32.gmra.mxu0 %v532
    %v560 = vpop.f32.mrf.mxu0
    %v561 = vadd.f32 0.0, %v560
    %562 = vdwg.mxu0
    %v563 = vld [vmem:[#allocation2 + $0x150] sm:$0xff]
    %v564 = vld [vmem:[#allocation2 + $0x158] sm:$0xff]
    %v566 = vsel %vm416, %v552, 0
    %v569 = vsel %vm416, %v555, 0
    %v572 = vsel %vm416, %v558, 0
    %v575 = vsel %vm416, %v561, 0
    %577 = vmatpush.msra.mxu0 0.0
    %578 = vmatpush.msra.mxu0 0.0
    %579 = vmatpush.msra.mxu0 0.0
    %580 = vmatpush.msra.mxu0 0.0
    %581 = vmatpush.msra.mxu0 0.0
    %582 = vmatpush.msra.mxu0 0.0
    %583 = vmatpush.msra.mxu0 0.0
    %584 = vmatpush.msra.mxu0 0.0
    %585 = vmatpush.msra.mxu0 0.0
    %586 = vmatpush.msra.mxu0 0.0
    %587 = vmatpush.msra.mxu0 0.0
    %588 = vmatpush.msra.mxu0 0.0
    %589 = vmatpush.msra.mxu0 0.0
    %590 = vmatpush.msra.mxu0 0.0
    %591 = vmatpush.msra.mxu0 %v564
    %592 = vmatpush.msra.mxu0 %v563
    %593 = vmatmul.f32.gmra.mxu0 %v566
    %v594 = vpop.f32.mrf.mxu0
    %v595 = vadd.f32 0.0, %v594
    %596 = vmatmul.f32.gmra.mxu0 %v569
    %v597 = vpop.f32.mrf.mxu0
    %v598 = vadd.f32 0.0, %v597
    %599 = vmatmul.f32.gmra.mxu0 %v572
    %v600 = vpop.f32.mrf.mxu0
    %v601 = vadd.f32 0.0, %v600
    %602 = vmatmul.f32.gmra.mxu0 %v575
    %v603 = vpop.f32.mrf.mxu0
    %v604 = vadd.f32 0.0, %v603
    %605 = vdwg.mxu0
    %v606 = vperm.slane %v298, 0
    %v607 = vadd.f32 %v606, %v595
    %v608 = vadd.f32 %v606, %v598
    %v609 = vadd.f32 %v606, %v601
    %v610 = vadd.f32 %v606, %v604
    %v611 = vld [vmem:[#allocation2 + $0x160] sm:$0xff]
    %v612 = vld [vmem:[#allocation2 + $0x168] sm:$0xff]
    %v613 = vld [vmem:[#allocation2 + $0x170] sm:$0xff]
    %v614 = vld [vmem:[#allocation2 + $0x178] sm:$0xff]
    %v615 = vld [vmem:[#allocation2 + $0x180] sm:$0x1]
    %v616 = vperm.slane %v615, 0
    %617 = vmatpush.msra.mxu0 0.0
    %618 = vmatpush.msra.mxu0 0.0
    %619 = vmatpush.msra.mxu0 0.0
    %620 = vmatpush.msra.mxu0 0.0
    %621 = vmatpush.msra.mxu0 0.0
    %622 = vmatpush.msra.mxu0 0.0
    %623 = vmatpush.msra.mxu0 0.0
    %624 = vmatpush.msra.mxu0 0.0
    %625 = vmatpush.msra.mxu0 0.0
    %626 = vmatpush.msra.mxu0 0.0
    %627 = vmatpush.msra.mxu0 0.0
    %628 = vmatpush.msra.mxu0 0.0
    %629 = vmatpush.msra.mxu0 %v614
    %630 = vmatpush.msra.mxu0 %v613
    %631 = vmatpush.msra.mxu0 %v612
    %632 = vmatpush.msra.mxu0 %v611
    %633 = vmatmul.f32.gmra.mxu0 %v306
    %v634 = vpop.f32.mrf.mxu0
    %v635 = vadd.f32 %v616, %v634
    %636 = vmatmul.f32.gmra.mxu0 %v309
    %v637 = vpop.f32.mrf.mxu0
    %v638 = vadd.f32 %v616, %v637
    %639 = vmatmul.f32.gmra.mxu0 %v312
    %v640 = vpop.f32.mrf.mxu0
    %v641 = vadd.f32 %v616, %v640
    %642 = vmatmul.f32.gmra.mxu0 %v315
    %v643 = vpop.f32.mrf.mxu0
    %v644 = vadd.f32 %v616, %v643
    %645 = vdwg.mxu0
    %v646 = vld [vmem:[#allocation2 + $0x188] sm:$0xff]
    %v647 = vld [vmem:[#allocation2 + $0x190] sm:$0xff]
    %v648 = vld [vmem:[#allocation2 + $0x198] sm:$0xff]
    %v649 = vld [vmem:[#allocation2 + $0x1a0] sm:$0xff]
    %v650 = vld [vmem:[#allocation2 + $0x1a8] sm:$0x1]
    %v651 = vperm.slane %v650, 0
    %652 = vmatpush.msra.mxu0 0.0
    %653 = vmatpush.msra.mxu0 0.0
    %654 = vmatpush.msra.mxu0 0.0
    %655 = vmatpush.msra.mxu0 0.0
    %656 = vmatpush.msra.mxu0 0.0
    %657 = vmatpush.msra.mxu0 0.0
    %658 = vmatpush.msra.mxu0 0.0
    %659 = vmatpush.msra.mxu0 0.0
    %660 = vmatpush.msra.mxu0 0.0
    %661 = vmatpush.msra.mxu0 0.0
    %662 = vmatpush.msra.mxu0 0.0
    %663 = vmatpush.msra.mxu0 0.0
    %664 = vmatpush.msra.mxu0 %v649
    %665 = vmatpush.msra.mxu0 %v648
    %666 = vmatpush.msra.mxu0 %v647
    %667 = vmatpush.msra.mxu0 %v646
    %668 = vmatmul.f32.gmra.mxu0 %v306
    %v669 = vpop.f32.mrf.mxu0
    %v670 = vadd.f32 %v651, %v669
    %671 = vmatmul.f32.gmra.mxu0 %v309
    %v672 = vpop.f32.mrf.mxu0
    %v673 = vadd.f32 %v651, %v672
    %674 = vmatmul.f32.gmra.mxu0 %v312
    %v675 = vpop.f32.mrf.mxu0
    %v676 = vadd.f32 %v651, %v675
    %677 = vmatmul.f32.gmra.mxu0 %v315
    %v678 = vpop.f32.mrf.mxu0
    %v679 = vadd.f32 %v651, %v678
    %680 = vdwg.mxu0
    %v681 = vld [vmem:[#allocation2 + $0x1b0] sm:$0xff]
    %v682 = vld [vmem:[#allocation2 + $0x1b8] sm:$0xff]
    %v683 = vld [vmem:[#allocation2 + $0x1c0] sm:$0xff]
    %v684 = vld [vmem:[#allocation2 + $0x1c8] sm:$0xff]
    %v685 = vld [vmem:[#allocation2 + $0x1d0] sm:$0x1]
    %v686 = vperm.slane %v685, 0
    %687 = vmatpush.msra.mxu0 0.0
    %688 = vmatpush.msra.mxu0 0.0
    %689 = vmatpush.msra.mxu0 0.0
    %690 = vmatpush.msra.mxu0 0.0
    %691 = vmatpush.msra.mxu0 0.0
    %692 = vmatpush.msra.mxu0 0.0
    %693 = vmatpush.msra.mxu0 0.0
    %694 = vmatpush.msra.mxu0 0.0
    %695 = vmatpush.msra.mxu0 0.0
    %696 = vmatpush.msra.mxu0 0.0
    %697 = vmatpush.msra.mxu0 0.0
    %698 = vmatpush.msra.mxu0 0.0
    %699 = vmatpush.msra.mxu0 %v684
    %700 = vmatpush.msra.mxu0 %v683
    %701 = vmatpush.msra.mxu0 %v682
    %702 = vmatpush.msra.mxu0 %v681
    %703 = vmatmul.f32.gmra.mxu0 %v306
    %v704 = vpop.f32.mrf.mxu0
    %v705 = vadd.f32 %v686, %v704
    %706 = vmatmul.f32.gmra.mxu0 %v309
    %v707 = vpop.f32.mrf.mxu0
    %v708 = vadd.f32 %v686, %v707
    %709 = vmatmul.f32.gmra.mxu0 %v312
    %v710 = vpop.f32.mrf.mxu0
    %v711 = vadd.f32 %v686, %v710
    %712 = vmatmul.f32.gmra.mxu0 %v315
    %v713 = vpop.f32.mrf.mxu0
    %v714 = vadd.f32 %v686, %v713
    %715 = vdwg.mxu0
    %v717 = vsel %vm416, %v635, 0
    %v720 = vsel %vm416, %v638, 0
    %v723 = vsel %vm416, %v641, 0
    %v726 = vsel %vm416, %v644, 0
    %v729 = vsel %vm416, %v670, 0
    %v732 = vsel %vm416, %v673, 0
    %v735 = vsel %vm416, %v676, 0
    %v738 = vsel %vm416, %v679, 0
    %740 = vmatpush.xpose.msra.mxu0 0.0
    %741 = vmatpush.xpose.msra.mxu0 0.0
    %742 = vmatpush.xpose.msra.mxu0 0.0
    %743 = vmatpush.xpose.msra.mxu0 0.0
    %744 = vmatpush.xpose.msra.mxu0 0.0
    %745 = vmatpush.xpose.msra.mxu0 0.0
    %746 = vmatpush.xpose.msra.mxu0 0.0
    %747 = vmatpush.xpose.msra.mxu0 0.0
    %748 = vmatpush.xpose.msra.mxu0 0.0
    %749 = vmatpush.xpose.msra.mxu0 0.0
    %750 = vmatpush.xpose.msra.mxu0 0.0
    %751 = vmatpush.xpose.msra.mxu0 0.0
    %752 = vmatpush.xpose.msra.mxu0 %v738
    %753 = vmatpush.xpose.msra.mxu0 %v735
    %754 = vmatpush.xpose.msra.mxu0 %v732
    %755 = vmatpush.xpose.msra.mxu0 %v729
    %756 = vmatmul.f32.gmra.mxu0 %v717
    %v757 = vpop.f32.mrf.mxu0
    %v758 = vadd.f32 0.0, %v757
    %759 = vmatmul.f32.gmra.mxu0 %v720
    %v760 = vpop.f32.mrf.mxu0
    %v761 = vadd.f32 0.0, %v760
    %762 = vmatmul.f32.gmra.mxu0 %v723
    %v763 = vpop.f32.mrf.mxu0
    %v764 = vadd.f32 0.0, %v763
    %765 = vmatmul.f32.gmra.mxu0 %v726
    %v766 = vpop.f32.mrf.mxu0
    %v767 = vadd.f32 0.0, %v766
    %768 = vdwg.mxu0
    %v769 = vmul.f32 %v758, 0.25
    %v770 = vmul.f32 %v761, 0.25
    %v771 = vmul.f32 %v764, 0.25
    %v772 = vmul.f32 %v767, 0.25
    %v773 = vadd.f32 %v769, %v186
    %v774 = vadd.f32 %v770, %v187
    %v775 = vadd.f32 %v771, %v188
    %v776 = vadd.f32 %v772, %v189
    %v777 = vsel %vm192, %v773, -inf
    %778 = vmax.xlane.f32.xlu0 %v777
    %v779 = vpop.xlane.xlu0 %778
    %v780 = vsel %vm192, %v774, -inf
    %781 = vmax.xlane.f32.xlu0 %v780
    %v782 = vpop.xlane.xlu0 %781
    %v783 = vsel %vm192, %v775, -inf
    %784 = vmax.xlane.f32.xlu0 %v783
    %v785 = vpop.xlane.xlu0 %784
    %v786 = vsel %vm192, %v776, -inf
    %787 = vmax.xlane.f32.xlu0 %v786
    %v788 = vpop.xlane.xlu0 %787
    %v789 = vsub.f32 %v773, %v779
    %v790 = vsub.f32 %v774, %v782
    %v791 = vsub.f32 %v775, %v785
    %v792 = vsub.f32 %v776, %v788
    %v793 = vmul.f32 %v789, 1.442695
    %v794 = vpow.pop %v793
    %v795 = vmul.f32 %v790, 1.442695
    %v796 = vpow.pop %v795
    %v797 = vmul.f32 %v791, 1.442695
    %v798 = vpow.pop %v797
    %v799 = vmul.f32 %v792, 1.442695
    %v800 = vpow.pop %v799
    %v801 = vsel %vm192, %v794, 0.0
    %802 = vadd.xlane.f32.xlu0 %v801
    %v803 = vpop.xlane.xlu0 %802
    %v804 = vsel %vm192, %v796, 0.0
    %805 = vadd.xlane.f32.xlu0 %v804
    %v806 = vpop.xlane.xlu0 %805
    %v807 = vsel %vm192, %v798, 0.0
    %808 = vadd.xlane.f32.xlu0 %v807
    %v809 = vpop.xlane.xlu0 %808
    %v810 = vsel %vm192, %v800, 0.0
    %811 = vadd.xlane.f32.xlu0 %v810
    %v812 = vpop.xlane.xlu0 %811
    %v813 = vrcp.pop %v803
    %v814 = vrcp.pop %v806
    %v815 = vrcp.pop %v809
    %v816 = vrcp.pop %v812
    %v817 = vmul.f32 %v794, %v813
    %v818 = vmul.f32 %v796, %v814
    %v819 = vmul.f32 %v798, %v815
    %v820 = vmul.f32 %v800, %v816
    %v822 = vsel %vm192, %v817, 0
    %v825 = vsel %vm192, %v818, 0
    %v828 = vsel %vm192, %v819, 0
    %v831 = vsel %vm192, %v820, 0
    %833 = vmatpush.msra.mxu0 0.0
    %834 = vmatpush.msra.mxu0 0.0
    %835 = vmatpush.msra.mxu0 0.0
    %836 = vmatpush.msra.mxu0 0.0
    %837 = vmatpush.msra.mxu0 0.0
    %838 = vmatpush.msra.mxu0 0.0
    %839 = vmatpush.msra.mxu0 0.0
    %840 = vmatpush.msra.mxu0 0.0
    %841 = vmatpush.msra.mxu0 0.0
    %842 = vmatpush.msra.mxu0 0.0
    %843 = vmatpush.msra.mxu0 0.0
    %844 = vmatpush.msra.mxu0 0.0
    %845 = vmatpush.msra.mxu0 %v714
    %846 = vmatpush.msra.mxu0 %v711
    %847 = vmatpush.msra.mxu0 %v708
    %848 = vmatpush.msra.mxu0 %v705
    %849 = vmatmul.f32.gmra.mxu0 %v822
    %v850 = vpop.f32.mrf.mxu0
    %v851 = vadd.f32 0.0, %v850
    %852 = vmatmul.f32.gmra.mxu0 %v825
    %v853 = vpop.f32.mrf.mxu0
    %v854 = vadd.f32 0.0, %v853
    %855 = vmatmul.f32.gmra.mxu0 %v828
    %v856 = vpop.f32.mrf.mxu0
    %v857 = vadd.f32 0.0, %v856
    %858 = vmatmul.f32.gmra.mxu0 %v831
    %v859 = vpop.f32.mrf.mxu0
    %v860 = vadd.f32 0.0, %v859
    %861 = vdwg.mxu0
    %v862 = vld [vmem:[#allocation2 + $0x1d8] sm:$0xff]
    %v863 = vld [vmem:[#allocation2 + $0x1e0] sm:$0xff]
    %v865 = vsel %vm416, %v851, 0
    %v868 = vsel %vm416, %v854, 0
    %v871 = vsel %vm416, %v857, 0
    %v874 = vsel %vm416, %v860, 0
    %876 = vmatpush.msra.mxu0 0.0
    %877 = vmatpush.msra.mxu0 0.0
    %878 = vmatpush.msra.mxu0 0.0
    %879 = vmatpush.msra.mxu0 0.0
    %880 = vmatpush.msra.mxu0 0.0
    %881 = vmatpush.msra.mxu0 0.0
    %882 = vmatpush.msra.mxu0 0.0
    %883 = vmatpush.msra.mxu0 0.0
    %884 = vmatpush.msra.mxu0 0.0
    %885 = vmatpush.msra.mxu0 0.0
    %886 = vmatpush.msra.mxu0 0.0
    %887 = vmatpush.msra.mxu0 0.0
    %888 = vmatpush.msra.mxu0 0.0
    %889 = vmatpush.msra.mxu0 0.0
    %890 = vmatpush.msra.mxu0 %v863
    %891 = vmatpush.msra.mxu0 %v862
    %892 = vmatmul.f32.gmra.mxu0 %v865
    %v893 = vpop.f32.mrf.mxu0
    %v894 = vadd.f32 0.0, %v893
    %895 = vmatmul.f32.gmra.mxu0 %v868
    %v896 = vpop.f32.mrf.mxu0
    %v897 = vadd.f32 0.0, %v896
    %898 = vmatmul.f32.gmra.mxu0 %v871
    %v899 = vpop.f32.mrf.mxu0
    %v900 = vadd.f32 0.0, %v899
    %901 = vmatmul.f32.gmra.mxu0 %v874
    %v902 = vpop.f32.mrf.mxu0
    %v903 = vadd.f32 0.0, %v902
    %904 = vdwg.mxu0
    %v905 = vadd.f32 %v607, %v894
    %v906 = vadd.f32 %v608, %v897
    %v907 = vadd.f32 %v609, %v900
    %v908 = vadd.f32 %v610, %v903
    %v909 = vadd.f32 %v182, %v905
    %v910 = vadd.f32 %v183, %v906
    %v911 = vadd.f32 %v184, %v907
    %v912 = vadd.f32 %v185, %v908
    %v913 = vld [vmem:[#allocation2 + $0x1f0] sm:$0x1]
    %v914 = vld [vmem:[#allocation2 + $0x1f8] sm:$0x1]
    %v915 = vsel %vm192, %v909, 0.0
    %916 = vadd.xlane.f32.xlu0 %v915
    %v917 = vpop.xlane.xlu0 %916
    %v918 = vsel %vm192, %v910, 0.0
    %919 = vadd.xlane.f32.xlu0 %v918
    %v920 = vpop.xlane.xlu0 %919
    %v921 = vsel %vm192, %v911, 0.0
    %922 = vadd.xlane.f32.xlu0 %v921
    %v923 = vpop.xlane.xlu0 %922
    %v924 = vsel %vm192, %v912, 0.0
    %925 = vadd.xlane.f32.xlu0 %v924
    %v926 = vpop.xlane.xlu0 %925
    %v927 = vmul.f32 %v917, %v211
    %v928 = vmul.f32 %v920, %v211
    %v929 = vmul.f32 %v923, %v211
    %v930 = vmul.f32 %v926, %v211
    %v931 = vsub.f32 %v909, %v927
    %v932 = vsub.f32 %v910, %v928
    %v933 = vsub.f32 %v911, %v929
    %v934 = vsub.f32 %v912, %v930
    %v935 = vmul.f32 %v931, %v931
    %v936 = vmul.f32 %v932, %v932
    %v937 = vmul.f32 %v933, %v933
    %v938 = vmul.f32 %v934, %v934
    %v939 = vsel %vm192, %v935, 0.0
    %940 = vadd.xlane.f32.xlu0 %v939
    %v941 = vpop.xlane.xlu0 %940
    %v942 = vsel %vm192, %v936, 0.0
    %943 = vadd.xlane.f32.xlu0 %v942
    %v944 = vpop.xlane.xlu0 %943
    %v945 = vsel %vm192, %v937, 0.0
    %946 = vadd.xlane.f32.xlu0 %v945
    %v947 = vpop.xlane.xlu0 %946
    %v948 = vsel %vm192, %v938, 0.0
    %949 = vadd.xlane.f32.xlu0 %v948
    %v950 = vpop.xlane.xlu0 %949
    %v951 = vmul.f32 %v941, %v211
    %v952 = vmul.f32 %v944, %v211
    %v953 = vmul.f32 %v947, %v211
    %v954 = vmul.f32 %v950, %v211
    %v955 = vadd.f32 %v951, 1e-05
    %v956 = vadd.f32 %v952, 1e-05
    %v957 = vadd.f32 %v953, 1e-05
    %v958 = vadd.f32 %v954, 1e-05
    %v959 = vrsqrt.pop %v955
    %v960 = vmul.f32 %v959, %v955
    %v961 = vmul.f32 %v960, %v959
    %v962 = vmul.f32 0.5, %v961
    %v963 = vsub.f32 1.5, %v962
    %v964 = vmul.f32 %v959, %v963
    %vm965 = vweird.f32 %v955
    %vm966 = vweird.f32 %v959
    %vm967 = vmor %vm965, %vm966
    %v968 = vsel %vm967, %v959, %v964
    %v969 = vrsqrt.pop %v956
    %v970 = vmul.f32 %v969, %v956
    %v971 = vmul.f32 %v970, %v969
    %v972 = vmul.f32 0.5, %v971
    %v973 = vsub.f32 1.5, %v972
    %v974 = vmul.f32 %v969, %v973
    %vm975 = vweird.f32 %v956
    %vm976 = vweird.f32 %v969
    %vm977 = vmor %vm975, %vm976
    %v978 = vsel %vm977, %v969, %v974
    %v979 = vrsqrt.pop %v957
    %v980 = vmul.f32 %v979, %v957
    %v981 = vmul.f32 %v980, %v979
    %v982 = vmul.f32 0.5, %v981
    %v983 = vsub.f32 1.5, %v982
    %v984 = vmul.f32 %v979, %v983
    %vm985 = vweird.f32 %v957
    %vm986 = vweird.f32 %v979
    %vm987 = vmor %vm985, %vm986
    %v988 = vsel %vm987, %v979, %v984
    %v989 = vrsqrt.pop %v958
    %v990 = vmul.f32 %v989, %v958
    %v991 = vmul.f32 %v990, %v989
    %v992 = vmul.f32 0.5, %v991
    %v993 = vsub.f32 1.5, %v992
    %v994 = vmul.f32 %v989, %v993
    %vm995 = vweird.f32 %v958
    %vm996 = vweird.f32 %v989
    %vm997 = vmor %vm995, %vm996
    %v998 = vsel %vm997, %v989, %v994
    %v999 = vmul.f32 %v931, %v968
    %v1000 = vmul.f32 %v932, %v978
    %v1001 = vmul.f32 %v933, %v988
    %v1002 = vmul.f32 %v934, %v998
    %v1003 = vperm.slane %v913, 0
    %v1004 = vmul.f32 %v999, %v1003
    %v1005 = vmul.f32 %v1000, %v1003
    %v1006 = vmul.f32 %v1001, %v1003
    %v1007 = vmul.f32 %v1002, %v1003
    %v1008 = vperm.slane %v914, 0
    %v1009 = vadd.f32 %v1004, %v1008
    %v1010 = vadd.f32 %v1005, %v1008
    %v1011 = vadd.f32 %v1006, %v1008
    %v1012 = vadd.f32 %v1007, %v1008
    %v1013 = vld [vmem:[#allocation2 + $0x200] sm:$0xff]
    %v1014 = vld [vmem:[#allocation2 + $0x208] sm:$0xff]
    %v1015 = vld [vmem:[#allocation2 + $0x210] sm:$0xff]
    %v1016 = vld [vmem:[#allocation2 + $0x218] sm:$0xff]
    %v1017 = vld [vmem:[#allocation2 + $0x220] sm:$0x1]
    %v1018 = vperm.slane %v1017, 0
    %v1020 = vsel %vm192, %v1009, 0
    %v1023 = vsel %vm192, %v1010, 0
    %v1026 = vsel %vm192, %v1011, 0
    %v1029 = vsel %vm192, %v1012, 0
    %1031 = vmatpush.msra.mxu0 0.0
    %1032 = vmatpush.msra.mxu0 0.0
    %1033 = vmatpush.msra.mxu0 0.0
    %1034 = vmatpush.msra.mxu0 0.0
    %1035 = vmatpush.msra.mxu0 0.0
    %1036 = vmatpush.msra.mxu0 0.0
    %1037 = vmatpush.msra.mxu0 0.0
    %1038 = vmatpush.msra.mxu0 0.0
    %1039 = vmatpush.msra.mxu0 0.0
    %1040 = vmatpush.msra.mxu0 0.0
    %1041 = vmatpush.msra.mxu0 0.0
    %1042 = vmatpush.msra.mxu0 0.0
    %1043 = vmatpush.msra.mxu0 %v1016
    %1044 = vmatpush.msra.mxu0 %v1015
    %1045 = vmatpush.msra.mxu0 %v1014
    %1046 = vmatpush.msra.mxu0 %v1013
    %1047 = vmatmul.f32.gmra.mxu0 %v1020
    %v1048 = vpop.f32.mrf.mxu0
    %v1049 = vadd.f32 %v1018, %v1048
    %1050 = vmatmul.f32.gmra.mxu0 %v1023
    %v1051 = vpop.f32.mrf.mxu0
    %v1052 = vadd.f32 %v1018, %v1051
    %1053 = vmatmul.f32.gmra.mxu0 %v1026
    %v1054 = vpop.f32.mrf.mxu0
    %v1055 = vadd.f32 %v1018, %v1054
    %1056 = vmatmul.f32.gmra.mxu0 %v1029
    %v1057 = vpop.f32.mrf.mxu0
    %v1058 = vadd.f32 %v1018, %v1057
    %1059 = vdwg.mxu0
    %v1060 = vmul.f32 %v1049, %v1049
    %v1061 = vmul.f32 %v1052, %v1052
    %v1062 = vmul.f32 %v1055, %v1055
    %v1063 = vmul.f32 %v1058, %v1058
    %v1064 = vmul.f32 %v1049, %v1060
    %v1065 = vmul.f32 %v1052, %v1061
    %v1066 = vmul.f32 %v1055, %v1062
    %v1067 = vmul.f32 %v1058, %v1063
    %v1068 = vmul.f32 %v1064, 0.044715
    %v1069 = vmul.f32 %v1065, 0.044715
    %v1070 = vmul.f32 %v1066, 0.044715
    %v1071 = vmul.f32 %v1067, 0.044715
    %v1072 = vadd.f32 %v1049, %v1068
    %v1073 = vadd.f32 %v1052, %v1069
    %v1074 = vadd.f32 %v1055, %v1070
    %v1075 = vadd.f32 %v1058, %v1071
    %v1076 = vmul.f32 %v1072, 0.7978846
    %v1077 = vmul.f32 %v1073, 0.7978846
    %v1078 = vmul.f32 %v1074, 0.7978846
    %v1079 = vmul.f32 %v1075, 0.7978846
    %v1080 = vtanh.pop %v1076
    %v1081 = vtanh.pop %v1077
    %v1082 = vtanh.pop %v1078
    %v1083 = vtanh.pop %v1079
    %v1084 = vadd.f32 %v1080, 1.0
    %v1085 = vadd.f32 %v1081, 1.0
    %v1086 = vadd.f32 %v1082, 1.0
    %v1087 = vadd.f32 %v1083, 1.0
    %v1088 = vmul.f32 %v1084, 0.5
    %v1089 = vmul.f32 %v1085, 0.5
    %v1090 = vmul.f32 %v1086, 0.5
    %v1091 = vmul.f32 %v1087, 0.5
    %v1092 = vmul.f32 %v1049, %v1088
    %v1093 = vmul.f32 %v1052, %v1089
    %v1094 = vmul.f32 %v1055, %v1090
    %v1095 = vmul.f32 %v1058, %v1091
    %v1096 = vld [vmem:[#allocation2 + $0x228] sm:$0xff]
    %v1097 = vld [vmem:[#allocation2 + $0x230] sm:$0xff]
    %v1098 = vld [vmem:[#allocation2 + $0x238] sm:$0xff]
    %v1099 = vld [vmem:[#allocation2 + $0x240] sm:$0xff]
    %v1100 = vld [vmem:[#allocation2 + $0x248] sm:$0xff]
    %v1101 = vld [vmem:[#allocation2 + $0x250] sm:$0xff]
    %v1102 = vld [vmem:[#allocation2 + $0x258] sm:$0xff]
    %v1103 = vld [vmem:[#allocation2 + $0x260] sm:$0xff]
    %v1104 = vld [vmem:[#allocation2 + $0x268] sm:$0x1]
    %v1105 = vperm.slane %v1104, 0
    %vm1106 = vcmask 523264
    %v1108 = vsel %vm1106, %v1092, 0
    %v1111 = vsel %vm1106, %v1093, 0
    %v1114 = vsel %vm1106, %v1094, 0
    %v1117 = vsel %vm1106, %v1095, 0
    %1119 = vmatpush.msra.mxu0 0.0
    %1120 = vmatpush.msra.mxu0 0.0
    %1121 = vmatpush.msra.mxu0 0.0
    %1122 = vmatpush.msra.mxu0 0.0
    %1123 = vmatpush.msra.mxu0 0.0
    %1124 = vmatpush.msra.mxu0 0.0
    %1125 = vmatpush.msra.mxu0 0.0
    %1126 = vmatpush.msra.mxu0 0.0
    %1127 = vmatpush.msra.mxu0 %v1103
    %1128 = vmatpush.msra.mxu0 %v1102
    %1129 = vmatpush.msra.mxu0 %v1101
    %1130 = vmatpush.msra.mxu0 %v1100
    %1131 = vmatpush.msra.mxu0 %v1099
    %1132 = vmatpush.msra.mxu0 %v1098
    %1133 = vmatpush.msra.mxu0 %v1097
    %1134 = vmatpush.msra.mxu0 %v1096
    %1135 = vmatmul.f32.gmra.mxu0 %v1108
    %v1136 = vpop.f32.mrf.mxu0
    %v1137 = vadd.f32 %v1105, %v1136
    %1138 = vmatmul.f32.gmra.mxu0 %v1111
    %v1139 = vpop.f32.mrf.mxu0
    %v1140 = vadd.f32 %v1105, %v1139
    %1141 = vmatmul.f32.gmra.mxu0 %v1114
    %v1142 = vpop.f32.mrf.mxu0
    %v1143 = vadd.f32 %v1105, %v1142
    %1144 = vmatmul.f32.gmra.mxu0 %v1117
    %v1145 = vpop.f32.mrf.mxu0
    %v1146 = vadd.f32 %v1105, %v1145
    %1147 = vdwg.mxu0
    %v1148 = vadd.f32 %v909, %v1137
    %v1149 = vadd.f32 %v910, %v1140
    %v1150 = vadd.f32 %v911, %v1143
    %v1151 = vadd.f32 %v912, %v1146
    %v1152 = vld [vmem:[#allocation2 + $0x270] sm:$0x1]
    %v1153 = vld [vmem:[#allocation2 + $0x278] sm:$0x1]
    %v1154 = vsel %vm192, %v1148, 0.0
    %1155 = vadd.xlane.f32.xlu0 %v1154
    %v1156 = vpop.xlane.xlu0 %1155
    %v1157 = vsel %vm192, %v1149, 0.0
    %1158 = vadd.xlane.f32.xlu0 %v1157
    %v1159 = vpop.xlane.xlu0 %1158
    %v1160 = vsel %vm192, %v1150, 0.0
    %1161 = vadd.xlane.f32.xlu0 %v1160
    %v1162 = vpop.xlane.xlu0 %1161
    %v1163 = vsel %vm192, %v1151, 0.0
    %1164 = vadd.xlane.f32.xlu0 %v1163
    %v1165 = vpop.xlane.xlu0 %1164
    %v1166 = vmul.f32 %v1156, %v211
    %v1167 = vmul.f32 %v1159, %v211
    %v1168 = vmul.f32 %v1162, %v211
    %v1169 = vmul.f32 %v1165, %v211
    %v1170 = vsub.f32 %v1148, %v1166
    %v1171 = vsub.f32 %v1149, %v1167
    %v1172 = vsub.f32 %v1150, %v1168
    %v1173 = vsub.f32 %v1151, %v1169
    %v1174 = vmul.f32 %v1170, %v1170
    %v1175 = vmul.f32 %v1171, %v1171
    %v1176 = vmul.f32 %v1172, %v1172
    %v1177 = vmul.f32 %v1173, %v1173
    %v1178 = vsel %vm192, %v1174, 0.0
    %1179 = vadd.xlane.f32.xlu0 %v1178
    %v1180 = vpop.xlane.xlu0 %1179
    %v1181 = vsel %vm192, %v1175, 0.0
    %1182 = vadd.xlane.f32.xlu0 %v1181
    %v1183 = vpop.xlane.xlu0 %1182
    %v1184 = vsel %vm192, %v1176, 0.0
    %1185 = vadd.xlane.f32.xlu0 %v1184
    %v1186 = vpop.xlane.xlu0 %1185
    %v1187 = vsel %vm192, %v1177, 0.0
    %1188 = vadd.xlane.f32.xlu0 %v1187
    %v1189 = vpop.xlane.xlu0 %1188
    %v1190 = vmul.f32 %v1180, %v211
    %v1191 = vmul.f32 %v1183, %v211
    %v1192 = vmul.f32 %v1186, %v211
    %v1193 = vmul.f32 %v1189, %v211
    %v1194 = vadd.f32 %v1190, 1e-05
    %v1195 = vadd.f32 %v1191, 1e-05
    %v1196 = vadd.f32 %v1192, 1e-05
    %v1197 = vadd.f32 %v1193, 1e-05
    %v1198 = vrsqrt.pop %v1194
    %v1199 = vmul.f32 %v1198, %v1194
    %v1200 = vmul.f32 %v1199, %v1198
    %v1201 = vmul.f32 0.5, %v1200
    %v1202 = vsub.f32 1.5, %v1201
    %v1203 = vmul.f32 %v1198, %v1202
    %vm1204 = vweird.f32 %v1194
    %vm1205 = vweird.f32 %v1198
    %vm1206 = vmor %vm1204, %vm1205
    %v1207 = vsel %vm1206, %v1198, %v1203
    %v1208 = vrsqrt.pop %v1195
    %v1209 = vmul.f32 %v1208, %v1195
    %v1210 = vmul.f32 %v1209, %v1208
    %v1211 = vmul.f32 0.5, %v1210
    %v1212 = vsub.f32 1.5, %v1211
    %v1213 = vmul.f32 %v1208, %v1212
    %vm1214 = vweird.f32 %v1195
    %vm1215 = vweird.f32 %v1208
    %vm1216 = vmor %vm1214, %vm1215
    %v1217 = vsel %vm1216, %v1208, %v1213
    %v1218 = vrsqrt.pop %v1196
    %v1219 = vmul.f32 %v1218, %v1196
    %v1220 = vmul.f32 %v1219, %v1218
    %v1221 = vmul.f32 0.5, %v1220
    %v1222 = vsub.f32 1.5, %v1221
    %v1223 = vmul.f32 %v1218, %v1222
    %vm1224 = vweird.f32 %v1196
    %vm1225 = vweird.f32 %v1218
    %vm1226 = vmor %vm1224, %vm1225
    %v1227 = vsel %vm1226, %v1218, %v1223
    %v1228 = vrsqrt.pop %v1197
    %v1229 = vmul.f32 %v1228, %v1197
    %v1230 = vmul.f32 %v1229, %v1228
    %v1231 = vmul.f32 0.5, %v1230
    %v1232 = vsub.f32 1.5, %v1231
    %v1233 = vmul.f32 %v1228, %v1232
    %vm1234 = vweird.f32 %v1197
    %vm1235 = vweird.f32 %v1228
    %vm1236 = vmor %vm1234, %vm1235
    %v1237 = vsel %vm1236, %v1228, %v1233
    %v1238 = vmul.f32 %v1170, %v1207
    %v1239 = vmul.f32 %v1171, %v1217
    %v1240 = vmul.f32 %v1172, %v1227
    %v1241 = vmul.f32 %v1173, %v1237
    %v1242 = vperm.slane %v1152, 0
    %v1243 = vmul.f32 %v1238, %v1242
    %v1244 = vmul.f32 %v1239, %v1242
    %v1245 = vmul.f32 %v1240, %v1242
    %v1246 = vmul.f32 %v1241, %v1242
    %v1247 = vperm.slane %v1153, 0
    %v1248 = vadd.f32 %v1243, %v1247
    %v1249 = vadd.f32 %v1244, %v1247
    %v1250 = vadd.f32 %v1245, %v1247
    %v1251 = vadd.f32 %v1246, %v1247
    %v1252 = vld [vmem:[#allocation2 + $0x390] sm:$0x1]
    %v1253 = vld [vmem:[#allocation2 + $0x280] sm:$0xff]
    %v1254 = vld [vmem:[#allocation2 + $0x288] sm:$0xff]
    %v1255 = vld [vmem:[#allocation2 + $0x290] sm:$0xff]
    %v1256 = vld [vmem:[#allocation2 + $0x298] sm:$0xff]
    %v1257 = vld [vmem:[#allocation2 + $0x2a0] sm:$0x1]
    %v1258 = vperm.slane %v1257, 0
    %v1260 = vsel %vm192, %v1248, 0
    %v1263 = vsel %vm192, %v1249, 0
    %v1266 = vsel %vm192, %v1250, 0
    %v1269 = vsel %vm192, %v1251, 0
    %1271 = vmatpush.msra.mxu0 0.0
    %1272 = vmatpush.msra.mxu0 0.0
    %1273 = vmatpush.msra.mxu0 0.0
    %1274 = vmatpush.msra.mxu0 0.0
    %1275 = vmatpush.msra.mxu0 0.0
    %1276 = vmatpush.msra.mxu0 0.0
    %1277 = vmatpush.msra.mxu0 0.0
    %1278 = vmatpush.msra.mxu0 0.0
    %1279 = vmatpush.msra.mxu0 0.0
    %1280 = vmatpush.msra.mxu0 0.0
    %1281 = vmatpush.msra.mxu0 0.0
    %1282 = vmatpush.msra.mxu0 0.0
    %1283 = vmatpush.msra.mxu0 %v1256
    %1284 = vmatpush.msra.mxu0 %v1255
    %1285 = vmatpush.msra.mxu0 %v1254
    %1286 = vmatpush.msra.mxu0 %v1253
    %1287 = vmatmul.f32.gmra.mxu0 %v1260
    %v1288 = vpop.f32.mrf.mxu0
    %v1289 = vadd.f32 %v1258, %v1288
    %1290 = vmatmul.f32.gmra.mxu0 %v1263
    %v1291 = vpop.f32.mrf.mxu0
    %v1292 = vadd.f32 %v1258, %v1291
    %1293 = vmatmul.f32.gmra.mxu0 %v1266
    %v1294 = vpop.f32.mrf.mxu0
    %v1295 = vadd.f32 %v1258, %v1294
    %1296 = vmatmul.f32.gmra.mxu0 %v1269
    %v1297 = vpop.f32.mrf.mxu0
    %v1298 = vadd.f32 %v1258, %v1297
    %1299 = vdwg.mxu0
    %v1300 = vld [vmem:[#allocation2 + $0x2a8] sm:$0xff]
    %v1301 = vld [vmem:[#allocation2 + $0x2b0] sm:$0xff]
    %v1302 = vld [vmem:[#allocation2 + $0x2b8] sm:$0xff]
    %v1303 = vld [vmem:[#allocation2 + $0x2c0] sm:$0xff]
    %v1304 = vld [vmem:[#allocation2 + $0x2c8] sm:$0x1]
    %v1305 = vperm.slane %v1304, 0
    %1306 = vmatpush.msra.mxu0 0.0
    %1307 = vmatpush.msra.mxu0 0.0
    %1308 = vmatpush.msra.mxu0 0.0
    %1309 = vmatpush.msra.mxu0 0.0
    %1310 = vmatpush.msra.mxu0 0.0
    %1311 = vmatpush.msra.mxu0 0.0
    %1312 = vmatpush.msra.mxu0 0.0
    %1313 = vmatpush.msra.mxu0 0.0
    %1314 = vmatpush.msra.mxu0 0.0
    %1315 = vmatpush.msra.mxu0 0.0
    %1316 = vmatpush.msra.mxu0 0.0
    %1317 = vmatpush.msra.mxu0 0.0
    %1318 = vmatpush.msra.mxu0 %v1303
    %1319 = vmatpush.msra.mxu0 %v1302
    %1320 = vmatpush.msra.mxu0 %v1301
    %1321 = vmatpush.msra.mxu0 %v1300
    %1322 = vmatmul.f32.gmra.mxu0 %v1260
    %v1323 = vpop.f32.mrf.mxu0
    %v1324 = vadd.f32 %v1305, %v1323
    %1325 = vmatmul.f32.gmra.mxu0 %v1263
    %v1326 = vpop.f32.mrf.mxu0
    %v1327 = vadd.f32 %v1305, %v1326
    %1328 = vmatmul.f32.gmra.mxu0 %v1266
    %v1329 = vpop.f32.mrf.mxu0
    %v1330 = vadd.f32 %v1305, %v1329
    %1331 = vmatmul.f32.gmra.mxu0 %v1269
    %v1332 = vpop.f32.mrf.mxu0
    %v1333 = vadd.f32 %v1305, %v1332
    %1334 = vdwg.mxu0
    %v1335 = vld [vmem:[#allocation2 + $0x2d0] sm:$0xff]
    %v1336 = vld [vmem:[#allocation2 + $0x2d8] sm:$0xff]
    %v1337 = vld [vmem:[#allocation2 + $0x2e0] sm:$0xff]
    %v1338 = vld [vmem:[#allocation2 + $0x2e8] sm:$0xff]
    %v1339 = vld [vmem:[#allocation2 + $0x2f0] sm:$0x1]
    %v1340 = vperm.slane %v1339, 0
    %1341 = vmatpush.msra.mxu0 0.0
    %1342 = vmatpush.msra.mxu0 0.0
    %1343 = vmatpush.msra.mxu0 0.0
    %1344 = vmatpush.msra.mxu0 0.0
    %1345 = vmatpush.msra.mxu0 0.0
    %1346 = vmatpush.msra.mxu0 0.0
    %1347 = vmatpush.msra.mxu0 0.0
    %1348 = vmatpush.msra.mxu0 0.0
    %1349 = vmatpush.msra.mxu0 0.0
    %1350 = vmatpush.msra.mxu0 0.0
    %1351 = vmatpush.msra.mxu0 0.0
    %1352 = vmatpush.msra.mxu0 0.0
    %1353 = vmatpush.msra.mxu0 %v1338
    %1354 = vmatpush.msra.mxu0 %v1337
    %1355 = vmatpush.msra.mxu0 %v1336
    %1356 = vmatpush.msra.mxu0 %v1335
    %1357 = vmatmul.f32.gmra.mxu0 %v1260
    %v1358 = vpop.f32.mrf.mxu0
    %v1359 = vadd.f32 %v1340, %v1358
    %1360 = vmatmul.f32.gmra.mxu0 %v1263
    %v1361 = vpop.f32.mrf.mxu0
    %v1362 = vadd.f32 %v1340, %v1361
    %1363 = vmatmul.f32.gmra.mxu0 %v1266
    %v1364 = vpop.f32.mrf.mxu0
    %v1365 = vadd.f32 %v1340, %v1364
    %1366 = vmatmul.f32.gmra.mxu0 %v1269
    %v1367 = vpop.f32.mrf.mxu0
    %v1368 = vadd.f32 %v1340, %v1367
    %1369 = vdwg.mxu0
    %v1371 = vsel %vm416, %v1289, 0
    %v1374 = vsel %vm416, %v1292, 0
    %v1377 = vsel %vm416, %v1295, 0
    %v1380 = vsel %vm416, %v1298, 0
    %v1383 = vsel %vm416, %v1324, 0
    %v1386 = vsel %vm416, %v1327, 0
    %v1389 = vsel %vm416, %v1330, 0
    %v1392 = vsel %vm416, %v1333, 0
    %1394 = vmatpush.xpose.msra.mxu0 0.0
    %1395 = vmatpush.xpose.msra.mxu0 0.0
    %1396 = vmatpush.xpose.msra.mxu0 0.0
    %1397 = vmatpush.xpose.msra.mxu0 0.0
    %1398 = vmatpush.xpose.msra.mxu0 0.0
    %1399 = vmatpush.xpose.msra.mxu0 0.0
    %1400 = vmatpush.xpose.msra.mxu0 0.0
    %1401 = vmatpush.xpose.msra.mxu0 0.0
    %1402 = vmatpush.xpose.msra.mxu0 0.0
    %1403 = vmatpush.xpose.msra.mxu0 0.0
    %1404 = vmatpush.xpose.msra.mxu0 0.0
    %1405 = vmatpush.xpose.msra.mxu0 0.0
    %1406 = vmatpush.xpose.msra.mxu0 %v1392
    %1407 = vmatpush.xpose.msra.mxu0 %v1389
    %1408 = vmatpush.xpose.msra.mxu0 %v1386
    %1409 = vmatpush.xpose.msra.mxu0 %v1383
    %1410 = vmatmul.f32.gmra.mxu0 %v1371
    %v1411 = vpop.f32.mrf.mxu0
    %v1412 = vadd.f32 0.0, %v1411
    %1413 = vmatmul.f32.gmra.mxu0 %v1374
    %v1414 = vpop.f32.mrf.mxu0
    %v1415 = vadd.f32 0.0, %v1414
    %1416 = vmatmul.f32.gmra.mxu0 %v1377
    %v1417 = vpop.f32.mrf.mxu0
    %v1418 = vadd.f32 0.0, %v1417
    %1419 = vmatmul.f32.gmra.mxu0 %v1380
    %v1420 = vpop.f32.mrf.mxu0
    %v1421 = vadd.f32 0.0, %v1420
    %1422 = vdwg.mxu0
    %v1423 = vmul.f32 %v1412, 0.25
    %v1424 = vmul.f32 %v1415, 0.25
    %v1425 = vmul.f32 %v1418, 0.25
    %v1426 = vmul.f32 %v1421, 0.25
    %v1427 = vadd.f32 %v1423, %v186
    %v1428 = vadd.f32 %v1424, %v187
    %v1429 = vadd.f32 %v1425, %v188
    %v1430 = vadd.f32 %v1426, %v189
    %v1431 = vsel %vm192, %v1427, -inf
    %1432 = vmax.xlane.f32.xlu0 %v1431
    %v1433 = vpop.xlane.xlu0 %1432
    %v1434 = vsel %vm192, %v1428, -inf
    %1435 = vmax.xlane.f32.xlu0 %v1434
    %v1436 = vpop.xlane.xlu0 %1435
    %v1437 = vsel %vm192, %v1429, -inf
    %1438 = vmax.xlane.f32.xlu0 %v1437
    %v1439 = vpop.xlane.xlu0 %1438
    %v1440 = vsel %vm192, %v1430, -inf
    %1441 = vmax.xlane.f32.xlu0 %v1440
    %v1442 = vpop.xlane.xlu0 %1441
    %v1443 = vsub.f32 %v1427, %v1433
    %v1444 = vsub.f32 %v1428, %v1436
    %v1445 = vsub.f32 %v1429, %v1439
    %v1446 = vsub.f32 %v1430, %v1442
    %v1447 = vmul.f32 %v1443, 1.442695
    %v1448 = vpow.pop %v1447
    %v1449 = vmul.f32 %v1444, 1.442695
    %v1450 = vpow.pop %v1449
    %v1451 = vmul.f32 %v1445, 1.442695
    %v1452 = vpow.pop %v1451
    %v1453 = vmul.f32 %v1446, 1.442695
    %v1454 = vpow.pop %v1453
    %v1455 = vsel %vm192, %v1448, 0.0
    %1456 = vadd.xlane.f32.xlu0 %v1455
    %v1457 = vpop.xlane.xlu0 %1456
    %v1458 = vsel %vm192, %v1450, 0.0
    %1459 = vadd.xlane.f32.xlu0 %v1458
    %v1460 = vpop.xlane.xlu0 %1459
    %v1461 = vsel %vm192, %v1452, 0.0
    %1462 = vadd.xlane.f32.xlu0 %v1461
    %v1463 = vpop.xlane.xlu0 %1462
    %v1464 = vsel %vm192, %v1454, 0.0
    %1465 = vadd.xlane.f32.xlu0 %v1464
    %v1466 = vpop.xlane.xlu0 %1465
    %v1467 = vrcp.pop %v1457
    %v1468 = vrcp.pop %v1460
    %v1469 = vrcp.pop %v1463
    %v1470 = vrcp.pop %v1466
    %v1471 = vmul.f32 %v1448, %v1467
    %v1472 = vmul.f32 %v1450, %v1468
    %v1473 = vmul.f32 %v1452, %v1469
    %v1474 = vmul.f32 %v1454, %v1470
    %v1476 = vsel %vm192, %v1471, 0
    %v1479 = vsel %vm192, %v1472, 0
    %v1482 = vsel %vm192, %v1473, 0
    %v1485 = vsel %vm192, %v1474, 0
    %1487 = vmatpush.msra.mxu0 0.0
    %1488 = vmatpush.msra.mxu0 0.0
    %1489 = vmatpush.msra.mxu0 0.0
    %1490 = vmatpush.msra.mxu0 0.0
    %1491 = vmatpush.msra.mxu0 0.0
    %1492 = vmatpush.msra.mxu0 0.0
    %1493 = vmatpush.msra.mxu0 0.0
    %1494 = vmatpush.msra.mxu0 0.0
    %1495 = vmatpush.msra.mxu0 0.0
    %1496 = vmatpush.msra.mxu0 0.0
    %1497 = vmatpush.msra.mxu0 0.0
    %1498 = vmatpush.msra.mxu0 0.0
    %1499 = vmatpush.msra.mxu0 %v1368
    %1500 = vmatpush.msra.mxu0 %v1365
    %1501 = vmatpush.msra.mxu0 %v1362
    %1502 = vmatpush.msra.mxu0 %v1359
    %1503 = vmatmul.f32.gmra.mxu0 %v1476
    %v1504 = vpop.f32.mrf.mxu0
    %v1505 = vadd.f32 0.0, %v1504
    %1506 = vmatmul.f32.gmra.mxu0 %v1479
    %v1507 = vpop.f32.mrf.mxu0
    %v1508 = vadd.f32 0.0, %v1507
    %1509 = vmatmul.f32.gmra.mxu0 %v1482
    %v1510 = vpop.f32.mrf.mxu0
    %v1511 = vadd.f32 0.0, %v1510
    %1512 = vmatmul.f32.gmra.mxu0 %v1485
    %v1513 = vpop.f32.mrf.mxu0
    %v1514 = vadd.f32 0.0, %v1513
    %1515 = vdwg.mxu0
    %v1516 = vld [vmem:[#allocation2 + $0x2f8] sm:$0xff]
    %v1517 = vld [vmem:[#allocation2 + $0x300] sm:$0xff]
    %v1519 = vsel %vm416, %v1505, 0
    %v1522 = vsel %vm416, %v1508, 0
    %v1525 = vsel %vm416, %v1511, 0
    %v1528 = vsel %vm416, %v1514, 0
    %1530 = vmatpush.msra.mxu0 0.0
    %1531 = vmatpush.msra.mxu0 0.0
    %1532 = vmatpush.msra.mxu0 0.0
    %1533 = vmatpush.msra.mxu0 0.0
    %1534 = vmatpush.msra.mxu0 0.0
    %1535 = vmatpush.msra.mxu0 0.0
    %1536 = vmatpush.msra.mxu0 0.0
    %1537 = vmatpush.msra.mxu0 0.0
    %1538 = vmatpush.msra.mxu0 0.0
    %1539 = vmatpush.msra.mxu0 0.0
    %1540 = vmatpush.msra.mxu0 0.0
    %1541 = vmatpush.msra.mxu0 0.0
    %1542 = vmatpush.msra.mxu0 0.0
    %1543 = vmatpush.msra.mxu0 0.0
    %1544 = vmatpush.msra.mxu0 %v1517
    %1545 = vmatpush.msra.mxu0 %v1516
    %1546 = vmatmul.f32.gmra.mxu0 %v1519
    %v1547 = vpop.f32.mrf.mxu0
    %v1548 = vadd.f32 0.0, %v1547
    %1549 = vmatmul.f32.gmra.mxu0 %v1522
    %v1550 = vpop.f32.mrf.mxu0
    %v1551 = vadd.f32 0.0, %v1550
    %1552 = vmatmul.f32.gmra.mxu0 %v1525
    %v1553 = vpop.f32.mrf.mxu0
    %v1554 = vadd.f32 0.0, %v1553
    %1555 = vmatmul.f32.gmra.mxu0 %v1528
    %v1556 = vpop.f32.mrf.mxu0
    %v1557 = vadd.f32 0.0, %v1556
    %1558 = vdwg.mxu0
    %v1559 = vperm.slane %v1252, 0
    %v1560 = vadd.f32 %v1559, %v1548
    %v1561 = vadd.f32 %v1559, %v1551
    %v1562 = vadd.f32 %v1559, %v1554
    %v1563 = vadd.f32 %v1559, %v1557
    %v1564 = vld [vmem:[#allocation2 + $0x308] sm:$0xff]
    %v1565 = vld [vmem:[#allocation2 + $0x310] sm:$0xff]
    %v1566 = vld [vmem:[#allocation2 + $0x318] sm:$0xff]
    %v1567 = vld [vmem:[#allocation2 + $0x320] sm:$0xff]
    %v1568 = vld [vmem:[#allocation2 + $0x328] sm:$0x1]
    %v1569 = vperm.slane %v1568, 0
    %1570 = vmatpush.msra.mxu0 0.0
    %1571 = vmatpush.msra.mxu0 0.0
    %1572 = vmatpush.msra.mxu0 0.0
    %1573 = vmatpush.msra.mxu0 0.0
    %1574 = vmatpush.msra.mxu0 0.0
    %1575 = vmatpush.msra.mxu0 0.0
    %1576 = vmatpush.msra.mxu0 0.0
    %1577 = vmatpush.msra.mxu0 0.0
    %1578 = vmatpush.msra.mxu0 0.0
    %1579 = vmatpush.msra.mxu0 0.0
    %1580 = vmatpush.msra.mxu0 0.0
    %1581 = vmatpush.msra.mxu0 0.0
    %1582 = vmatpush.msra.mxu0 %v1567
    %1583 = vmatpush.msra.mxu0 %v1566
    %1584 = vmatpush.msra.mxu0 %v1565
    %1585 = vmatpush.msra.mxu0 %v1564
    %1586 = vmatmul.f32.gmra.mxu0 %v1260
    %v1587 = vpop.f32.mrf.mxu0
    %v1588 = vadd.f32 %v1569, %v1587
    %1589 = vmatmul.f32.gmra.mxu0 %v1263
    %v1590 = vpop.f32.mrf.mxu0
    %v1591 = vadd.f32 %v1569, %v1590
    %1592 = vmatmul.f32.gmra.mxu0 %v1266
    %v1593 = vpop.f32.mrf.mxu0
    %v1594 = vadd.f32 %v1569, %v1593
    %1595 = vmatmul.f32.gmra.mxu0 %v1269
    %v1596 = vpop.f32.mrf.mxu0
    %v1597 = vadd.f32 %v1569, %v1596
    %1598 = vdwg.mxu0
    %v1599 = vld [vmem:[#allocation2 + $0x330] sm:$0xff]
    %v1600 = vld [vmem:[#allocation2 + $0x338] sm:$0xff]
    %v1601 = vld [vmem:[#allocation2 + $0x340] sm:$0xff]
    %v1602 = vld [vmem:[#allocation2 + $0x348] sm:$0xff]
    %v1603 = vld [vmem:[#allocation2 + $0x350] sm:$0x1]
    %v1604 = vperm.slane %v1603, 0
    %1605 = vmatpush.msra.mxu0 0.0
    %1606 = vmatpush.msra.mxu0 0.0
    %1607 = vmatpush.msra.mxu0 0.0
    %1608 = vmatpush.msra.mxu0 0.0
    %1609 = vmatpush.msra.mxu0 0.0
    %1610 = vmatpush.msra.mxu0 0.0
    %1611 = vmatpush.msra.mxu0 0.0
    %1612 = vmatpush.msra.mxu0 0.0
    %1613 = vmatpush.msra.mxu0 0.0
    %1614 = vmatpush.msra.mxu0 0.0
    %1615 = vmatpush.msra.mxu0 0.0
    %1616 = vmatpush.msra.mxu0 0.0
    %1617 = vmatpush.msra.mxu0 %v1602
    %1618 = vmatpush.msra.mxu0 %v1601
    %1619 = vmatpush.msra.mxu0 %v1600
    %1620 = vmatpush.msra.mxu0 %v1599
    %1621 = vmatmul.f32.gmra.mxu0 %v1260
    %v1622 = vpop.f32.mrf.mxu0
    %v1623 = vadd.f32 %v1604, %v1622
    %1624 = vmatmul.f32.gmra.mxu0 %v1263
    %v1625 = vpop.f32.mrf.mxu0
    %v1626 = vadd.f32 %v1604, %v1625
    %1627 = vmatmul.f32.gmra.mxu0 %v1266
    %v1628 = vpop.f32.mrf.mxu0
    %v1629 = vadd.f32 %v1604, %v1628
    %1630 = vmatmul.f32.gmra.mxu0 %v1269
    %v1631 = vpop.f32.mrf.mxu0
    %v1632 = vadd.f32 %v1604, %v1631
    %1633 = vdwg.mxu0
    %v1634 = vld [vmem:[#allocation2 + $0x358] sm:$0xff]
    %v1635 = vld [vmem:[#allocation2 + $0x360] sm:$0xff]
    %v1636 = vld [vmem:[#allocation2 + $0x368] sm:$0xff]
    %v1637 = vld [vmem:[#allocation2 + $0x370] sm:$0xff]
    %v1638 = vld [vmem:[#allocation2 + $0x378] sm:$0x1]
    %v1639 = vperm.slane %v1638, 0
    %1640 = vmatpush.msra.mxu0 0.0
    %1641 = vmatpush.msra.mxu0 0.0
    %1642 = vmatpush.msra.mxu0 0.0
    %1643 = vmatpush.msra.mxu0 0.0
    %1644 = vmatpush.msra.mxu0 0.0
    %1645 = vmatpush.msra.mxu0 0.0
    %1646 = vmatpush.msra.mxu0 0.0
    %1647 = vmatpush.msra.mxu0 0.0
    %1648 = vmatpush.msra.mxu0 0.0
    %1649 = vmatpush.msra.mxu0 0.0
    %1650 = vmatpush.msra.mxu0 0.0
    %1651 = vmatpush.msra.mxu0 0.0
    %1652 = vmatpush.msra.mxu0 %v1637
    %1653 = vmatpush.msra.mxu0 %v1636
    %1654 = vmatpush.msra.mxu0 %v1635
    %1655 = vmatpush.msra.mxu0 %v1634
    %1656 = vmatmul.f32.gmra.mxu0 %v1260
    %v1657 = vpop.f32.mrf.mxu0
    %v1658 = vadd.f32 %v1639, %v1657
    %1659 = vmatmul.f32.gmra.mxu0 %v1263
    %v1660 = vpop.f32.mrf.mxu0
    %v1661 = vadd.f32 %v1639, %v1660
    %1662 = vmatmul.f32.gmra.mxu0 %v1266
    %v1663 = vpop.f32.mrf.mxu0
    %v1664 = vadd.f32 %v1639, %v1663
    %1665 = vmatmul.f32.gmra.mxu0 %v1269
    %v1666 = vpop.f32.mrf.mxu0
    %v1667 = vadd.f32 %v1639, %v1666
    %1668 = vdwg.mxu0
    %v1670 = vsel %vm416, %v1588, 0
    %v1673 = vsel %vm416, %v1591, 0
    %v1676 = vsel %vm416, %v1594, 0
    %v1679 = vsel %vm416, %v1597, 0
    %v1682 = vsel %vm416, %v1623, 0
    %v1685 = vsel %vm416, %v1626, 0
    %v1688 = vsel %vm416, %v1629, 0
    %v1691 = vsel %vm416, %v1632, 0
    %1693 = vmatpush.xpose.msra.mxu0 0.0
    %1694 = vmatpush.xpose.msra.mxu0 0.0
    %1695 = vmatpush.xpose.msra.mxu0 0.0
    %1696 = vmatpush.xpose.msra.mxu0 0.0
    %1697 = vmatpush.xpose.msra.mxu0 0.0
    %1698 = vmatpush.xpose.msra.mxu0 0.0
    %1699 = vmatpush.xpose.msra.mxu0 0.0
    %1700 = vmatpush.xpose.msra.mxu0 0.0
    %1701 = vmatpush.xpose.msra.mxu0 0.0
    %1702 = vmatpush.xpose.msra.mxu0 0.0
    %1703 = vmatpush.xpose.msra.mxu0 0.0
    %1704 = vmatpush.xpose.msra.mxu0 0.0
    %1705 = vmatpush.xpose.msra.mxu0 %v1691
    %1706 = vmatpush.xpose.msra.mxu0 %v1688
    %1707 = vmatpush.xpose.msra.mxu0 %v1685
    %1708 = vmatpush.xpose.msra.mxu0 %v1682
    %1709 = vmatmul.f32.gmra.mxu0 %v1670
    %v1710 = vpop.f32.mrf.mxu0
    %v1711 = vadd.f32 0.0, %v1710
    %1712 = vmatmul.f32.gmra.mxu0 %v1673
    %v1713 = vpop.f32.mrf.mxu0
    %v1714 = vadd.f32 0.0, %v1713
    %1715 = vmatmul.f32.gmra.mxu0 %v1676
    %v1716 = vpop.f32.mrf.mxu0
    %v1717 = vadd.f32 0.0, %v1716
    %1718 = vmatmul.f32.gmra.mxu0 %v1679
    %v1719 = vpop.f32.mrf.mxu0
    %v1720 = vadd.f32 0.0, %v1719
    %1721 = vdwg.mxu0
    %v1722 = vmul.f32 %v1711, 0.25
    %v1723 = vmul.f32 %v1714, 0.25
    %v1724 = vmul.f32 %v1717, 0.25
    %v1725 = vmul.f32 %v1720, 0.25
    %v1726 = vadd.f32 %v1722, %v186
    %v1727 = vadd.f32 %v1723, %v187
    %v1728 = vadd.f32 %v1724, %v188
    %v1729 = vadd.f32 %v1725, %v189
    %v1730 = vsel %vm192, %v1726, -inf
    %1731 = vmax.xlane.f32.xlu0 %v1730
    %v1732 = vpop.xlane.xlu0 %1731
    %v1733 = vsel %vm192, %v1727, -inf
    %1734 = vmax.xlane.f32.xlu0 %v1733
    %v1735 = vpop.xlane.xlu0 %1734
    %v1736 = vsel %vm192, %v1728, -inf
    %1737 = vmax.xlane.f32.xlu0 %v1736
    %v1738 = vpop.xlane.xlu0 %1737
    %v1739 = vsel %vm192, %v1729, -inf
    %1740 = vmax.xlane.f32.xlu0 %v1739
    %v1741 = vpop.xlane.xlu0 %1740
    %v1742 = vsub.f32 %v1726, %v1732
    %v1743 = vsub.f32 %v1727, %v1735
    %v1744 = vsub.f32 %v1728, %v1738
    %v1745 = vsub.f32 %v1729, %v1741
    %v1746 = vmul.f32 %v1742, 1.442695
    %v1747 = vpow.pop %v1746
    %v1748 = vmul.f32 %v1743, 1.442695
    %v1749 = vpow.pop %v1748
    %v1750 = vmul.f32 %v1744, 1.442695
    %v1751 = vpow.pop %v1750
    %v1752 = vmul.f32 %v1745, 1.442695
    %v1753 = vpow.pop %v1752
    %v1754 = vsel %vm192, %v1747, 0.0
    %1755 = vadd.xlane.f32.xlu0 %v1754
    %v1756 = vpop.xlane.xlu0 %1755
    %v1757 = vsel %vm192, %v1749, 0.0
    %1758 = vadd.xlane.f32.xlu0 %v1757
    %v1759 = vpop.xlane.xlu0 %1758
    %v1760 = vsel %vm192, %v1751, 0.0
    %1761 = vadd.xlane.f32.xlu0 %v1760
    %v1762 = vpop.xlane.xlu0 %1761
    %v1763 = vsel %vm192, %v1753, 0.0
    %1764 = vadd.xlane.f32.xlu0 %v1763
    %v1765 = vpop.xlane.xlu0 %1764
    %v1766 = vrcp.pop %v1756
    %v1767 = vrcp.pop %v1759
    %v1768 = vrcp.pop %v1762
    %v1769 = vrcp.pop %v1765
    %v1770 = vmul.f32 %v1747, %v1766
    %v1771 = vmul.f32 %v1749, %v1767
    %v1772 = vmul.f32 %v1751, %v1768
    %v1773 = vmul.f32 %v1753, %v1769
    %v1775 = vsel %vm192, %v1770, 0
    %v1778 = vsel %vm192, %v1771, 0
    %v1781 = vsel %vm192, %v1772, 0
    %v1784 = vsel %vm192, %v1773, 0
    %1786 = vmatpush.msra.mxu0 0.0
    %1787 = vmatpush.msra.mxu0 0.0
    %1788 = vmatpush.msra.mxu0 0.0
    %1789 = vmatpush.msra.mxu0 0.0
    %1790 = vmatpush.msra.mxu0 0.0
    %1791 = vmatpush.msra.mxu0 0.0
    %1792 = vmatpush.msra.mxu0 0.0
    %1793 = vmatpush.msra.mxu0 0.0
    %1794 = vmatpush.msra.mxu0 0.0
    %1795 = vmatpush.msra.mxu0 0.0
    %1796 = vmatpush.msra.mxu0 0.0
    %1797 = vmatpush.msra.mxu0 0.0
    %1798 = vmatpush.msra.mxu0 %v1667
    %1799 = vmatpush.msra.mxu0 %v1664
    %1800 = vmatpush.msra.mxu0 %v1661
    %1801 = vmatpush.msra.mxu0 %v1658
    %1802 = vmatmul.f32.gmra.mxu0 %v1775
    %v1803 = vpop.f32.mrf.mxu0
    %v1804 = vadd.f32 0.0, %v1803
    %1805 = vmatmul.f32.gmra.mxu0 %v1778
    %v1806 = vpop.f32.mrf.mxu0
    %v1807 = vadd.f32 0.0, %v1806
    %1808 = vmatmul.f32.gmra.mxu0 %v1781
    %v1809 = vpop.f32.mrf.mxu0
    %v1810 = vadd.f32 0.0, %v1809
    %1811 = vmatmul.f32.gmra.mxu0 %v1784
    %v1812 = vpop.f32.mrf.mxu0
    %v1813 = vadd.f32 0.0, %v1812
    %1814 = vdwg.mxu0
    %v1815 = vld [vmem:[#allocation2 + $0x380] sm:$0xff]
    %v1816 = vld [vmem:[#allocation2 + $0x388] sm:$0xff]
    %v1818 = vsel %vm416, %v1804, 0
    %v1821 = vsel %vm416, %v1807, 0
    %v1824 = vsel %vm416, %v1810, 0
    %v1827 = vsel %vm416, %v1813, 0
    %1829 = vmatpush.msra.mxu0 0.0
    %1830 = vmatpush.msra.mxu0 0.0
    %1831 = vmatpush.msra.mxu0 0.0
    %1832 = vmatpush.msra.mxu0 0.0
    %1833 = vmatpush.msra.mxu0 0.0
    %1834 = vmatpush.msra.mxu0 0.0
    %1835 = vmatpush.msra.mxu0 0.0
    %1836 = vmatpush.msra.mxu0 0.0
    %1837 = vmatpush.msra.mxu0 0.0
    %1838 = vmatpush.msra.mxu0 0.0
    %1839 = vmatpush.msra.mxu0 0.0
    %1840 = vmatpush.msra.mxu0 0.0
    %1841 = vmatpush.msra.mxu0 0.0
    %1842 = vmatpush.msra.mxu0 0.0
    %1843 = vmatpush.msra.mxu0 %v1816
    %1844 = vmatpush.msra.mxu0 %v1815
    %1845 = vmatmul.f32.gmra.mxu0 %v1818
    %v1846 = vpop.f32.mrf.mxu0
    %v1847 = vadd.f32 0.0, %v1846
    %1848 = vmatmul.f32.gmra.mxu0 %v1821
    %v1849 = vpop.f32.mrf.mxu0
    %v1850 = vadd.f32 0.0, %v1849
    %1851 = vmatmul.f32.gmra.mxu0 %v1824
    %v1852 = vpop.f32.mrf.mxu0
    %v1853 = vadd.f32 0.0, %v1852
    %1854 = vmatmul.f32.gmra.mxu0 %v1827
    %v1855 = vpop.f32.mrf.mxu0
    %v1856 = vadd.f32 0.0, %v1855
    %1857 = vdwg.mxu0
    %v1858 = vadd.f32 %v1560, %v1847
    %v1859 = vadd.f32 %v1561, %v1850
    %v1860 = vadd.f32 %v1562, %v1853
    %v1861 = vadd.f32 %v1563, %v1856
    %v1862 = vadd.f32 %v1148, %v1858
    %v1863 = vadd.f32 %v1149, %v1859
    %v1864 = vadd.f32 %v1150, %v1860
    %v1865 = vadd.f32 %v1151, %v1861
    %v1866 = vld [vmem:[#allocation2 + $0x398] sm:$0x1]
    %v1867 = vld [vmem:[#allocation2 + $0x3a0] sm:$0x1]
    %v1868 = vsel %vm192, %v1862, 0.0
    %1869 = vadd.xlane.f32.xlu0 %v1868
    %v1870 = vpop.xlane.xlu0 %1869
    %v1871 = vsel %vm192, %v1863, 0.0
    %1872 = vadd.xlane.f32.xlu0 %v1871
    %v1873 = vpop.xlane.xlu0 %1872
    %v1874 = vsel %vm192, %v1864, 0.0
    %1875 = vadd.xlane.f32.xlu0 %v1874
    %v1876 = vpop.xlane.xlu0 %1875
    %v1877 = vsel %vm192, %v1865, 0.0
    %1878 = vadd.xlane.f32.xlu0 %v1877
    %v1879 = vpop.xlane.xlu0 %1878
    %v1880 = vmul.f32 %v1870, %v211
    %v1881 = vmul.f32 %v1873, %v211
    %v1882 = vmul.f32 %v1876, %v211
    %v1883 = vmul.f32 %v1879, %v211
    %v1884 = vsub.f32 %v1862, %v1880
    %v1885 = vsub.f32 %v1863, %v1881
    %v1886 = vsub.f32 %v1864, %v1882
    %v1887 = vsub.f32 %v1865, %v1883
    %v1888 = vmul.f32 %v1884, %v1884
    %v1889 = vmul.f32 %v1885, %v1885
    %v1890 = vmul.f32 %v1886, %v1886
    %v1891 = vmul.f32 %v1887, %v1887
    %v1892 = vsel %vm192, %v1888, 0.0
    %1893 = vadd.xlane.f32.xlu0 %v1892
    %v1894 = vpop.xlane.xlu0 %1893
    %v1895 = vsel %vm192, %v1889, 0.0
    %1896 = vadd.xlane.f32.xlu0 %v1895
    %v1897 = vpop.xlane.xlu0 %1896
    %v1898 = vsel %vm192, %v1890, 0.0
    %1899 = vadd.xlane.f32.xlu0 %v1898
    %v1900 = vpop.xlane.xlu0 %1899
    %v1901 = vsel %vm192, %v1891, 0.0
    %1902 = vadd.xlane.f32.xlu0 %v1901
    %v1903 = vpop.xlane.xlu0 %1902
    %v1904 = vmul.f32 %v1894, %v211
    %v1905 = vmul.f32 %v1897, %v211
    %v1906 = vmul.f32 %v1900, %v211
    %v1907 = vmul.f32 %v1903, %v211
    %v1908 = vadd.f32 %v1904, 1e-05
    %v1909 = vadd.f32 %v1905, 1e-05
    %v1910 = vadd.f32 %v1906, 1e-05
    %v1911 = vadd.f32 %v1907, 1e-05
    %v1912 = vrsqrt.pop %v1908
    %v1913 = vmul.f32 %v1912, %v1908
    %v1914 = vmul.f32 %v1913, %v1912
    %v1915 = vmul.f32 0.5, %v1914
    %v1916 = vsub.f32 1.5, %v1915
    %v1917 = vmul.f32 %v1912, %v1916
    %vm1918 = vweird.f32 %v1908
    %vm1919 = vweird.f32 %v1912
    %vm1920 = vmor %vm1918, %vm1919
    %v1921 = vsel %vm1920, %v1912, %v1917
    %v1922 = vrsqrt.pop %v1909
    %v1923 = vmul.f32 %v1922, %v1909
    %v1924 = vmul.f32 %v1923, %v1922
    %v1925 = vmul.f32 0.5, %v1924
    %v1926 = vsub.f32 1.5, %v1925
    %v1927 = vmul.f32 %v1922, %v1926
    %vm1928 = vweird.f32 %v1909
    %vm1929 = vweird.f32 %v1922
    %vm1930 = vmor %vm1928, %vm1929
    %v1931 = vsel %vm1930, %v1922, %v1927
    %v1932 = vrsqrt.pop %v1910
    %v1933 = vmul.f32 %v1932, %v1910
    %v1934 = vmul.f32 %v1933, %v1932
    %v1935 = vmul.f32 0.5, %v1934
    %v1936 = vsub.f32 1.5, %v1935
    %v1937 = vmul.f32 %v1932, %v1936
    %vm1938 = vweird.f32 %v1910
    %vm1939 = vweird.f32 %v1932
    %vm1940 = vmor %vm1938, %vm1939
    %v1941 = vsel %vm1940, %v1932, %v1937
    %v1942 = vrsqrt.pop %v1911
    %v1943 = vmul.f32 %v1942, %v1911
    %v1944 = vmul.f32 %v1943, %v1942
    %v1945 = vmul.f32 0.5, %v1944
    %v1946 = vsub.f32 1.5, %v1945
    %v1947 = vmul.f32 %v1942, %v1946
    %vm1948 = vweird.f32 %v1911
    %vm1949 = vweird.f32 %v1942
    %vm1950 = vmor %vm1948, %vm1949
    %v1951 = vsel %vm1950, %v1942, %v1947
    %v1952 = vmul.f32 %v1884, %v1921
    %v1953 = vmul.f32 %v1885, %v1931
    %v1954 = vmul.f32 %v1886, %v1941
    %v1955 = vmul.f32 %v1887, %v1951
    %v1956 = vperm.slane %v1866, 0
    %v1957 = vmul.f32 %v1952, %v1956
    %v1958 = vmul.f32 %v1953, %v1956
    %v1959 = vmul.f32 %v1954, %v1956
    %v1960 = vmul.f32 %v1955, %v1956
    %v1961 = vperm.slane %v1867, 0
    %v1962 = vadd.f32 %v1957, %v1961
    %v1963 = vadd.f32 %v1958, %v1961
    %v1964 = vadd.f32 %v1959, %v1961
    %v1965 = vadd.f32 %v1960, %v1961
    %v1966 = vld [vmem:[#allocation2 + $0x3a8] sm:$0xff]
    %v1967 = vld [vmem:[#allocation2 + $0x3b0] sm:$0xff]
    %v1968 = vld [vmem:[#allocation2 + $0x3b8] sm:$0xff]
    %v1969 = vld [vmem:[#allocation2 + $0x3c0] sm:$0xff]
    %v1970 = vld [vmem:[#allocation2 + $0x3c8] sm:$0x1]
    %v1971 = vperm.slane %v1970, 0
    %v1973 = vsel %vm192, %v1962, 0
    %v1976 = vsel %vm192, %v1963, 0
    %v1979 = vsel %vm192, %v1964, 0
    %v1982 = vsel %vm192, %v1965, 0
    %1984 = vmatpush.msra.mxu0 0.0
    %1985 = vmatpush.msra.mxu0 0.0
    %1986 = vmatpush.msra.mxu0 0.0
    %1987 = vmatpush.msra.mxu0 0.0
    %1988 = vmatpush.msra.mxu0 0.0
    %1989 = vmatpush.msra.mxu0 0.0
    %1990 = vmatpush.msra.mxu0 0.0
    %1991 = vmatpush.msra.mxu0 0.0
    %1992 = vmatpush.msra.mxu0 0.0
    %1993 = vmatpush.msra.mxu0 0.0
    %1994 = vmatpush.msra.mxu0 0.0
    %1995 = vmatpush.msra.mxu0 0.0
    %1996 = vmatpush.msra.mxu0 %v1969
    %1997 = vmatpush.msra.mxu0 %v1968
    %1998 = vmatpush.msra.mxu0 %v1967
    %1999 = vmatpush.msra.mxu0 %v1966
    %2000 = vmatmul.f32.gmra.mxu0 %v1973
    %v2001 = vpop.f32.mrf.mxu0
    %v2002 = vadd.f32 %v1971, %v2001
    %2003 = vmatmul.f32.gmra.mxu0 %v1976
    %v2004 = vpop.f32.mrf.mxu0
    %v2005 = vadd.f32 %v1971, %v2004
    %2006 = vmatmul.f32.gmra.mxu0 %v1979
    %v2007 = vpop.f32.mrf.mxu0
    %v2008 = vadd.f32 %v1971, %v2007
    %2009 = vmatmul.f32.gmra.mxu0 %v1982
    %v2010 = vpop.f32.mrf.mxu0
    %v2011 = vadd.f32 %v1971, %v2010
    %2012 = vdwg.mxu0
    %v2013 = vmul.f32 %v2002, %v2002
    %v2014 = vmul.f32 %v2005, %v2005
    %v2015 = vmul.f32 %v2008, %v2008
    %v2016 = vmul.f32 %v2011, %v2011
    %v2017 = vmul.f32 %v2002, %v2013
    %v2018 = vmul.f32 %v2005, %v2014
    %v2019 = vmul.f32 %v2008, %v2015
    %v2020 = vmul.f32 %v2011, %v2016
    %v2021 = vmul.f32 %v2017, 0.044715
    %v2022 = vmul.f32 %v2018, 0.044715
    %v2023 = vmul.f32 %v2019, 0.044715
    %v2024 = vmul.f32 %v2020, 0.044715
    %v2025 = vadd.f32 %v2002, %v2021
    %v2026 = vadd.f32 %v2005, %v2022
    %v2027 = vadd.f32 %v2008, %v2023
    %v2028 = vadd.f32 %v2011, %v2024
    %v2029 = vmul.f32 %v2025, 0.7978846
    %v2030 = vmul.f32 %v2026, 0.7978846
    %v2031 = vmul.f32 %v2027, 0.7978846
    %v2032 = vmul.f32 %v2028, 0.7978846
    %v2033 = vtanh.pop %v2029
    %v2034 = vtanh.pop %v2030
    %v2035 = vtanh.pop %v2031
    %v2036 = vtanh.pop %v2032
    %v2037 = vadd.f32 %v2033, 1.0
    %v2038 = vadd.f32 %v2034, 1.0
    %v2039 = vadd.f32 %v2035, 1.0
    %v2040 = vadd.f32 %v2036, 1.0
    %v2041 = vmul.f32 %v2037, 0.5
    %v2042 = vmul.f32 %v2038, 0.5
    %v2043 = vmul.f32 %v2039, 0.5
    %v2044 = vmul.f32 %v2040, 0.5
    %v2045 = vmul.f32 %v2002, %v2041
    %v2046 = vmul.f32 %v2005, %v2042
    %v2047 = vmul.f32 %v2008, %v2043
    %v2048 = vmul.f32 %v2011, %v2044
    %v2049 = vld [vmem:[#allocation2 + $0x3d0] sm:$0xff]
    %v2050 = vld [vmem:[#allocation2 + $0x3d8] sm:$0xff]
    %v2051 = vld [vmem:[#allocation2 + $0x3e0] sm:$0xff]
    %v2052 = vld [vmem:[#allocation2 + $0x3e8] sm:$0xff]
    %v2053 = vld [vmem:[#allocation2 + $0x3f0] sm:$0xff]
    %v2054 = vld [vmem:[#allocation2 + $0x3f8] sm:$0xff]
    %v2055 = vld [vmem:[#allocation2 + $0x400] sm:$0xff]
    %v2056 = vld [vmem:[#allocation2 + $0x408] sm:$0xff]
    %v2057 = vld [vmem:[#allocation2 + $0x410] sm:$0x1]
    %v2058 = vperm.slane %v2057, 0
    %v2060 = vsel %vm1106, %v2045, 0
    %v2063 = vsel %vm1106, %v2046, 0
    %v2066 = vsel %vm1106, %v2047, 0
    %v2069 = vsel %vm1106, %v2048, 0
    %2071 = vmatpush.msra.mxu0 0.0
    %2072 = vmatpush.msra.mxu0 0.0
    %2073 = vmatpush.msra.mxu0 0.0
    %2074 = vmatpush.msra.mxu0 0.0
    %2075 = vmatpush.msra.mxu0 0.0
    %2076 = vmatpush.msra.mxu0 0.0
    %2077 = vmatpush.msra.mxu0 0.0
    %2078 = vmatpush.msra.mxu0 0.0
    %2079 = vmatpush.msra.mxu0 %v2056
    %2080 = vmatpush.msra.mxu0 %v2055
    %2081 = vmatpush.msra.mxu0 %v2054
    %2082 = vmatpush.msra.mxu0 %v2053
    %2083 = vmatpush.msra.mxu0 %v2052
    %2084 = vmatpush.msra.mxu0 %v2051
    %2085 = vmatpush.msra.mxu0 %v2050
    %2086 = vmatpush.msra.mxu0 %v2049
    %2087 = vmatmul.f32.gmra.mxu0 %v2060
    %v2088 = vpop.f32.mrf.mxu0
    %v2089 = vadd.f32 %v2058, %v2088
    %2090 = vmatmul.f32.gmra.mxu0 %v2063
    %v2091 = vpop.f32.mrf.mxu0
    %v2092 = vadd.f32 %v2058, %v2091
    %2093 = vmatmul.f32.gmra.mxu0 %v2066
    %v2094 = vpop.f32.mrf.mxu0
    %v2095 = vadd.f32 %v2058, %v2094
    %2096 = vmatmul.f32.gmra.mxu0 %v2069
    %v2097 = vpop.f32.mrf.mxu0
    %v2098 = vadd.f32 %v2058, %v2097
    %2099 = vdwg.mxu0
    %v2100 = vadd.f32 %v1862, %v2089
    %v2101 = vadd.f32 %v1863, %v2092
    %v2102 = vadd.f32 %v1864, %v2095
    %v2103 = vadd.f32 %v1865, %v2098
    %v2104 = vld [vmem:[#allocation2 + $0x418] sm:$0x1]
    %v2105 = vld [vmem:[#allocation2 + $0x420] sm:$0x1]
    %v2106 = vsel %vm192, %v2100, 0.0
    %2107 = vadd.xlane.f32.xlu0 %v2106
    %v2108 = vpop.xlane.xlu0 %2107
    %v2109 = vsel %vm192, %v2101, 0.0
    %2110 = vadd.xlane.f32.xlu0 %v2109
    %v2111 = vpop.xlane.xlu0 %2110
    %v2112 = vsel %vm192, %v2102, 0.0
    %2113 = vadd.xlane.f32.xlu0 %v2112
    %v2114 = vpop.xlane.xlu0 %2113
    %v2115 = vsel %vm192, %v2103, 0.0
    %2116 = vadd.xlane.f32.xlu0 %v2115
    %v2117 = vpop.xlane.xlu0 %2116
    %v2118 = vmul.f32 %v2108, %v211
    %v2119 = vmul.f32 %v2111, %v211
    %v2120 = vmul.f32 %v2114, %v211
    %v2121 = vmul.f32 %v2117, %v211
    %v2122 = vsub.f32 %v2100, %v2118
    %v2123 = vsub.f32 %v2101, %v2119
    %v2124 = vsub.f32 %v2102, %v2120
    %v2125 = vsub.f32 %v2103, %v2121
    %v2126 = vmul.f32 %v2122, %v2122
    %v2127 = vmul.f32 %v2123, %v2123
    %v2128 = vmul.f32 %v2124, %v2124
    %v2129 = vmul.f32 %v2125, %v2125
    %v2130 = vsel %vm192, %v2126, 0.0
    %2131 = vadd.xlane.f32.xlu0 %v2130
    %v2132 = vpop.xlane.xlu0 %2131
    %v2133 = vsel %vm192, %v2127, 0.0
    %2134 = vadd.xlane.f32.xlu0 %v2133
    %v2135 = vpop.xlane.xlu0 %2134
    %v2136 = vsel %vm192, %v2128, 0.0
    %2137 = vadd.xlane.f32.xlu0 %v2136
    %v2138 = vpop.xlane.xlu0 %2137
    %v2139 = vsel %vm192, %v2129, 0.0
    %2140 = vadd.xlane.f32.xlu0 %v2139
    %v2141 = vpop.xlane.xlu0 %2140
    %v2142 = vmul.f32 %v2132, %v211
    %v2143 = vmul.f32 %v2135, %v211
    %v2144 = vmul.f32 %v2138, %v211
    %v2145 = vmul.f32 %v2141, %v211
    %v2146 = vadd.f32 %v2142, 1e-05
    %v2147 = vadd.f32 %v2143, 1e-05
    %v2148 = vadd.f32 %v2144, 1e-05
    %v2149 = vadd.f32 %v2145, 1e-05
    %v2150 = vrsqrt.pop %v2146
    %v2151 = vmul.f32 %v2150, %v2146
    %v2152 = vmul.f32 %v2151, %v2150
    %v2153 = vmul.f32 0.5, %v2152
    %v2154 = vsub.f32 1.5, %v2153
    %v2155 = vmul.f32 %v2150, %v2154
    %vm2156 = vweird.f32 %v2146
    %vm2157 = vweird.f32 %v2150
    %vm2158 = vmor %vm2156, %vm2157
    %v2159 = vsel %vm2158, %v2150, %v2155
    %v2160 = vrsqrt.pop %v2147
    %v2161 = vmul.f32 %v2160, %v2147
    %v2162 = vmul.f32 %v2161, %v2160
    %v2163 = vmul.f32 0.5, %v2162
    %v2164 = vsub.f32 1.5, %v2163
    %v2165 = vmul.f32 %v2160, %v2164
    %vm2166 = vweird.f32 %v2147
    %vm2167 = vweird.f32 %v2160
    %vm2168 = vmor %vm2166, %vm2167
    %v2169 = vsel %vm2168, %v2160, %v2165
    %v2170 = vrsqrt.pop %v2148
    %v2171 = vmul.f32 %v2170, %v2148
    %v2172 = vmul.f32 %v2171, %v2170
    %v2173 = vmul.f32 0.5, %v2172
    %v2174 = vsub.f32 1.5, %v2173
    %v2175 = vmul.f32 %v2170, %v2174
    %vm2176 = vweird.f32 %v2148
    %vm2177 = vweird.f32 %v2170
    %vm2178 = vmor %vm2176, %vm2177
    %v2179 = vsel %vm2178, %v2170, %v2175
    %v2180 = vrsqrt.pop %v2149
    %v2181 = vmul.f32 %v2180, %v2149
    %v2182 = vmul.f32 %v2181, %v2180
    %v2183 = vmul.f32 0.5, %v2182
    %v2184 = vsub.f32 1.5, %v2183
    %v2185 = vmul.f32 %v2180, %v2184
    %vm2186 = vweird.f32 %v2149
    %vm2187 = vweird.f32 %v2180
    %vm2188 = vmor %vm2186, %vm2187
    %v2189 = vsel %vm2188, %v2180, %v2185
    %v2190 = vmul.f32 %v2122, %v2159
    %v2191 = vmul.f32 %v2123, %v2169
    %v2192 = vmul.f32 %v2124, %v2179
    %v2193 = vmul.f32 %v2125, %v2189
    %v2194 = vperm.slane %v2104, 0
    %v2195 = vmul.f32 %v2190, %v2194
    %v2196 = vmul.f32 %v2191, %v2194
    %v2197 = vmul.f32 %v2192, %v2194
    %v2198 = vmul.f32 %v2193, %v2194
    %v2199 = vperm.slane %v2105, 0
    %v2200 = vadd.f32 %v2195, %v2199
    %v2201 = vadd.f32 %v2196, %v2199
    %v2202 = vadd.f32 %v2197, %v2199
    %v2203 = vadd.f32 %v2198, %v2199
    %v2204 = vld [vmem:[#allocation2 + $0xb8] sm:$0xf]
    %v2206 = vsel %vm192, %v2204, 0
    %2208 = vmatpush.msra.mxu0 0.0
    %2209 = vmatpush.msra.mxu0 0.0
    %2210 = vmatpush.msra.mxu0 0.0
    %2211 = vmatpush.msra.mxu0 0.0
    %2212 = vmatpush.msra.mxu0 0.0
    %2213 = vmatpush.msra.mxu0 0.0
    %2214 = vmatpush.msra.mxu0 0.0
    %2215 = vmatpush.msra.mxu0 0.0
    %2216 = vmatpush.msra.mxu0 0.0
    %2217 = vmatpush.msra.mxu0 0.0
    %2218 = vmatpush.msra.mxu0 0.0
    %2219 = vmatpush.msra.mxu0 0.0
    %2220 = vmatpush.msra.mxu0 %v2203
    %2221 = vmatpush.msra.mxu0 %v2202
    %2222 = vmatpush.msra.mxu0 %v2201
    %2223 = vmatpush.msra.mxu0 %v2200
    %2224 = vmatmul.f32.gmra.mxu0 %v2206
    %v2225 = vpop.f32.mrf.mxu0
    %v2226 = vadd.f32 0.0, %v2225
    %2227 = vdwg.mxu0
    %v2228 = vld [vmem:[#allocation2 + $0xc0] sm:$0xff]
    %v2230 = vsel %vm192, %v2228, 0
    %2232 = vmatpush.msra.mxu0 0.0
    %2233 = vmatpush.msra.mxu0 0.0
    %2234 = vmatpush.msra.mxu0 0.0
    %2235 = vmatpush.msra.mxu0 0.0
    %2236 = vmatpush.msra.mxu0 0.0
    %2237 = vmatpush.msra.mxu0 0.0
    %2238 = vmatpush.msra.mxu0 0.0
    %2239 = vmatpush.msra.mxu0 0.0
    %2240 = vmatpush.msra.mxu0 0.0
    %2241 = vmatpush.msra.mxu0 0.0
    %2242 = vmatpush.msra.mxu0 0.0
    %2243 = vmatpush.msra.mxu0 0.0
    %2244 = vmatpush.msra.mxu0 %v2203
    %2245 = vmatpush.msra.mxu0 %v2202
    %2246 = vmatpush.msra.mxu0 %v2201
    %2247 = vmatpush.msra.mxu0 %v2200
    %2248 = vmatmul.f32.gmra.mxu0 %v2230
    %v2249 = vpop.f32.mrf.mxu0
    %v2250 = vadd.f32 0.0, %v2249
    %2251 = vdwg.mxu0
    %v2252 = vld [vmem:[#allocation2 + $0x428] sm:$0xff]
    %v2253 = vld [vmem:[#allocation2 + $0x430] sm:$0xff]
    %v2254 = vld [vmem:[#allocation2 + $0x438] sm:$0xff]
    %v2255 = vld [vmem:[#allocation2 + $0x440] sm:$0xff]
    %v2256 = vld [vmem:[#allocation2 + $0x448] sm:$0x1]
    %v2257 = vperm.slane %v2256, 0
    %v2259 = vsel %vm192, %v2226, 0
    %2261 = vmatpush.msra.mxu0 0.0
    %2262 = vmatpush.msra.mxu0 0.0
    %2263 = vmatpush.msra.mxu0 0.0
    %2264 = vmatpush.msra.mxu0 0.0
    %2265 = vmatpush.msra.mxu0 0.0
    %2266 = vmatpush.msra.mxu0 0.0
    %2267 = vmatpush.msra.mxu0 0.0
    %2268 = vmatpush.msra.mxu0 0.0
    %2269 = vmatpush.msra.mxu0 0.0
    %2270 = vmatpush.msra.mxu0 0.0
    %2271 = vmatpush.msra.mxu0 0.0
    %2272 = vmatpush.msra.mxu0 0.0
    %2273 = vmatpush.msra.mxu0 %v2255
    %2274 = vmatpush.msra.mxu0 %v2254
    %2275 = vmatpush.msra.mxu0 %v2253
    %2276 = vmatpush.msra.mxu0 %v2252
    %2277 = vmatmul.f32.gmra.mxu0 %v2259
    %v2278 = vpop.f32.mrf.mxu0
    %v2279 = vadd.f32 %v2257, %v2278
    %2280 = vdwg.mxu0
    %v2281 = vmax.f32 %v2279, 0.0
    %v2282 = vld [vmem:[#allocation2 + $0x450] sm:$0xff]
    %v2283 = vld [vmem:[#allocation2 + $0x458] sm:$0xff]
    %v2284 = vld [vmem:[#allocation2 + $0x460] sm:$0xff]
    %v2285 = vld [vmem:[#allocation2 + $0x468] sm:$0xff]
    %v2286 = vld [vmem:[#allocation2 + $0x470] sm:$0x1]
    %v2287 = vperm.slane %v2286, 0
    %v2289 = vsel %vm192, %v2281, 0
    %2291 = vmatpush.msra.mxu0 0.0
    %2292 = vmatpush.msra.mxu0 0.0
    %2293 = vmatpush.msra.mxu0 0.0
    %2294 = vmatpush.msra.mxu0 0.0
    %2295 = vmatpush.msra.mxu0 0.0
    %2296 = vmatpush.msra.mxu0 0.0
    %2297 = vmatpush.msra.mxu0 0.0
    %2298 = vmatpush.msra.mxu0 0.0
    %2299 = vmatpush.msra.mxu0 0.0
    %2300 = vmatpush.msra.mxu0 0.0
    %2301 = vmatpush.msra.mxu0 0.0
    %2302 = vmatpush.msra.mxu0 0.0
    %2303 = vmatpush.msra.mxu0 %v2285
    %2304 = vmatpush.msra.mxu0 %v2284
    %2305 = vmatpush.msra.mxu0 %v2283
    %2306 = vmatpush.msra.mxu0 %v2282
    %2307 = vmatmul.f32.gmra.mxu0 %v2289
    %v2308 = vpop.f32.mrf.mxu0
    %v2309 = vadd.f32 %v2287, %v2308
    %2310 = vdwg.mxu0
    %v2311 = vtanh.pop %v2309
    %v2312 = vld [vmem:[#allocation2 + $0x4d0] sm:$0x1]
    %v2313 = vld [vmem:[#allocation2 + $0x4d8] sm:$0x1]
    %v2314 = vperm.slane %v2313, 0
    %v2315 = vmul.f32 %v2311, %v2314
    %v2316 = vperm.slane %v2312, 0
    %v2317 = vadd.f32 %v2316, %v2315
    %v2319 = vrot.slane %v2317, 4
    %v2321 = vsel %vm46, %v28, %v2319
    %v2322 = vld [vmem:[#allocation2 + $0x478] sm:$0xff]
    %v2323 = vld [vmem:[#allocation2 + $0x480] sm:$0xff]
    %v2324 = vld [vmem:[#allocation2 + $0x488] sm:$0xff]
    %v2325 = vld [vmem:[#allocation2 + $0x490] sm:$0xff]
    %v2326 = vld [vmem:[#allocation2 + $0x498] sm:$0x7]
    %vm2327 = vcmask 23552
    %v2329 = vsel %vm2327, %v2321, 0
    %vm2331 = vcmask 1042432
    %v2333 = vsel %vm2331, %v2326, 0
    %2335 = vmatpush.msra.mxu0 0.0
    %2336 = vmatpush.msra.mxu0 0.0
    %2337 = vmatpush.msra.mxu0 0.0
    %2338 = vmatpush.msra.mxu0 0.0
    %2339 = vmatpush.msra.mxu0 0.0
    %2340 = vmatpush.msra.mxu0 0.0
    %2341 = vmatpush.msra.mxu0 0.0
    %2342 = vmatpush.msra.mxu0 0.0
    %2343 = vmatpush.msra.mxu0 0.0
    %2344 = vmatpush.msra.mxu0 0.0
    %2345 = vmatpush.msra.mxu0 0.0
    %2346 = vmatpush.msra.mxu0 0.0
    %2347 = vmatpush.msra.mxu0 0.0
    %2348 = vmatpush.msra.mxu0 0.0
    %2349 = vmatpush.msra.mxu0 0.0
    %2350 = vmatpush.msra.mxu0 %v2333
    %2351 = vmatmul.f32.gmra.mxu0 %v2329
    %v2352 = vpop.f32.mrf.mxu0
    %v2353 = vadd.f32 0.0, %v2352
    %2354 = vdwg.mxu0
    %v2356 = vsel %vm192, %v2250, 0
    %2358 = vmatpush.msra.mxu0 0.0
    %2359 = vmatpush.msra.mxu0 0.0
    %2360 = vmatpush.msra.mxu0 0.0
    %2361 = vmatpush.msra.mxu0 0.0
    %2362 = vmatpush.msra.mxu0 0.0
    %2363 = vmatpush.msra.mxu0 0.0
    %2364 = vmatpush.msra.mxu0 0.0
    %2365 = vmatpush.msra.mxu0 0.0
    %2366 = vmatpush.msra.mxu0 0.0
    %2367 = vmatpush.msra.mxu0 0.0
    %2368 = vmatpush.msra.mxu0 0.0
    %2369 = vmatpush.msra.mxu0 0.0
    %2370 = vmatpush.msra.mxu0 %v2325
    %2371 = vmatpush.msra.mxu0 %v2324
    %2372 = vmatpush.msra.mxu0 %v2323
    %2373 = vmatpush.msra.mxu0 %v2322
    %2374 = vmatmul.f32.gmra.mxu0 %v2356
    %v2375 = vpop.f32.mrf.mxu0
    %v2376 = vadd.f32 %v2353, %v2375
    %2377 = vdwg.mxu0
    %v2378 = vld [vmem:[#allocation2 + $0x4a0] sm:$0x1]
    %v2379 = vperm.slane %v2378, 0
    %v2380 = vadd.f32 %v2376, %v2379
    %v2381 = vmax.f32 %v2380, 0.0
    %v2382 = vld [vmem:[#allocation2 + $0x4a8] sm:$0xff]
    %v2383 = vld [vmem:[#allocation2 + $0x4b0] sm:$0xff]
    %v2384 = vld [vmem:[#allocation2 + $0x4b8] sm:$0xff]
    %v2385 = vld [vmem:[#allocation2 + $0x4c0] sm:$0xff]
    %v2386 = vld [vmem:[#allocation2 + $0x4c8] sm:$0x1]
    %v2387 = vperm.slane %v2386, 0
    %v2389 = vsel %vm192, %v2381, 0
    %2391 = vmatpush.msra.mxu0 0.0
    %2392 = vmatpush.msra.mxu0 0.0
    %2393 = vmatpush.msra.mxu0 0.0
    %2394 = vmatpush.msra.mxu0 0.0
    %2395 = vmatpush.msra.mxu0 0.0
    %2396 = vmatpush.msra.mxu0 0.0
    %2397 = vmatpush.msra.mxu0 0.0
    %2398 = vmatpush.msra.mxu0 0.0
    %2399 = vmatpush.msra.mxu0 0.0
    %2400 = vmatpush.msra.mxu0 0.0
    %2401 = vmatpush.msra.mxu0 0.0
    %2402 = vmatpush.msra.mxu0 0.0
    %2403 = vmatpush.msra.mxu0 %v2385
    %2404 = vmatpush.msra.mxu0 %v2384
    %2405 = vmatpush.msra.mxu0 %v2383
    %2406 = vmatpush.msra.mxu0 %v2382
    %2407 = vmatmul.f32.gmra.mxu0 %v2389
    %v2408 = vpop.f32.mrf.mxu0
    %v2409 = vadd.f32 %v2387, %v2408
    %2410 = vdwg.mxu0
    %2411 = vst [vmem:[%s2] sm:$0xff] 0.0
    %vm2412 = vcmask 19456
    %2413 = vst.msk [vmem:[%s2] sm:$0xf] %vm2412, %v2317
    %2415 = vrot.lane.b32.xlu0 %v2409, 3
    %v2416 = vpop.permute.xlu0 %2415
    %vm2418 = vcmask 31768
    %2419 = vst.msk [vmem:[%s2] sm:$0xff] %vm2418, %v2416
    // Predicated region
    $region14: #{_lambda_.1} parent=1 // pred_check
      _
    $region15: #{_lambda_.1} parent=1 // pred_check_branch
      %2421 = sbr.rel (0) target = $region17
    $region16: #{_lambda_.1} parent=1 // pred_region
      _
    $region17: #{_lambda_.1} parent=1 // pred_fallthru
      _
    // Predicated region
    $region18: #{_lambda_.1} parent=1 // pred_check
      _
    $region19: #{_lambda_.1} parent=1 // pred_check_branch
      %2423 = sbr.rel (0) target = $region21
    $region20: #{_lambda_.1} parent=1 // pred_region
      _
    $region21: #{_lambda_.1} parent=1 // pred_fallthru
      _
    %2424 = vsyncpa [#allocation3], 1

</llo_original>
